<compile_context>
chip_gen: v6e
topology: v6e:2x2x1
jax: 0.10.0
libtpu: 0.0.40
codegen_flags: <defaults>
</compile_context>

<pallas_src>
import functools

import jax
import jax.numpy as jnp
from jax import lax
from jax.experimental import pallas as pl
from jax.experimental.pallas import tpu as pltpu


def _pick_vmem_limit():
    """Per-generation scoped-VMEM budget (don't cap v5e/v6e at a v7x-sized limit)."""
    cap = 64 * 1024 * 1024                       # conservative fallback (v7x per-core VMEM)
    try:
        cap = int(pltpu.get_tpu_info().vmem_capacity_bytes)
    except Exception:
        pass
    return int(min(96 * 1024 * 1024, max(32 * 1024 * 1024, (cap * 3) // 4)))


VMEM_LIMIT = _pick_vmem_limit()


# ---------------------------------------------------------------------------
# M-tiled linear (bf16 MXU operands, f32 accumulate):  y = act(x @ w + b)
# ---------------------------------------------------------------------------
def _linear_kernel(x_ref, w_ref, b_ref, o_ref, *, leaky):
    x = x_ref[...].astype(jnp.bfloat16)
    w = w_ref[...].astype(jnp.bfloat16)
    y = jnp.dot(x, w, preferred_element_type=jnp.float32) + b_ref[...]
    if leaky:                                    # supar MLP = Linear -> LeakyReLU(0.1)
        y = jnp.where(y > 0, y, 0.1 * y)
    o_ref[...] = y.astype(o_ref.dtype)


def pallas_linear(x, w, b, leaky=False, out_dtype=jnp.float32, block_m=1024):
    """x:[M,K] @ w:[K,N] + b:[1,N].  Tiled over M (double-buffered); w/b stay resident."""
    M, K = x.shape
    N = w.shape[1]
    tm = min(block_m, M)
    return pl.pallas_call(
        functools.partial(_linear_kernel, leaky=leaky),
        out_shape=jax.ShapeDtypeStruct((M, N), out_dtype),
        grid=(pl.cdiv(M, tm),),
        in_specs=[
            pl.BlockSpec((tm, K), lambda i: (i, 0)),
            pl.BlockSpec((K, N), lambda i: (0, 0)),
            pl.BlockSpec((1, N), lambda i: (0, 0)),
        ],
        out_specs=pl.BlockSpec((tm, N), lambda i: (i, 0)),
        compiler_params=pltpu.CompilerParams(
            dimension_semantics=("parallel",),
            vmem_limit_bytes=VMEM_LIMIT),
    )(x, w, b)


# ---------------------------------------------------------------------------
# Biaffine attention kernels (first matmul hoisted wrapper-side into big GEMMs)
# ---------------------------------------------------------------------------
def _arc_attn_kernel(t_ref, h_ref, m_ref, o_ref):
    # t = (arc_d @ W_body + bias_x_row) (hoisted), h = arc_h.  s = t @ h^T, mask padded heads.
    s = lax.dot_general(t_ref[...], h_ref[...],
                        dimension_numbers=(((1,), (1,)), ((), ())),
                        preferred_element_type=jnp.float32)          # [S, S]
    # Reference does masked_fill_(~mask.unsqueeze(1), float('-inf')); kept verbatim.
    o_ref[...] = jnp.where(m_ref[...] > 0, s, -jnp.inf)


def arc_attn(arc_t, arc_h, mask_f):
    B, S, A = arc_t.shape
    m3 = mask_f.reshape(B, 1, S)
    return pl.pallas_call(
        _arc_attn_kernel,
        out_shape=jax.ShapeDtypeStruct((B, S, S), jnp.float32),
        grid=(B,),
        in_specs=[
            pl.BlockSpec((None, S, A), lambda b: (b, 0, 0)),
            pl.BlockSpec((None, S, A), lambda b: (b, 0, 0)),
            pl.BlockSpec((None, 1, S), lambda b: (b, 0, 0)),
        ],
        out_specs=pl.BlockSpec((None, S, S), lambda b: (b, 0, 0)),
        compiler_params=pltpu.CompilerParams(
            dimension_semantics=("parallel",),
            vmem_limit_bytes=VMEM_LIMIT),
    )(arc_t, arc_h, m3)


def _rel_attn_kernel(p_ref, h_ref, o_ref, *, n_rels, n_mlp_rel):
    # p = [ rel_d @ W_body(o) + bias_x_row(o) | rel_d @ bias_y_col(o) + corner(o) ]  (hoisted)
    # Per rel o:  s_o = t_o @ h^T + col_o  (col broadcast over the head axis).
    R = n_mlp_rel
    h = h_ref[...]                                                   # [S, R] bf16 (resident per b)
    for o in range(n_rels):                                          # static unroll over rels
        t = p_ref[:, o * R:(o + 1) * R]                              # [S, R]
        s = lax.dot_general(t, h, dimension_numbers=(((1,), (1,)), ((), ())),
                            preferred_element_type=jnp.float32)      # [S, S]
        col = p_ref[:, n_rels * R + o:n_rels * R + o + 1].astype(jnp.float32)   # [S, 1]
        o_ref[o] = s + col


def rel_attn(rel_p, rel_h):
    B, S, W = rel_p.shape
    R = rel_h.shape[-1]
    O = W // (R + 1)
    return pl.pallas_call(
        functools.partial(_rel_attn_kernel, n_rels=O, n_mlp_rel=R),
        out_shape=jax.ShapeDtypeStruct((B, O, S, S), jnp.float32),
        grid=(B,),
        in_specs=[
            pl.BlockSpec((None, S, W), lambda b: (b, 0, 0)),
            pl.BlockSpec((None, S, R), lambda b: (b, 0, 0)),
        ],
        out_specs=pl.BlockSpec((None, O, S, S), lambda b: (b, 0, 0, 0)),
        compiler_params=pltpu.CompilerParams(
            dimension_semantics=("parallel",),
            vmem_limit_bytes=VMEM_LIMIT),
    )(rel_p, rel_h)
    # TODO(synk): at production sizes pad A->512, R->128 and S to a multiple of 128 wrapper-side
    # so the [S,S]/[S,R] tiles and writebacks are fully lane-dense.


# ---------------------------------------------------------------------------
# Fused fwd+bwd LSTM recurrence as a Pallas kernel (grid over time, state on-chip)
# ---------------------------------------------------------------------------
def _bilstm_kernel(xpf_ref, xpb_ref, mf_ref, mb_ref, whf_ref, whb_ref,
                   of_ref, ob_ref, hfo_ref, hbo_ref,
                   hf, cf, hb, cb, *, hidden):
    """One time step: fwd consumes block t, bwd consumes block T-1-t ('arbitrary' grid axis).
    W_hh stays resident; h/c live in VMEM scratch.  Packed-sequence emulation: state frozen
    at pads, outputs zeroed at pads (== pad_packed_sequence padding_value=0)."""
    t = pl.program_id(0)
    H = hidden

    @pl.when(t == 0)
    def _init():
        hf[...] = jnp.zeros_like(hf)
        cf[...] = jnp.zeros_like(cf)
        hb[...] = jnp.zeros_like(hb)
        cb[...] = jnp.zeros_like(cb)

    def cell(xp, m, h_ref, c_ref, w_ref):
        gates = xp.astype(jnp.float32) + jnp.dot(
            h_ref[...].astype(jnp.bfloat16), w_ref[...],
            preferred_element_type=jnp.float32)                      # [B, 4H]
        i = jax.nn.sigmoid(gates[:, :H])                             # PyTorch gate order i, f, g, o
        f = jax.nn.sigmoid(gates[:, H:2 * H])
        g = jnp.tanh(gates[:, 2 * H:3 * H])
        o = jax.nn.sigmoid(gates[:, 3 * H:])
        c_new = f * c_ref[...] + i * g
        h_new = o * jnp.tanh(c_new)
        h_upd = m * h_new + (1.0 - m) * h_ref[...]                   # freeze state at pads
        c_ref[...] = m * c_new + (1.0 - m) * c_ref[...]
        h_ref[...] = h_upd
        return h_upd * m                                             # padded outputs -> 0

    of_ref[...] = cell(xpf_ref[:, :4 * H], mf_ref[...], hf, cf, whf_ref)
    ob_ref[...] = cell(xpb_ref[:, 4 * H:], mb_ref[...], hb, cb, whb_ref)
    hfo_ref[...] = hf[...]                                           # resident; final writeback = h_T
    hbo_ref[...] = hb[...]


def bilstm_pair(xp_tm, mask_tm, w_hh_f, w_hh_b):
    """Fused fwd+bwd single-layer LSTM recurrence as one Pallas kernel.
    xp_tm:   [T, B, 8H] bf16 time-major input projections (x @ [W_ih_f | W_ih_b] + biases)
    mask_tm: [T, B, 1]  f32 validity mask
    Returns  of, ob: [T, B, H] f32 (zeros at pads);  h_fwd, h_bwd: [B, H] f32 final states."""
    T, B, H8 = xp_tm.shape
    H = H8 // 8
    H4 = 4 * H
    return pl.pallas_call(
        functools.partial(_bilstm_kernel, hidden=H),
        out_shape=(jax.ShapeDtypeStruct((T, B, H), jnp.float32),
                   jax.ShapeDtypeStruct((T, B, H), jnp.float32),
                   jax.ShapeDtypeStruct((B, H), jnp.float32),
                   jax.ShapeDtypeStruct((B, H), jnp.float32)),
        grid=(T,),
        in_specs=[
            pl.BlockSpec((None, B, H8), lambda t: (t, 0, 0)),            # x_proj (fwd half used)
            pl.BlockSpec((None, B, H8), lambda t: (T - 1 - t, 0, 0)),    # x_proj (bwd half used)
            pl.BlockSpec((None, B, 1), lambda t: (t, 0, 0)),             # mask, fwd order
            pl.BlockSpec((None, B, 1), lambda t: (T - 1 - t, 0, 0)),     # mask, bwd order
            pl.BlockSpec((H, H4), lambda t: (0, 0)),                     # W_hh fwd (resident)
            pl.BlockSpec((H, H4), lambda t: (0, 0)),                     # W_hh bwd (resident)
        ],
        out_specs=(
            pl.BlockSpec((None, B, H), lambda t: (t, 0, 0)),
            pl.BlockSpec((None, B, H), lambda t: (T - 1 - t, 0, 0)),
            pl.BlockSpec((B, H), lambda t: (0, 0)),                      # final h fwd (resident)
            pl.BlockSpec((B, H), lambda t: (0, 0)),                      # final h bwd (resident)
        ),
        scratch_shapes=[pltpu.VMEM((B, H), jnp.float32),                 # h fwd
                        pltpu.VMEM((B, H), jnp.float32),                 # c fwd
                        pltpu.VMEM((B, H), jnp.float32),                 # h bwd
                        pltpu.VMEM((B, H), jnp.float32)],                # c bwd
        compiler_params=pltpu.CompilerParams(
            dimension_semantics=("arbitrary",),                          # sequential recurrence
            vmem_limit_bytes=VMEM_LIMIT),
    )(xp_tm, xp_tm, mask_tm, mask_tm, w_hh_f, w_hh_b)


# ---------------------------------------------------------------------------
# CharLSTM / BiLSTM encoder wrappers
# ---------------------------------------------------------------------------
def char_lstm(feats, params, cfg):
    """CharLSTM: bi-LSTM over the chars of each token; concat of final states -> [B,S,n_feat_embed]."""
    B, S, L = feats.shape
    ch = cfg['n_feat_embed'] // 2
    M = B * S
    x = jnp.take(params['char_embed'], feats.reshape(M, L), axis=0)          # [M, L, E] f32
    cmask = (feats != cfg['feat_pad_index']).astype(jnp.float32).reshape(M, L)

    pf, pb = params['char_lstm_fwd'], params['char_lstm_bwd']
    w_ih = jnp.concatenate([pf['W_ih'], pb['W_ih']], axis=1).astype(jnp.bfloat16)   # [E, 8*ch]
    bias = jnp.concatenate([pf['b'], pb['b']], axis=1)
    xp = pallas_linear(x.reshape(M * L, -1), w_ih, bias, out_dtype=jnp.bfloat16)
    xp_tm = jnp.transpose(xp.reshape(M, L, 8 * ch), (1, 0, 2))               # [L, M, 8*ch]
    m_tm = jnp.transpose(cmask, (1, 0))[:, :, None]                          # [L, M, 1]

    _, _, h_f, h_b = bilstm_pair(xp_tm, m_tm,
                                 pf['W_hh'].astype(jnp.bfloat16),
                                 pb['W_hh'].astype(jnp.bfloat16))
    h = jnp.concatenate([h_f, h_b], axis=-1)                                 # zeros for all-pad tokens
    return h.reshape(B, S, cfg['n_feat_embed'])


def bilstm_encoder(embed, mask_f, params):
    """Multi-layer bidirectional LSTM encoder -> [B, S, 2H] (zeros at padded positions)."""
    x_tm = jnp.transpose(embed, (1, 0, 2))                                   # time-major [S, B, D]
    m_tm = jnp.transpose(mask_f, (1, 0))[:, :, None]                         # [S, B, 1]
    for layer in params['bilstm']:
        T, Bb, Din = x_tm.shape
        H4 = layer['fwd']['W_ih'].shape[1]
        w_ih = jnp.concatenate([layer['fwd']['W_ih'], layer['bwd']['W_ih']],
                               axis=1).astype(jnp.bfloat16)                  # [Din, 8H]
        bias = jnp.concatenate([layer['fwd']['b'], layer['bwd']['b']], axis=1)
        xp = pallas_linear(x_tm.reshape(T * Bb, Din), w_ih, bias,
                           out_dtype=jnp.bfloat16).reshape(T, Bb, 2 * H4)
        o_f, o_b, _, _ = bilstm_pair(xp, m_tm,
                                     layer['fwd']['W_hh'].astype(jnp.bfloat16),
                                     layer['bwd']['W_hh'].astype(jnp.bfloat16))
        x_tm = jnp.concatenate([o_f, o_b], axis=-1)                          # [S, B, 2H] f32
    return jnp.transpose(x_tm, (1, 0, 2))                                    # [B, S, 2H]


# ---------------------------------------------------------------------------
# Parameters / forward
# ---------------------------------------------------------------------------
def init_params(key, cfg):
    ks = list(jax.random.split(key, 32))
    it = iter(ks)

    def nrm(shape, scale=0.1):
        return jax.random.normal(next(it), shape, jnp.float32) * scale

    p = {}
    p['word_embed'] = nrm((cfg['n_words'], cfg['n_embed']))
    p['char_embed'] = nrm((cfg['n_feats'], cfg['n_char_embed']))
    ch = cfg['n_feat_embed'] // 2
    for d in ('fwd', 'bwd'):
        # NOTE: PyTorch LSTMs carry b_ih and b_hh; here a single fused bias is used
        # (sum b_ih + b_hh when importing pretrained supar weights).
        p[f'char_lstm_{d}'] = {
            'W_ih': nrm((cfg['n_char_embed'], 4 * ch)),
            'W_hh': nrm((ch, 4 * ch)),
            'b': jnp.zeros((1, 4 * ch), jnp.float32),
        }
    H = cfg['n_lstm_hidden']
    in_dim = cfg['n_embed'] + cfg['n_feat_embed']
    p['bilstm'] = []
    for l in range(cfg['n_lstm_layers']):
        layer_in = in_dim if l == 0 else 2 * H
        layer = {}
        for d in ('fwd', 'bwd'):
            layer[d] = {
                'W_ih': nrm((layer_in, 4 * H)),
                'W_hh': nrm((H, 4 * H)),
                'b': jnp.zeros((1, 4 * H), jnp.float32),
            }
        p['bilstm'].append(layer)
    for name, n_out in (('arc_d', cfg['n_mlp_arc']), ('arc_h', cfg['n_mlp_arc']),
                        ('rel_d', cfg['n_mlp_rel']), ('rel_h', cfg['n_mlp_rel'])):
        p[f'mlp_{name}'] = {'W': nrm((2 * H, n_out)),
                            'b': jnp.zeros((1, n_out), jnp.float32)}
    # Biaffine weights: arc (n_out=1 squeezed, bias_x only); rel (n_rels, bias on both sides)
    p['arc_W'] = nrm((cfg['n_mlp_arc'] + 1, cfg['n_mlp_arc']))
    p['rel_W'] = nrm((cfg['n_rels'], cfg['n_mlp_rel'] + 1, cfg['n_mlp_rel'] + 1))
    return p


def forward(params, words, feats, cfg):
    B, S = words.shape
    A = cfg['n_mlp_arc']
    R = cfg['n_mlp_rel']
    O = cfg['n_rels']
    mask = words != cfg['pad_index']                                         # [B, S] bool
    mask_f = mask.astype(jnp.float32)

    word_embed = jnp.take(params['word_embed'], words, axis=0)               # [B, S, n_embed]
    feat_embed = char_lstm(feats, params, cfg)                               # [B, S, n_feat_embed]
    # IndependentDropout -> identity at inference
    embed = jnp.concatenate([word_embed, feat_embed], axis=-1)

    x = bilstm_encoder(embed, mask_f, params)                                # [B, S, 2H]
    # SharedDropout (lstm_dropout) / MLP dropout -> identity at inference
    xf = x.reshape(B * S, -1)

    # Fused MLP heads: one lane-dense matmul for arc_d | arc_h | rel_d | rel_h (bf16 out).
    W_all = jnp.concatenate([params['mlp_arc_d']['W'], params['mlp_arc_h']['W'],
                             params['mlp_rel_d']['W'], params['mlp_rel_h']['W']],
                            axis=1).astype(jnp.bfloat16)
    b_all = jnp.concatenate([params['mlp_arc_d']['b'], params['mlp_arc_h']['b'],
                             params['mlp_rel_d']['b'], params['mlp_rel_h']['b']], axis=1)
    heads = pallas_linear(xf, W_all, b_all, leaky=True, out_dtype=jnp.bfloat16)   # [B*S, 2A+2R]
    arc_d = heads[:, :A]
    arc_h = heads[:, A:2 * A]
    rel_d = heads[:, 2 * A:2 * A + R]
    rel_h = heads[:, 2 * A + R:]

    # Hoisted biaffine "left" projections: big lane-dense GEMMs instead of per-(b,rel) small
    # MXU passes inside the biaffine kernels (review item 1).
    arc_W = params['arc_W']                                                  # [A+1, A] (bias_x only)
    arc_t = pallas_linear(arc_d, arc_W[:A].astype(jnp.bfloat16), arc_W[A:],
                          out_dtype=jnp.bfloat16)                            # [B*S, A]

    rel_W = params['rel_W']                                                  # [O, R+1, R+1]
    w_body = jnp.transpose(rel_W[:, :R, :R], (1, 0, 2)).reshape(R, O * R)    # [k, o*R+m]
    w_col = jnp.transpose(rel_W[:, :R, R], (1, 0))                           # [R, O] (bias_y cols)
    w_big = jnp.concatenate([w_body, w_col], axis=1).astype(jnp.bfloat16)    # [R, O*(R+1)]
    b_big = jnp.concatenate([rel_W[:, R, :R].reshape(1, O * R),
                             rel_W[:, R, R].reshape(1, O)], axis=1)          # [1, O*(R+1)]
    rel_p = pallas_linear(rel_d, w_big, b_big, out_dtype=jnp.bfloat16)       # [B*S, O*(R+1)]

    s_arc = arc_attn(arc_t.reshape(B, S, A), arc_h.reshape(B, S, A), mask_f)      # [B, S, S]
    s_rel = rel_attn(rel_p.reshape(B, S, O * (R + 1)), rel_h.reshape(B, S, R))    # [B, O, S, S]
    # TODO(synk): at production sizes defer this permute into the loss/decoder — it is a full
    # extra HBM pass over the largest tensor and the permuted last dim (n_rels) is lane-sparse.
    s_rel = jnp.transpose(s_rel, (0, 2, 3, 1))                               # .permute(0, 2, 3, 1)
    return s_arc, s_rel


if __name__ == "__main__":
    cfg = dict(n_words=50, n_feats=30, n_rels=4,
               n_embed=16, n_feat_embed=16, n_char_embed=8,
               n_lstm_hidden=32, n_lstm_layers=2,
               n_mlp_arc=32, n_mlp_rel=16,
               pad_index=0, unk_index=1, feat_pad_index=0)
    B, S, L = 2, 8, 4

    key = jax.random.PRNGKey(0)
    kp, kw, kf = jax.random.split(key, 3)
    params = init_params(kp, cfg)

    words = jax.random.randint(kw, (B, S), 2, cfg['n_words'], dtype=jnp.int32)
    words = words.at[1, 6:].set(cfg['pad_index'])                      # pad tail of sentence 1
    feats = jax.random.randint(kf, (B, S, L), 1, cfg['n_feats'], dtype=jnp.int32)
    feats = feats.at[:, :, 3:].set(cfg['feat_pad_index'])              # words shorter than fix_len
    feats = jnp.where(words[:, :, None] == cfg['pad_index'], cfg['feat_pad_index'], feats)

    fwd = jax.jit(functools.partial(forward, cfg=cfg))
    s_arc, s_rel = fwd(params, words, feats)
    jax.block_until_ready((s_arc, s_rel))

    assert s_arc.shape == (B, S, S)
    assert s_rel.shape == (B, S, S, cfg['n_rels'])
    assert bool(jnp.all(jnp.isneginf(s_arc[1, :, 6:])))                # padded heads masked to -inf
    assert bool(jnp.all(jnp.isfinite(s_rel)))
    print("KERNEL_OK")
</pallas_src>

<mosaic_0001>
module attributes {stable_mosaic.version = 11 : i64} {
  func.func @_linear_kernel(%arg0: i32, %arg1: memref<64x8xf32, #tpu.memory_space<vmem>>, %arg2: memref<8x64xbf16, #tpu.memory_space<vmem>>, %arg3: memref<1x64xf32, #tpu.memory_space<vmem>>, %arg4: memref<64x64xbf16, #tpu.memory_space<vmem>>) attributes {dimension_semantics = [#tpu.dimension_semantics<parallel>], iteration_bounds = array<i64: 1>, scalar_prefetch = 0 : i64, scratch_operands = 0 : i64, tpu.core_type = #tpu.core_type<tc>, window_params = [{transform_indices = @transform_0, window_bounds = array<i64: 64, 8>}, {pipeline_mode = #tpu.pipeline_mode<synchronous>, transform_indices = @transform_1, window_bounds = array<i64: 8, 64>}, {pipeline_mode = #tpu.pipeline_mode<synchronous>, transform_indices = @transform_2, window_bounds = array<i64: 1, 64>}, {transform_indices = @transform_3, window_bounds = array<i64: 64, 64>}]} {
    %c0 = arith.constant 0 : index
    %c0_0 = arith.constant 0 : index
    %0 = vector.load %arg1[%c0, %c0_0] : memref<64x8xf32, #tpu.memory_space<vmem>>, vector<64x8xf32>
    %1 = arith.truncf %0 : vector<64x8xf32> to vector<64x8xbf16>
    %c0_1 = arith.constant 0 : index
    %c0_2 = arith.constant 0 : index
    %2 = vector.load %arg2[%c0_1, %c0_2] : memref<8x64xbf16, #tpu.memory_space<vmem>>, vector<8x64xbf16>
    %cst = arith.constant dense<0.000000e+00> : vector<64x64xf32>
    %3 = tpu.matmul %1, %2, %cst {dimension_numbers = #tpu.dot_dimension_numbers<[1], [0], [0], [1], [0, 0, 1, 1], [], []>} : vector<64x8xbf16>, vector<8x64xbf16>, vector<64x64xf32> -> vector<64x64xf32>
    %c0_3 = arith.constant 0 : index
    %c0_4 = arith.constant 0 : index
    %4 = vector.load %arg3[%c0_3, %c0_4] : memref<1x64xf32, #tpu.memory_space<vmem>>, vector<1x64xf32>
    %5 = vector.broadcast %4 : vector<1x64xf32> to vector<64x64xf32>
    %6 = arith.addf %3, %5 : vector<64x64xf32>
    %7 = arith.truncf %6 : vector<64x64xf32> to vector<64x64xbf16>
    %c0_5 = arith.constant 0 : index
    %c0_6 = arith.constant 0 : index
    %8 = vector.load %arg4[%c0_5, %c0_6] : memref<64x64xbf16, #tpu.memory_space<vmem>>, vector<64x64xbf16>
    tpu.vector_store %arg4[%c0_5, %c0_6], %7 {strides = array<i32>} : memref<64x64xbf16, #tpu.memory_space<vmem>>, vector<64x64xbf16>,
    return
  }
  func.func @transform_0(%arg0: i32) -> (i32, i32) {
    %c0_i32 = arith.constant 0 : i32
    %c0_i32_0 = arith.constant 0 : i32
    return %arg0, %c0_i32 : i32, i32
  }
  func.func @transform_1(%arg0: i32) -> (i32, i32) {
    %c0_i32 = arith.constant 0 : i32
    %c0_i32_0 = arith.constant 0 : i32
    %c0_i32_1 = arith.constant 0 : i32
    return %c0_i32, %c0_i32_0 : i32, i32
  }
  func.func @transform_2(%arg0: i32) -> (i32, i32) {
    %c0_i32 = arith.constant 0 : i32
    %c0_i32_0 = arith.constant 0 : i32
    %c0_i32_1 = arith.constant 0 : i32
    return %c0_i32, %c0_i32_0 : i32, i32
  }
  func.func @transform_3(%arg0: i32) -> (i32, i32) {
    %c0_i32 = arith.constant 0 : i32
    %c0_i32_0 = arith.constant 0 : i32
    return %arg0, %c0_i32 : i32, i32
  }
}

module attributes {stable_mosaic.version = 11 : i64} {
  func.func @_bilstm_kernel(%arg0: i32, %arg1: memref<1x16x64xbf16, #tpu.memory_space<vmem>>, %arg2: memref<1x16x64xbf16, #tpu.memory_space<vmem>>, %arg3: memref<1x16x1xf32, #tpu.memory_space<vmem>>, %arg4: memref<1x16x1xf32, #tpu.memory_space<vmem>>, %arg5: memref<8x32xbf16, #tpu.memory_space<vmem>>, %arg6: memref<8x32xbf16, #tpu.memory_space<vmem>>, %arg7: memref<1x16x8xf32, #tpu.memory_space<vmem>>, %arg8: memref<1x16x8xf32, #tpu.memory_space<vmem>>, %arg9: memref<16x8xf32, #tpu.memory_space<vmem>>, %arg10: memref<16x8xf32, #tpu.memory_space<vmem>>, %arg11: memref<16x8xf32, #tpu.memory_space<vmem>>, %arg12: memref<16x8xf32, #tpu.memory_space<vmem>>, %arg13: memref<16x8xf32, #tpu.memory_space<vmem>>, %arg14: memref<16x8xf32, #tpu.memory_space<vmem>>) attributes {dimension_semantics = [#tpu.dimension_semantics<arbitrary>], iteration_bounds = array<i64: 4>, scalar_prefetch = 0 : i64, scratch_operands = 4 : i64, tpu.core_type = #tpu.core_type<tc>, window_params = [{transform_indices = @transform_0, window_bounds = array<i64: 1, 16, 64>}, {transform_indices = @transform_1, window_bounds = array<i64: 1, 16, 64>}, {transform_indices = @transform_2, window_bounds = array<i64: 1, 16, 1>}, {transform_indices = @transform_3, window_bounds = array<i64: 1, 16, 1>}, {pipeline_mode = #tpu.pipeline_mode<synchronous>, transform_indices = @transform_4, window_bounds = array<i64: 8, 32>}, {pipeline_mode = #tpu.pipeline_mode<synchronous>, transform_indices = @transform_5, window_bounds = array<i64: 8, 32>}, {transform_indices = @transform_6, window_bounds = array<i64: 1, 16, 8>}, {transform_indices = @transform_7, window_bounds = array<i64: 1, 16, 8>}, {pipeline_mode = #tpu.pipeline_mode<synchronous>, transform_indices = @transform_8, window_bounds = array<i64: 16, 8>}, {pipeline_mode = #tpu.pipeline_mode<synchronous>, transform_indices = @transform_9, window_bounds = array<i64: 16, 8>}]} {
    %c0_i32 = arith.constant 0 : i32
    %0 = arith.cmpi eq, %arg0, %c0_i32 : i32
    %1 = arith.extui %0 : i1 to i32
    %c0_i32_0 = arith.constant 0 : i32
    %2 = arith.cmpi ne, %1, %c0_i32_0 : i32
    scf.if %2 {
      %cst_64 = arith.constant 0.000000e+00 : f32
      %125 = vector.broadcast %cst_64 : f32 to vector<16x8xf32>
      %c0_65 = arith.constant 0 : index
      %c0_66 = arith.constant 0 : index
      %126 = vector.load %arg11[%c0_65, %c0_66] : memref<16x8xf32, #tpu.memory_space<vmem>>, vector<16x8xf32>
      tpu.vector_store %arg11[%c0_65, %c0_66], %125 {strides = array<i32>} : memref<16x8xf32, #tpu.memory_space<vmem>>, vector<16x8xf32>,
      %cst_67 = arith.constant 0.000000e+00 : f32
      %127 = vector.broadcast %cst_67 : f32 to vector<16x8xf32>
      %c0_68 = arith.constant 0 : index
      %c0_69 = arith.constant 0 : index
      %128 = vector.load %arg12[%c0_68, %c0_69] : memref<16x8xf32, #tpu.memory_space<vmem>>, vector<16x8xf32>
      tpu.vector_store %arg12[%c0_68, %c0_69], %127 {strides = array<i32>} : memref<16x8xf32, #tpu.memory_space<vmem>>, vector<16x8xf32>,
      %cst_70 = arith.constant 0.000000e+00 : f32
      %129 = vector.broadcast %cst_70 : f32 to vector<16x8xf32>
      %c0_71 = arith.constant 0 : index
      %c0_72 = arith.constant 0 : index
      %130 = vector.load %arg13[%c0_71, %c0_72] : memref<16x8xf32, #tpu.memory_space<vmem>>, vector<16x8xf32>
      tpu.vector_store %arg13[%c0_71, %c0_72], %129 {strides = array<i32>} : memref<16x8xf32, #tpu.memory_space<vmem>>, vector<16x8xf32>,
      %cst_73 = arith.constant 0.000000e+00 : f32
      %131 = vector.broadcast %cst_73 : f32 to vector<16x8xf32>
      %c0_74 = arith.constant 0 : index
      %c0_75 = arith.constant 0 : index
      %132 = vector.load %arg14[%c0_74, %c0_75] : memref<16x8xf32, #tpu.memory_space<vmem>>, vector<16x8xf32>
      tpu.vector_store %arg14[%c0_74, %c0_75], %131 {strides = array<i32>} : memref<16x8xf32, #tpu.memory_space<vmem>>, vector<16x8xf32>,
    } else {
    }
    %c0 = arith.constant 0 : index
    %c0_1 = arith.constant 0 : index
    %c0_2 = arith.constant 0 : index
    %3 = vector.load %arg1[%c0, %c0_1, %c0_2] : memref<1x16x64xbf16, #tpu.memory_space<vmem>>, vector<1x16x32xbf16>
    %4 = vector.shape_cast %3 : vector<1x16x32xbf16> to vector<16x32xbf16>
    %c0_3 = arith.constant 0 : index
    %c0_4 = arith.constant 0 : index
    %c0_5 = arith.constant 0 : index
    %5 = vector.load %arg3[%c0_3, %c0_4, %c0_5] : memref<1x16x1xf32, #tpu.memory_space<vmem>>, vector<1x16x1xf32>
    %6 = vector.shape_cast %5 : vector<1x16x1xf32> to vector<16x1xf32>
    %7 = arith.extf %4 : vector<16x32xbf16> to vector<16x32xf32>
    %c0_6 = arith.constant 0 : index
    %c0_7 = arith.constant 0 : index
    %8 = vector.load %arg11[%c0_6, %c0_7] : memref<16x8xf32, #tpu.memory_space<vmem>>, vector<16x8xf32>
    %9 = arith.truncf %8 : vector<16x8xf32> to vector<16x8xbf16>
    %c0_8 = arith.constant 0 : index
    %c0_9 = arith.constant 0 : index
    %10 = vector.load %arg5[%c0_8, %c0_9] : memref<8x32xbf16, #tpu.memory_space<vmem>>, vector<8x32xbf16>
    %cst = arith.constant dense<0.000000e+00> : vector<16x32xf32>
    %11 = tpu.matmul %9, %10, %cst {dimension_numbers = #tpu.dot_dimension_numbers<[1], [0], [0], [1], [0, 0, 1, 1], [], []>} : vector<16x8xbf16>, vector<8x32xbf16>, vector<16x32xf32> -> vector<16x32xf32>
    %12 = arith.addf %7, %11 : vector<16x32xf32>
    %13 = vector.extract_strided_slice %12 {offsets = [0, 0], sizes = [16, 8], strides = [1, 1]} : vector<16x32xf32> to vector<16x8xf32>
    %14 = arith.negf %13 : vector<16x8xf32>
    %15 = math.exp %14 : vector<16x8xf32>
    %cst_10 = arith.constant 1.000000e+00 : f32
    %16 = vector.broadcast %cst_10 : f32 to vector<16x8xf32>
    %17 = arith.addf %16, %15 : vector<16x8xf32>
    %18 = arith.divf %16, %17 : vector<16x8xf32>
    %19 = vector.extract_strided_slice %12 {offsets = [0, 8], sizes = [16, 8], strides = [1, 1]} : vector<16x32xf32> to vector<16x8xf32>
    %20 = arith.negf %19 : vector<16x8xf32>
    %21 = math.exp %20 : vector<16x8xf32>
    %cst_11 = arith.constant 1.000000e+00 : f32
    %22 = vector.broadcast %cst_11 : f32 to vector<16x8xf32>
    %23 = arith.addf %22, %21 : vector<16x8xf32>
    %24 = arith.divf %22, %23 : vector<16x8xf32>
    %25 = vector.extract_strided_slice %12 {offsets = [0, 16], sizes = [16, 8], strides = [1, 1]} : vector<16x32xf32> to vector<16x8xf32>
    %26 = math.tanh %25 : vector<16x8xf32>
    %27 = vector.extract_strided_slice %12 {offsets = [0, 24], sizes = [16, 8], strides = [1, 1]} : vector<16x32xf32> to vector<16x8xf32>
    %28 = arith.negf %27 : vector<16x8xf32>
    %29 = math.exp %28 : vector<16x8xf32>
    %cst_12 = arith.constant 1.000000e+00 : f32
    %30 = vector.broadcast %cst_12 : f32 to vector<16x8xf32>
    %31 = arith.addf %30, %29 : vector<16x8xf32>
    %32 = arith.divf %30, %31 : vector<16x8xf32>
    %c0_13 = arith.constant 0 : index
    %c0_14 = arith.constant 0 : index
    %33 = vector.load %arg12[%c0_13, %c0_14] : memref<16x8xf32, #tpu.memory_space<vmem>>, vector<16x8xf32>
    %34 = arith.mulf %24, %33 : vector<16x8xf32>
    %35 = arith.mulf %18, %26 : vector<16x8xf32>
    %36 = arith.addf %34, %35 : vector<16x8xf32>
    %37 = math.tanh %36 : vector<16x8xf32>
    %38 = arith.mulf %32, %37 : vector<16x8xf32>
    %39 = vector.broadcast %6 : vector<16x1xf32> to vector<16x8xf32>
    %40 = arith.mulf %39, %38 : vector<16x8xf32>
    %cst_15 = arith.constant 1.000000e+00 : f32
    %41 = vector.broadcast %cst_15 : f32 to vector<16x1xf32>
    %42 = arith.subf %41, %6 : vector<16x1xf32>
    %c0_16 = arith.constant 0 : index
    %c0_17 = arith.constant 0 : index
    %43 = vector.load %arg11[%c0_16, %c0_17] : memref<16x8xf32, #tpu.memory_space<vmem>>, vector<16x8xf32>
    %44 = vector.broadcast %42 : vector<16x1xf32> to vector<16x8xf32>
    %45 = arith.mulf %44, %43 : vector<16x8xf32>
    %46 = arith.addf %40, %45 : vector<16x8xf32>
    %47 = vector.broadcast %6 : vector<16x1xf32> to vector<16x8xf32>
    %48 = arith.mulf %47, %36 : vector<16x8xf32>
    %cst_18 = arith.constant 1.000000e+00 : f32
    %49 = vector.broadcast %cst_18 : f32 to vector<16x1xf32>
    %50 = arith.subf %49, %6 : vector<16x1xf32>
    %c0_19 = arith.constant 0 : index
    %c0_20 = arith.constant 0 : index
    %51 = vector.load %arg12[%c0_19, %c0_20] : memref<16x8xf32, #tpu.memory_space<vmem>>, vector<16x8xf32>
    %52 = vector.broadcast %50 : vector<16x1xf32> to vector<16x8xf32>
    %53 = arith.mulf %52, %51 : vector<16x8xf32>
    %54 = arith.addf %48, %53 : vector<16x8xf32>
    %c0_21 = arith.constant 0 : index
    %c0_22 = arith.constant 0 : index
    %55 = vector.load %arg12[%c0_21, %c0_22] : memref<16x8xf32, #tpu.memory_space<vmem>>, vector<16x8xf32>
    tpu.vector_store %arg12[%c0_21, %c0_22], %54 {strides = array<i32>} : memref<16x8xf32, #tpu.memory_space<vmem>>, vector<16x8xf32>,
    %c0_23 = arith.constant 0 : index
    %c0_24 = arith.constant 0 : index
    %56 = vector.load %arg11[%c0_23, %c0_24] : memref<16x8xf32, #tpu.memory_space<vmem>>, vector<16x8xf32>
    tpu.vector_store %arg11[%c0_23, %c0_24], %46 {strides = array<i32>} : memref<16x8xf32, #tpu.memory_space<vmem>>, vector<16x8xf32>,
    %57 = vector.broadcast %6 : vector<16x1xf32> to vector<16x8xf32>
    %58 = arith.mulf %46, %57 : vector<16x8xf32>
    %c0_25 = arith.constant 0 : index
    %c0_26 = arith.constant 0 : index
    %c0_27 = arith.constant 0 : index
    %59 = vector.load %arg7[%c0_25, %c0_26, %c0_27] : memref<1x16x8xf32, #tpu.memory_space<vmem>>, vector<1x16x8xf32>
    %60 = vector.shape_cast %59 : vector<1x16x8xf32> to vector<16x8xf32>
    %61 = vector.shape_cast %58 : vector<16x8xf32> to vector<1x16x8xf32>
    tpu.vector_store %arg7[%c0_25, %c0_26, %c0_27], %61 {strides = array<i32>} : memref<1x16x8xf32, #tpu.memory_space<vmem>>, vector<1x16x8xf32>,
    %c0_28 = arith.constant 0 : index
    %c0_29 = arith.constant 0 : index
    %c32 = arith.constant 32 : index
    %62 = vector.load %arg2[%c0_28, %c0_29, %c32] : memref<1x16x64xbf16, #tpu.memory_space<vmem>>, vector<1x16x32xbf16>
    %63 = vector.shape_cast %62 : vector<1x16x32xbf16> to vector<16x32xbf16>
    %c0_30 = arith.constant 0 : index
    %c0_31 = arith.constant 0 : index
    %c0_32 = arith.constant 0 : index
    %64 = vector.load %arg4[%c0_30, %c0_31, %c0_32] : memref<1x16x1xf32, #tpu.memory_space<vmem>>, vector<1x16x1xf32>
    %65 = vector.shape_cast %64 : vector<1x16x1xf32> to vector<16x1xf32>
    %66 = arith.extf %63 : vector<16x32xbf16> to vector<16x32xf32>
    %c0_33 = arith.constant 0 : index
    %c0_34 = arith.constant 0 : index
    %67 = vector.load %arg13[%c0_33, %c0_34] : memref<16x8xf32, #tpu.memory_space<vmem>>, vector<16x8xf32>
    %68 = arith.truncf %67 : vector<16x8xf32> to vector<16x8xbf16>
    %c0_35 = arith.constant 0 : index
    %c0_36 = arith.constant 0 : index
    %69 = vector.load %arg6[%c0_35, %c0_36] : memref<8x32xbf16, #tpu.memory_space<vmem>>, vector<8x32xbf16>
    %cst_37 = arith.constant dense<0.000000e+00> : vector<16x32xf32>
    %70 = tpu.matmul %68, %69, %cst_37 {dimension_numbers = #tpu.dot_dimension_numbers<[1], [0], [0], [1], [0, 0, 1, 1], [], []>} : vector<16x8xbf16>, vector<8x32xbf16>, vector<16x32xf32> -> vector<16x32xf32>
    %71 = arith.addf %66, %70 : vector<16x32xf32>
    %72 = vector.extract_strided_slice %71 {offsets = [0, 0], sizes = [16, 8], strides = [1, 1]} : vector<16x32xf32> to vector<16x8xf32>
    %73 = arith.negf %72 : vector<16x8xf32>
    %74 = math.exp %73 : vector<16x8xf32>
    %cst_38 = arith.constant 1.000000e+00 : f32
    %75 = vector.broadcast %cst_38 : f32 to vector<16x8xf32>
    %76 = arith.addf %75, %74 : vector<16x8xf32>
    %77 = arith.divf %75, %76 : vector<16x8xf32>
    %78 = vector.extract_strided_slice %71 {offsets = [0, 8], sizes = [16, 8], strides = [1, 1]} : vector<16x32xf32> to vector<16x8xf32>
    %79 = arith.negf %78 : vector<16x8xf32>
    %80 = math.exp %79 : vector<16x8xf32>
    %cst_39 = arith.constant 1.000000e+00 : f32
    %81 = vector.broadcast %cst_39 : f32 to vector<16x8xf32>
    %82 = arith.addf %81, %80 : vector<16x8xf32>
    %83 = arith.divf %81, %82 : vector<16x8xf32>
    %84 = vector.extract_strided_slice %71 {offsets = [0, 16], sizes = [16, 8], strides = [1, 1]} : vector<16x32xf32> to vector<16x8xf32>
    %85 = math.tanh %84 : vector<16x8xf32>
    %86 = vector.extract_strided_slice %71 {offsets = [0, 24], sizes = [16, 8], strides = [1, 1]} : vector<16x32xf32> to vector<16x8xf32>
    %87 = arith.negf %86 : vector<16x8xf32>
    %88 = math.exp %87 : vector<16x8xf32>
    %cst_40 = arith.constant 1.000000e+00 : f32
    %89 = vector.broadcast %cst_40 : f32 to vector<16x8xf32>
    %90 = arith.addf %89, %88 : vector<16x8xf32>
    %91 = arith.divf %89, %90 : vector<16x8xf32>
    %c0_41 = arith.constant 0 : index
    %c0_42 = arith.constant 0 : index
    %92 = vector.load %arg14[%c0_41, %c0_42] : memref<16x8xf32, #tpu.memory_space<vmem>>, vector<16x8xf32>
    %93 = arith.mulf %83, %92 : vector<16x8xf32>
    %94 = arith.mulf %77, %85 : vector<16x8xf32>
    %95 = arith.addf %93, %94 : vector<16x8xf32>
    %96 = math.tanh %95 : vector<16x8xf32>
    %97 = arith.mulf %91, %96 : vector<16x8xf32>
    %98 = vector.broadcast %65 : vector<16x1xf32> to vector<16x8xf32>
    %99 = arith.mulf %98, %97 : vector<16x8xf32>
    %cst_43 = arith.constant 1.000000e+00 : f32
    %100 = vector.broadcast %cst_43 : f32 to vector<16x1xf32>
    %101 = arith.subf %100, %65 : vector<16x1xf32>
    %c0_44 = arith.constant 0 : index
    %c0_45 = arith.constant 0 : index
    %102 = vector.load %arg13[%c0_44, %c0_45] : memref<16x8xf32, #tpu.memory_space<vmem>>, vector<16x8xf32>
    %103 = vector.broadcast %101 : vector<16x1xf32> to vector<16x8xf32>
    %104 = arith.mulf %103, %102 : vector<16x8xf32>
    %105 = arith.addf %99, %104 : vector<16x8xf32>
    %106 = vector.broadcast %65 : vector<16x1xf32> to vector<16x8xf32>
    %107 = arith.mulf %106, %95 : vector<16x8xf32>
    %cst_46 = arith.constant 1.000000e+00 : f32
    %108 = vector.broadcast %cst_46 : f32 to vector<16x1xf32>
    %109 = arith.subf %108, %65 : vector<16x1xf32>
    %c0_47 = arith.constant 0 : index
    %c0_48 = arith.constant 0 : index
    %110 = vector.load %arg14[%c0_47, %c0_48] : memref<16x8xf32, #tpu.memory_space<vmem>>, vector<16x8xf32>
    %111 = vector.broadcast %109 : vector<16x1xf32> to vector<16x8xf32>
    %112 = arith.mulf %111, %110 : vector<16x8xf32>
    %113 = arith.addf %107, %112 : vector<16x8xf32>
    %c0_49 = arith.constant 0 : index
    %c0_50 = arith.constant 0 : index
    %114 = vector.load %arg14[%c0_49, %c0_50] : memref<16x8xf32, #tpu.memory_space<vmem>>, vector<16x8xf32>
    tpu.vector_store %arg14[%c0_49, %c0_50], %113 {strides = array<i32>} : memref<16x8xf32, #tpu.memory_space<vmem>>, vector<16x8xf32>,
    %c0_51 = arith.constant 0 : index
    %c0_52 = arith.constant 0 : index
    %115 = vector.load %arg13[%c0_51, %c0_52] : memref<16x8xf32, #tpu.memory_space<vmem>>, vector<16x8xf32>
    tpu.vector_store %arg13[%c0_51, %c0_52], %105 {strides = array<i32>} : memref<16x8xf32, #tpu.memory_space<vmem>>, vector<16x8xf32>,
    %116 = vector.broadcast %65 : vector<16x1xf32> to vector<16x8xf32>
    %117 = arith.mulf %105, %116 : vector<16x8xf32>
    %c0_53 = arith.constant 0 : index
    %c0_54 = arith.constant 0 : index
    %c0_55 = arith.constant 0 : index
    %118 = vector.load %arg8[%c0_53, %c0_54, %c0_55] : memref<1x16x8xf32, #tpu.memory_space<vmem>>, vector<1x16x8xf32>
    %119 = vector.shape_cast %118 : vector<1x16x8xf32> to vector<16x8xf32>
    %120 = vector.shape_cast %117 : vector<16x8xf32> to vector<1x16x8xf32>
    tpu.vector_store %arg8[%c0_53, %c0_54, %c0_55], %120 {strides = array<i32>} : memref<1x16x8xf32, #tpu.memory_space<vmem>>, vector<1x16x8xf32>,
    %c0_56 = arith.constant 0 : index
    %c0_57 = arith.constant 0 : index
    %121 = vector.load %arg11[%c0_56, %c0_57] : memref<16x8xf32, #tpu.memory_space<vmem>>, vector<16x8xf32>
    %c0_58 = arith.constant 0 : index
    %c0_59 = arith.constant 0 : index
    %122 = vector.load %arg9[%c0_58, %c0_59] : memref<16x8xf32, #tpu.memory_space<vmem>>, vector<16x8xf32>
    tpu.vector_store %arg9[%c0_58, %c0_59], %121 {strides = array<i32>} : memref<16x8xf32, #tpu.memory_space<vmem>>, vector<16x8xf32>,
    %c0_60 = arith.constant 0 : index
    %c0_61 = arith.constant 0 : index
    %123 = vector.load %arg13[%c0_60, %c0_61] : memref<16x8xf32, #tpu.memory_space<vmem>>, vector<16x8xf32>
    %c0_62 = arith.constant 0 : index
    %c0_63 = arith.constant 0 : index
    %124 = vector.load %arg10[%c0_62, %c0_63] : memref<16x8xf32, #tpu.memory_space<vmem>>, vector<16x8xf32>
    tpu.vector_store %arg10[%c0_62, %c0_63], %123 {strides = array<i32>} : memref<16x8xf32, #tpu.memory_space<vmem>>, vector<16x8xf32>,
    return
  }
  func.func @transform_0(%arg0: i32) -> (i32, i32, i32) {
    %c0_i32 = arith.constant 0 : i32
    %c0_i32_0 = arith.constant 0 : i32
    %c0_i32_1 = arith.constant 0 : i32
    return %arg0, %c0_i32, %c0_i32_0 : i32, i32, i32
  }
  func.func @transform_1(%arg0: i32) -> (i32, i32, i32) {
    %c3_i32 = arith.constant 3 : i32
    %0 = arith.subi %c3_i32, %arg0 : i32
    %c0_i32 = arith.constant 0 : i32
    %c0_i32_0 = arith.constant 0 : i32
    %c0_i32_1 = arith.constant 0 : i32
    return %0, %c0_i32, %c0_i32_0 : i32, i32, i32
  }
  func.func @transform_2(%arg0: i32) -> (i32, i32, i32) {
    %c0_i32 = arith.constant 0 : i32
    %c0_i32_0 = arith.constant 0 : i32
    %c0_i32_1 = arith.constant 0 : i32
    return %arg0, %c0_i32, %c0_i32_0 : i32, i32, i32
  }
  func.func @transform_3(%arg0: i32) -> (i32, i32, i32) {
    %c3_i32 = arith.constant 3 : i32
    %0 = arith.subi %c3_i32, %arg0 : i32
    %c0_i32 = arith.constant 0 : i32
    %c0_i32_0 = arith.constant 0 : i32
    %c0_i32_1 = arith.constant 0 : i32
    return %0, %c0_i32, %c0_i32_0 : i32, i32, i32
  }
  func.func @transform_4(%arg0: i32) -> (i32, i32) {
    %c0_i32 = arith.constant 0 : i32
    %c0_i32_0 = arith.constant 0 : i32
    %c0_i32_1 = arith.constant 0 : i32
    return %c0_i32, %c0_i32_0 : i32, i32
  }
  func.func @transform_5(%arg0: i32) -> (i32, i32) {
    %c0_i32 = arith.constant 0 : i32
    %c0_i32_0 = arith.constant 0 : i32
    %c0_i32_1 = arith.constant 0 : i32
    return %c0_i32, %c0_i32_0 : i32, i32
  }
  func.func @transform_6(%arg0: i32) -> (i32, i32, i32) {
    %c0_i32 = arith.constant 0 : i32
    %c0_i32_0 = arith.constant 0 : i32
    %c0_i32_1 = arith.constant 0 : i32
    return %arg0, %c0_i32, %c0_i32_0 : i32, i32, i32
  }
  func.func @transform_7(%arg0: i32) -> (i32, i32, i32) {
    %c3_i32 = arith.constant 3 : i32
    %0 = arith.subi %c3_i32, %arg0 : i32
    %c0_i32 = arith.constant 0 : i32
    %c0_i32_0 = arith.constant 0 : i32
    %c0_i32_1 = arith.constant 0 : i32
    return %0, %c0_i32, %c0_i32_0 : i32, i32, i32
  }
  func.func @transform_8(%arg0: i32) -> (i32, i32) {
    %c0_i32 = arith.constant 0 : i32
    %c0_i32_0 = arith.constant 0 : i32
    %c0_i32_1 = arith.constant 0 : i32
    return %c0_i32, %c0_i32_0 : i32, i32
  }
  func.func @transform_9(%arg0: i32) -> (i32, i32) {
    %c0_i32 = arith.constant 0 : i32
    %c0_i32_0 = arith.constant 0 : i32
    %c0_i32_1 = arith.constant 0 : i32
    return %c0_i32, %c0_i32_0 : i32, i32
  }
}

module attributes {stable_mosaic.version = 11 : i64} {
  func.func @_linear_kernel(%arg0: i32, %arg1: memref<16x32xf32, #tpu.memory_space<vmem>>, %arg2: memref<32x256xbf16, #tpu.memory_space<vmem>>, %arg3: memref<1x256xf32, #tpu.memory_space<vmem>>, %arg4: memref<16x256xbf16, #tpu.memory_space<vmem>>) attributes {dimension_semantics = [#tpu.dimension_semantics<parallel>], iteration_bounds = array<i64: 1>, scalar_prefetch = 0 : i64, scratch_operands = 0 : i64, tpu.core_type = #tpu.core_type<tc>, window_params = [{transform_indices = @transform_0, window_bounds = array<i64: 16, 32>}, {pipeline_mode = #tpu.pipeline_mode<synchronous>, transform_indices = @transform_1, window_bounds = array<i64: 32, 256>}, {pipeline_mode = #tpu.pipeline_mode<synchronous>, transform_indices = @transform_2, window_bounds = array<i64: 1, 256>}, {transform_indices = @transform_3, window_bounds = array<i64: 16, 256>}]} {
    %c0 = arith.constant 0 : index
    %c0_0 = arith.constant 0 : index
    %0 = vector.load %arg1[%c0, %c0_0] : memref<16x32xf32, #tpu.memory_space<vmem>>, vector<16x32xf32>
    %1 = arith.truncf %0 : vector<16x32xf32> to vector<16x32xbf16>
    %c0_1 = arith.constant 0 : index
    %c0_2 = arith.constant 0 : index
    %2 = vector.load %arg2[%c0_1, %c0_2] : memref<32x256xbf16, #tpu.memory_space<vmem>>, vector<32x256xbf16>
    %cst = arith.constant dense<0.000000e+00> : vector<16x256xf32>
    %3 = tpu.matmul %1, %2, %cst {dimension_numbers = #tpu.dot_dimension_numbers<[1], [0], [0], [1], [0, 0, 1, 1], [], []>} : vector<16x32xbf16>, vector<32x256xbf16>, vector<16x256xf32> -> vector<16x256xf32>
    %c0_3 = arith.constant 0 : index
    %c0_4 = arith.constant 0 : index
    %4 = vector.load %arg3[%c0_3, %c0_4] : memref<1x256xf32, #tpu.memory_space<vmem>>, vector<1x256xf32>
    %5 = vector.broadcast %4 : vector<1x256xf32> to vector<16x256xf32>
    %6 = arith.addf %3, %5 : vector<16x256xf32>
    %7 = arith.truncf %6 : vector<16x256xf32> to vector<16x256xbf16>
    %c0_5 = arith.constant 0 : index
    %c0_6 = arith.constant 0 : index
    %8 = vector.load %arg4[%c0_5, %c0_6] : memref<16x256xbf16, #tpu.memory_space<vmem>>, vector<16x256xbf16>
    tpu.vector_store %arg4[%c0_5, %c0_6], %7 {strides = array<i32>} : memref<16x256xbf16, #tpu.memory_space<vmem>>, vector<16x256xbf16>,
    return
  }
  func.func @transform_0(%arg0: i32) -> (i32, i32) {
    %c0_i32 = arith.constant 0 : i32
    %c0_i32_0 = arith.constant 0 : i32
    return %arg0, %c0_i32 : i32, i32
  }
  func.func @transform_1(%arg0: i32) -> (i32, i32) {
    %c0_i32 = arith.constant 0 : i32
    %c0_i32_0 = arith.constant 0 : i32
    %c0_i32_1 = arith.constant 0 : i32
    return %c0_i32, %c0_i32_0 : i32, i32
  }
  func.func @transform_2(%arg0: i32) -> (i32, i32) {
    %c0_i32 = arith.constant 0 : i32
    %c0_i32_0 = arith.constant 0 : i32
    %c0_i32_1 = arith.constant 0 : i32
    return %c0_i32, %c0_i32_0 : i32, i32
  }
  func.func @transform_3(%arg0: i32) -> (i32, i32) {
    %c0_i32 = arith.constant 0 : i32
    %c0_i32_0 = arith.constant 0 : i32
    return %arg0, %c0_i32 : i32, i32
  }
}

module attributes {stable_mosaic.version = 11 : i64} {
  func.func @_linear_kernel(%arg0: i32, %arg1: memref<16x64xf32, #tpu.memory_space<vmem>>, %arg2: memref<64x256xbf16, #tpu.memory_space<vmem>>, %arg3: memref<1x256xf32, #tpu.memory_space<vmem>>, %arg4: memref<16x256xbf16, #tpu.memory_space<vmem>>) attributes {dimension_semantics = [#tpu.dimension_semantics<parallel>], iteration_bounds = array<i64: 1>, scalar_prefetch = 0 : i64, scratch_operands = 0 : i64, tpu.core_type = #tpu.core_type<tc>, window_params = [{transform_indices = @transform_0, window_bounds = array<i64: 16, 64>}, {pipeline_mode = #tpu.pipeline_mode<synchronous>, transform_indices = @transform_1, window_bounds = array<i64: 64, 256>}, {pipeline_mode = #tpu.pipeline_mode<synchronous>, transform_indices = @transform_2, window_bounds = array<i64: 1, 256>}, {transform_indices = @transform_3, window_bounds = array<i64: 16, 256>}]} {
    %c0 = arith.constant 0 : index
    %c0_0 = arith.constant 0 : index
    %0 = vector.load %arg1[%c0, %c0_0] : memref<16x64xf32, #tpu.memory_space<vmem>>, vector<16x64xf32>
    %1 = arith.truncf %0 : vector<16x64xf32> to vector<16x64xbf16>
    %c0_1 = arith.constant 0 : index
    %c0_2 = arith.constant 0 : index
    %2 = vector.load %arg2[%c0_1, %c0_2] : memref<64x256xbf16, #tpu.memory_space<vmem>>, vector<64x256xbf16>
    %cst = arith.constant dense<0.000000e+00> : vector<16x256xf32>
    %3 = tpu.matmul %1, %2, %cst {dimension_numbers = #tpu.dot_dimension_numbers<[1], [0], [0], [1], [0, 0, 1, 1], [], []>} : vector<16x64xbf16>, vector<64x256xbf16>, vector<16x256xf32> -> vector<16x256xf32>
    %c0_3 = arith.constant 0 : index
    %c0_4 = arith.constant 0 : index
    %4 = vector.load %arg3[%c0_3, %c0_4] : memref<1x256xf32, #tpu.memory_space<vmem>>, vector<1x256xf32>
    %5 = vector.broadcast %4 : vector<1x256xf32> to vector<16x256xf32>
    %6 = arith.addf %3, %5 : vector<16x256xf32>
    %7 = arith.truncf %6 : vector<16x256xf32> to vector<16x256xbf16>
    %c0_5 = arith.constant 0 : index
    %c0_6 = arith.constant 0 : index
    %8 = vector.load %arg4[%c0_5, %c0_6] : memref<16x256xbf16, #tpu.memory_space<vmem>>, vector<16x256xbf16>
    tpu.vector_store %arg4[%c0_5, %c0_6], %7 {strides = array<i32>} : memref<16x256xbf16, #tpu.memory_space<vmem>>, vector<16x256xbf16>,
    return
  }
  func.func @transform_0(%arg0: i32) -> (i32, i32) {
    %c0_i32 = arith.constant 0 : i32
    %c0_i32_0 = arith.constant 0 : i32
    return %arg0, %c0_i32 : i32, i32
  }
  func.func @transform_1(%arg0: i32) -> (i32, i32) {
    %c0_i32 = arith.constant 0 : i32
    %c0_i32_0 = arith.constant 0 : i32
    %c0_i32_1 = arith.constant 0 : i32
    return %c0_i32, %c0_i32_0 : i32, i32
  }
  func.func @transform_2(%arg0: i32) -> (i32, i32) {
    %c0_i32 = arith.constant 0 : i32
    %c0_i32_0 = arith.constant 0 : i32
    %c0_i32_1 = arith.constant 0 : i32
    return %c0_i32, %c0_i32_0 : i32, i32
  }
  func.func @transform_3(%arg0: i32) -> (i32, i32) {
    %c0_i32 = arith.constant 0 : i32
    %c0_i32_0 = arith.constant 0 : i32
    return %arg0, %c0_i32 : i32, i32
  }
}

module attributes {stable_mosaic.version = 11 : i64} {
  func.func @_bilstm_kernel(%arg0: i32, %arg1: memref<1x2x256xbf16, #tpu.memory_space<vmem>>, %arg2: memref<1x2x256xbf16, #tpu.memory_space<vmem>>, %arg3: memref<1x2x1xf32, #tpu.memory_space<vmem>>, %arg4: memref<1x2x1xf32, #tpu.memory_space<vmem>>, %arg5: memref<32x128xbf16, #tpu.memory_space<vmem>>, %arg6: memref<32x128xbf16, #tpu.memory_space<vmem>>, %arg7: memref<1x2x32xf32, #tpu.memory_space<vmem>>, %arg8: memref<1x2x32xf32, #tpu.memory_space<vmem>>, %arg9: memref<2x32xf32, #tpu.memory_space<vmem>>, %arg10: memref<2x32xf32, #tpu.memory_space<vmem>>, %arg11: memref<2x32xf32, #tpu.memory_space<vmem>>, %arg12: memref<2x32xf32, #tpu.memory_space<vmem>>, %arg13: memref<2x32xf32, #tpu.memory_space<vmem>>, %arg14: memref<2x32xf32, #tpu.memory_space<vmem>>) attributes {dimension_semantics = [#tpu.dimension_semantics<arbitrary>], iteration_bounds = array<i64: 8>, scalar_prefetch = 0 : i64, scratch_operands = 4 : i64, tpu.core_type = #tpu.core_type<tc>, window_params = [{transform_indices = @transform_0, window_bounds = array<i64: 1, 2, 256>}, {transform_indices = @transform_1, window_bounds = array<i64: 1, 2, 256>}, {transform_indices = @transform_2, window_bounds = array<i64: 1, 2, 1>}, {transform_indices = @transform_3, window_bounds = array<i64: 1, 2, 1>}, {pipeline_mode = #tpu.pipeline_mode<synchronous>, transform_indices = @transform_4, window_bounds = array<i64: 32, 128>}, {pipeline_mode = #tpu.pipeline_mode<synchronous>, transform_indices = @transform_5, window_bounds = array<i64: 32, 128>}, {transform_indices = @transform_6, window_bounds = array<i64: 1, 2, 32>}, {transform_indices = @transform_7, window_bounds = array<i64: 1, 2, 32>}, {pipeline_mode = #tpu.pipeline_mode<synchronous>, transform_indices = @transform_8, window_bounds = array<i64: 2, 32>}, {pipeline_mode = #tpu.pipeline_mode<synchronous>, transform_indices = @transform_9, window_bounds = array<i64: 2, 32>}]} {
    %c0_i32 = arith.constant 0 : i32
    %0 = arith.cmpi eq, %arg0, %c0_i32 : i32
    %1 = arith.extui %0 : i1 to i32
    %c0_i32_0 = arith.constant 0 : i32
    %2 = arith.cmpi ne, %1, %c0_i32_0 : i32
    scf.if %2 {
      %cst_64 = arith.constant 0.000000e+00 : f32
      %125 = vector.broadcast %cst_64 : f32 to vector<2x32xf32>
      %c0_65 = arith.constant 0 : index
      %c0_66 = arith.constant 0 : index
      %126 = vector.load %arg11[%c0_65, %c0_66] : memref<2x32xf32, #tpu.memory_space<vmem>>, vector<2x32xf32>
      tpu.vector_store %arg11[%c0_65, %c0_66], %125 {strides = array<i32>} : memref<2x32xf32, #tpu.memory_space<vmem>>, vector<2x32xf32>,
      %cst_67 = arith.constant 0.000000e+00 : f32
      %127 = vector.broadcast %cst_67 : f32 to vector<2x32xf32>
      %c0_68 = arith.constant 0 : index
      %c0_69 = arith.constant 0 : index
      %128 = vector.load %arg12[%c0_68, %c0_69] : memref<2x32xf32, #tpu.memory_space<vmem>>, vector<2x32xf32>
      tpu.vector_store %arg12[%c0_68, %c0_69], %127 {strides = array<i32>} : memref<2x32xf32, #tpu.memory_space<vmem>>, vector<2x32xf32>,
      %cst_70 = arith.constant 0.000000e+00 : f32
      %129 = vector.broadcast %cst_70 : f32 to vector<2x32xf32>
      %c0_71 = arith.constant 0 : index
      %c0_72 = arith.constant 0 : index
      %130 = vector.load %arg13[%c0_71, %c0_72] : memref<2x32xf32, #tpu.memory_space<vmem>>, vector<2x32xf32>
      tpu.vector_store %arg13[%c0_71, %c0_72], %129 {strides = array<i32>} : memref<2x32xf32, #tpu.memory_space<vmem>>, vector<2x32xf32>,
      %cst_73 = arith.constant 0.000000e+00 : f32
      %131 = vector.broadcast %cst_73 : f32 to vector<2x32xf32>
      %c0_74 = arith.constant 0 : index
      %c0_75 = arith.constant 0 : index
      %132 = vector.load %arg14[%c0_74, %c0_75] : memref<2x32xf32, #tpu.memory_space<vmem>>, vector<2x32xf32>
      tpu.vector_store %arg14[%c0_74, %c0_75], %131 {strides = array<i32>} : memref<2x32xf32, #tpu.memory_space<vmem>>, vector<2x32xf32>,
    } else {
    }
    %c0 = arith.constant 0 : index
    %c0_1 = arith.constant 0 : index
    %c0_2 = arith.constant 0 : index
    %3 = vector.load %arg1[%c0, %c0_1, %c0_2] : memref<1x2x256xbf16, #tpu.memory_space<vmem>>, vector<1x2x128xbf16>
    %4 = vector.shape_cast %3 : vector<1x2x128xbf16> to vector<2x128xbf16>
    %c0_3 = arith.constant 0 : index
    %c0_4 = arith.constant 0 : index
    %c0_5 = arith.constant 0 : index
    %5 = vector.load %arg3[%c0_3, %c0_4, %c0_5] : memref<1x2x1xf32, #tpu.memory_space<vmem>>, vector<1x2x1xf32>
    %6 = vector.shape_cast %5 : vector<1x2x1xf32> to vector<2x1xf32>
    %7 = arith.extf %4 : vector<2x128xbf16> to vector<2x128xf32>
    %c0_6 = arith.constant 0 : index
    %c0_7 = arith.constant 0 : index
    %8 = vector.load %arg11[%c0_6, %c0_7] : memref<2x32xf32, #tpu.memory_space<vmem>>, vector<2x32xf32>
    %9 = arith.truncf %8 : vector<2x32xf32> to vector<2x32xbf16>
    %c0_8 = arith.constant 0 : index
    %c0_9 = arith.constant 0 : index
    %10 = vector.load %arg5[%c0_8, %c0_9] : memref<32x128xbf16, #tpu.memory_space<vmem>>, vector<32x128xbf16>
    %cst = arith.constant dense<0.000000e+00> : vector<2x128xf32>
    %11 = tpu.matmul %9, %10, %cst {dimension_numbers = #tpu.dot_dimension_numbers<[1], [0], [0], [1], [0, 0, 1, 1], [], []>} : vector<2x32xbf16>, vector<32x128xbf16>, vector<2x128xf32> -> vector<2x128xf32>
    %12 = arith.addf %7, %11 : vector<2x128xf32>
    %13 = vector.extract_strided_slice %12 {offsets = [0, 0], sizes = [2, 32], strides = [1, 1]} : vector<2x128xf32> to vector<2x32xf32>
    %14 = arith.negf %13 : vector<2x32xf32>
    %15 = math.exp %14 : vector<2x32xf32>
    %cst_10 = arith.constant 1.000000e+00 : f32
    %16 = vector.broadcast %cst_10 : f32 to vector<2x32xf32>
    %17 = arith.addf %16, %15 : vector<2x32xf32>
    %18 = arith.divf %16, %17 : vector<2x32xf32>
    %19 = vector.extract_strided_slice %12 {offsets = [0, 32], sizes = [2, 32], strides = [1, 1]} : vector<2x128xf32> to vector<2x32xf32>
    %20 = arith.negf %19 : vector<2x32xf32>
    %21 = math.exp %20 : vector<2x32xf32>
    %cst_11 = arith.constant 1.000000e+00 : f32
    %22 = vector.broadcast %cst_11 : f32 to vector<2x32xf32>
    %23 = arith.addf %22, %21 : vector<2x32xf32>
    %24 = arith.divf %22, %23 : vector<2x32xf32>
    %25 = vector.extract_strided_slice %12 {offsets = [0, 64], sizes = [2, 32], strides = [1, 1]} : vector<2x128xf32> to vector<2x32xf32>
    %26 = math.tanh %25 : vector<2x32xf32>
    %27 = vector.extract_strided_slice %12 {offsets = [0, 96], sizes = [2, 32], strides = [1, 1]} : vector<2x128xf32> to vector<2x32xf32>
    %28 = arith.negf %27 : vector<2x32xf32>
    %29 = math.exp %28 : vector<2x32xf32>
    %cst_12 = arith.constant 1.000000e+00 : f32
    %30 = vector.broadcast %cst_12 : f32 to vector<2x32xf32>
    %31 = arith.addf %30, %29 : vector<2x32xf32>
    %32 = arith.divf %30, %31 : vector<2x32xf32>
    %c0_13 = arith.constant 0 : index
    %c0_14 = arith.constant 0 : index
    %33 = vector.load %arg12[%c0_13, %c0_14] : memref<2x32xf32, #tpu.memory_space<vmem>>, vector<2x32xf32>
    %34 = arith.mulf %24, %33 : vector<2x32xf32>
    %35 = arith.mulf %18, %26 : vector<2x32xf32>
    %36 = arith.addf %34, %35 : vector<2x32xf32>
    %37 = math.tanh %36 : vector<2x32xf32>
    %38 = arith.mulf %32, %37 : vector<2x32xf32>
    %39 = vector.broadcast %6 : vector<2x1xf32> to vector<2x32xf32>
    %40 = arith.mulf %39, %38 : vector<2x32xf32>
    %cst_15 = arith.constant 1.000000e+00 : f32
    %41 = vector.broadcast %cst_15 : f32 to vector<2x1xf32>
    %42 = arith.subf %41, %6 : vector<2x1xf32>
    %c0_16 = arith.constant 0 : index
    %c0_17 = arith.constant 0 : index
    %43 = vector.load %arg11[%c0_16, %c0_17] : memref<2x32xf32, #tpu.memory_space<vmem>>, vector<2x32xf32>
    %44 = vector.broadcast %42 : vector<2x1xf32> to vector<2x32xf32>
    %45 = arith.mulf %44, %43 : vector<2x32xf32>
    %46 = arith.addf %40, %45 : vector<2x32xf32>
    %47 = vector.broadcast %6 : vector<2x1xf32> to vector<2x32xf32>
    %48 = arith.mulf %47, %36 : vector<2x32xf32>
    %cst_18 = arith.constant 1.000000e+00 : f32
    %49 = vector.broadcast %cst_18 : f32 to vector<2x1xf32>
    %50 = arith.subf %49, %6 : vector<2x1xf32>
    %c0_19 = arith.constant 0 : index
    %c0_20 = arith.constant 0 : index
    %51 = vector.load %arg12[%c0_19, %c0_20] : memref<2x32xf32, #tpu.memory_space<vmem>>, vector<2x32xf32>
    %52 = vector.broadcast %50 : vector<2x1xf32> to vector<2x32xf32>
    %53 = arith.mulf %52, %51 : vector<2x32xf32>
    %54 = arith.addf %48, %53 : vector<2x32xf32>
    %c0_21 = arith.constant 0 : index
    %c0_22 = arith.constant 0 : index
    %55 = vector.load %arg12[%c0_21, %c0_22] : memref<2x32xf32, #tpu.memory_space<vmem>>, vector<2x32xf32>
    tpu.vector_store %arg12[%c0_21, %c0_22], %54 {strides = array<i32>} : memref<2x32xf32, #tpu.memory_space<vmem>>, vector<2x32xf32>,
    %c0_23 = arith.constant 0 : index
    %c0_24 = arith.constant 0 : index
    %56 = vector.load %arg11[%c0_23, %c0_24] : memref<2x32xf32, #tpu.memory_space<vmem>>, vector<2x32xf32>
    tpu.vector_store %arg11[%c0_23, %c0_24], %46 {strides = array<i32>} : memref<2x32xf32, #tpu.memory_space<vmem>>, vector<2x32xf32>,
    %57 = vector.broadcast %6 : vector<2x1xf32> to vector<2x32xf32>
    %58 = arith.mulf %46, %57 : vector<2x32xf32>
    %c0_25 = arith.constant 0 : index
    %c0_26 = arith.constant 0 : index
    %c0_27 = arith.constant 0 : index
    %59 = vector.load %arg7[%c0_25, %c0_26, %c0_27] : memref<1x2x32xf32, #tpu.memory_space<vmem>>, vector<1x2x32xf32>
    %60 = vector.shape_cast %59 : vector<1x2x32xf32> to vector<2x32xf32>
    %61 = vector.shape_cast %58 : vector<2x32xf32> to vector<1x2x32xf32>
    tpu.vector_store %arg7[%c0_25, %c0_26, %c0_27], %61 {strides = array<i32>} : memref<1x2x32xf32, #tpu.memory_space<vmem>>, vector<1x2x32xf32>,
    %c0_28 = arith.constant 0 : index
    %c0_29 = arith.constant 0 : index
    %c128 = arith.constant 128 : index
    %62 = vector.load %arg2[%c0_28, %c0_29, %c128] : memref<1x2x256xbf16, #tpu.memory_space<vmem>>, vector<1x2x128xbf16>
    %63 = vector.shape_cast %62 : vector<1x2x128xbf16> to vector<2x128xbf16>
    %c0_30 = arith.constant 0 : index
    %c0_31 = arith.constant 0 : index
    %c0_32 = arith.constant 0 : index
    %64 = vector.load %arg4[%c0_30, %c0_31, %c0_32] : memref<1x2x1xf32, #tpu.memory_space<vmem>>, vector<1x2x1xf32>
    %65 = vector.shape_cast %64 : vector<1x2x1xf32> to vector<2x1xf32>
    %66 = arith.extf %63 : vector<2x128xbf16> to vector<2x128xf32>
    %c0_33 = arith.constant 0 : index
    %c0_34 = arith.constant 0 : index
    %67 = vector.load %arg13[%c0_33, %c0_34] : memref<2x32xf32, #tpu.memory_space<vmem>>, vector<2x32xf32>
    %68 = arith.truncf %67 : vector<2x32xf32> to vector<2x32xbf16>
    %c0_35 = arith.constant 0 : index
    %c0_36 = arith.constant 0 : index
    %69 = vector.load %arg6[%c0_35, %c0_36] : memref<32x128xbf16, #tpu.memory_space<vmem>>, vector<32x128xbf16>
    %cst_37 = arith.constant dense<0.000000e+00> : vector<2x128xf32>
    %70 = tpu.matmul %68, %69, %cst_37 {dimension_numbers = #tpu.dot_dimension_numbers<[1], [0], [0], [1], [0, 0, 1, 1], [], []>} : vector<2x32xbf16>, vector<32x128xbf16>, vector<2x128xf32> -> vector<2x128xf32>
    %71 = arith.addf %66, %70 : vector<2x128xf32>
    %72 = vector.extract_strided_slice %71 {offsets = [0, 0], sizes = [2, 32], strides = [1, 1]} : vector<2x128xf32> to vector<2x32xf32>
    %73 = arith.negf %72 : vector<2x32xf32>
    %74 = math.exp %73 : vector<2x32xf32>
    %cst_38 = arith.constant 1.000000e+00 : f32
    %75 = vector.broadcast %cst_38 : f32 to vector<2x32xf32>
    %76 = arith.addf %75, %74 : vector<2x32xf32>
    %77 = arith.divf %75, %76 : vector<2x32xf32>
    %78 = vector.extract_strided_slice %71 {offsets = [0, 32], sizes = [2, 32], strides = [1, 1]} : vector<2x128xf32> to vector<2x32xf32>
    %79 = arith.negf %78 : vector<2x32xf32>
    %80 = math.exp %79 : vector<2x32xf32>
    %cst_39 = arith.constant 1.000000e+00 : f32
    %81 = vector.broadcast %cst_39 : f32 to vector<2x32xf32>
    %82 = arith.addf %81, %80 : vector<2x32xf32>
    %83 = arith.divf %81, %82 : vector<2x32xf32>
    %84 = vector.extract_strided_slice %71 {offsets = [0, 64], sizes = [2, 32], strides = [1, 1]} : vector<2x128xf32> to vector<2x32xf32>
    %85 = math.tanh %84 : vector<2x32xf32>
    %86 = vector.extract_strided_slice %71 {offsets = [0, 96], sizes = [2, 32], strides = [1, 1]} : vector<2x128xf32> to vector<2x32xf32>
    %87 = arith.negf %86 : vector<2x32xf32>
    %88 = math.exp %87 : vector<2x32xf32>
    %cst_40 = arith.constant 1.000000e+00 : f32
    %89 = vector.broadcast %cst_40 : f32 to vector<2x32xf32>
    %90 = arith.addf %89, %88 : vector<2x32xf32>
    %91 = arith.divf %89, %90 : vector<2x32xf32>
    %c0_41 = arith.constant 0 : index
    %c0_42 = arith.constant 0 : index
    %92 = vector.load %arg14[%c0_41, %c0_42] : memref<2x32xf32, #tpu.memory_space<vmem>>, vector<2x32xf32>
    %93 = arith.mulf %83, %92 : vector<2x32xf32>
    %94 = arith.mulf %77, %85 : vector<2x32xf32>
    %95 = arith.addf %93, %94 : vector<2x32xf32>
    %96 = math.tanh %95 : vector<2x32xf32>
    %97 = arith.mulf %91, %96 : vector<2x32xf32>
    %98 = vector.broadcast %65 : vector<2x1xf32> to vector<2x32xf32>
    %99 = arith.mulf %98, %97 : vector<2x32xf32>
    %cst_43 = arith.constant 1.000000e+00 : f32
    %100 = vector.broadcast %cst_43 : f32 to vector<2x1xf32>
    %101 = arith.subf %100, %65 : vector<2x1xf32>
    %c0_44 = arith.constant 0 : index
    %c0_45 = arith.constant 0 : index
    %102 = vector.load %arg13[%c0_44, %c0_45] : memref<2x32xf32, #tpu.memory_space<vmem>>, vector<2x32xf32>
    %103 = vector.broadcast %101 : vector<2x1xf32> to vector<2x32xf32>
    %104 = arith.mulf %103, %102 : vector<2x32xf32>
    %105 = arith.addf %99, %104 : vector<2x32xf32>
    %106 = vector.broadcast %65 : vector<2x1xf32> to vector<2x32xf32>
    %107 = arith.mulf %106, %95 : vector<2x32xf32>
    %cst_46 = arith.constant 1.000000e+00 : f32
    %108 = vector.broadcast %cst_46 : f32 to vector<2x1xf32>
    %109 = arith.subf %108, %65 : vector<2x1xf32>
    %c0_47 = arith.constant 0 : index
    %c0_48 = arith.constant 0 : index
    %110 = vector.load %arg14[%c0_47, %c0_48] : memref<2x32xf32, #tpu.memory_space<vmem>>, vector<2x32xf32>
    %111 = vector.broadcast %109 : vector<2x1xf32> to vector<2x32xf32>
    %112 = arith.mulf %111, %110 : vector<2x32xf32>
    %113 = arith.addf %107, %112 : vector<2x32xf32>
    %c0_49 = arith.constant 0 : index
    %c0_50 = arith.constant 0 : index
    %114 = vector.load %arg14[%c0_49, %c0_50] : memref<2x32xf32, #tpu.memory_space<vmem>>, vector<2x32xf32>
    tpu.vector_store %arg14[%c0_49, %c0_50], %113 {strides = array<i32>} : memref<2x32xf32, #tpu.memory_space<vmem>>, vector<2x32xf32>,
    %c0_51 = arith.constant 0 : index
    %c0_52 = arith.constant 0 : index
    %115 = vector.load %arg13[%c0_51, %c0_52] : memref<2x32xf32, #tpu.memory_space<vmem>>, vector<2x32xf32>
    tpu.vector_store %arg13[%c0_51, %c0_52], %105 {strides = array<i32>} : memref<2x32xf32, #tpu.memory_space<vmem>>, vector<2x32xf32>,
    %116 = vector.broadcast %65 : vector<2x1xf32> to vector<2x32xf32>
    %117 = arith.mulf %105, %116 : vector<2x32xf32>
    %c0_53 = arith.constant 0 : index
    %c0_54 = arith.constant 0 : index
    %c0_55 = arith.constant 0 : index
    %118 = vector.load %arg8[%c0_53, %c0_54, %c0_55] : memref<1x2x32xf32, #tpu.memory_space<vmem>>, vector<1x2x32xf32>
    %119 = vector.shape_cast %118 : vector<1x2x32xf32> to vector<2x32xf32>
    %120 = vector.shape_cast %117 : vector<2x32xf32> to vector<1x2x32xf32>
    tpu.vector_store %arg8[%c0_53, %c0_54, %c0_55], %120 {strides = array<i32>} : memref<1x2x32xf32, #tpu.memory_space<vmem>>, vector<1x2x32xf32>,
    %c0_56 = arith.constant 0 : index
    %c0_57 = arith.constant 0 : index
    %121 = vector.load %arg11[%c0_56, %c0_57] : memref<2x32xf32, #tpu.memory_space<vmem>>, vector<2x32xf32>
    %c0_58 = arith.constant 0 : index
    %c0_59 = arith.constant 0 : index
    %122 = vector.load %arg9[%c0_58, %c0_59] : memref<2x32xf32, #tpu.memory_space<vmem>>, vector<2x32xf32>
    tpu.vector_store %arg9[%c0_58, %c0_59], %121 {strides = array<i32>} : memref<2x32xf32, #tpu.memory_space<vmem>>, vector<2x32xf32>,
    %c0_60 = arith.constant 0 : index
    %c0_61 = arith.constant 0 : index
    %123 = vector.load %arg13[%c0_60, %c0_61] : memref<2x32xf32, #tpu.memory_space<vmem>>, vector<2x32xf32>
    %c0_62 = arith.constant 0 : index
    %c0_63 = arith.constant 0 : index
    %124 = vector.load %arg10[%c0_62, %c0_63] : memref<2x32xf32, #tpu.memory_space<vmem>>, vector<2x32xf32>
    tpu.vector_store %arg10[%c0_62, %c0_63], %123 {strides = array<i32>} : memref<2x32xf32, #tpu.memory_space<vmem>>, vector<2x32xf32>,
    return
  }
  func.func @transform_0(%arg0: i32) -> (i32, i32, i32) {
    %c0_i32 = arith.constant 0 : i32
    %c0_i32_0 = arith.constant 0 : i32
    %c0_i32_1 = arith.constant 0 : i32
    return %arg0, %c0_i32, %c0_i32_0 : i32, i32, i32
  }
  func.func @transform_1(%arg0: i32) -> (i32, i32, i32) {
    %c7_i32 = arith.constant 7 : i32
    %0 = arith.subi %c7_i32, %arg0 : i32
    %c0_i32 = arith.constant 0 : i32
    %c0_i32_0 = arith.constant 0 : i32
    %c0_i32_1 = arith.constant 0 : i32
    return %0, %c0_i32, %c0_i32_0 : i32, i32, i32
  }
  func.func @transform_2(%arg0: i32) -> (i32, i32, i32) {
    %c0_i32 = arith.constant 0 : i32
    %c0_i32_0 = arith.constant 0 : i32
    %c0_i32_1 = arith.constant 0 : i32
    return %arg0, %c0_i32, %c0_i32_0 : i32, i32, i32
  }
  func.func @transform_3(%arg0: i32) -> (i32, i32, i32) {
    %c7_i32 = arith.constant 7 : i32
    %0 = arith.subi %c7_i32, %arg0 : i32
    %c0_i32 = arith.constant 0 : i32
    %c0_i32_0 = arith.constant 0 : i32
    %c0_i32_1 = arith.constant 0 : i32
    return %0, %c0_i32, %c0_i32_0 : i32, i32, i32
  }
  func.func @transform_4(%arg0: i32) -> (i32, i32) {
    %c0_i32 = arith.constant 0 : i32
    %c0_i32_0 = arith.constant 0 : i32
    %c0_i32_1 = arith.constant 0 : i32
    return %c0_i32, %c0_i32_0 : i32, i32
  }
  func.func @transform_5(%arg0: i32) -> (i32, i32) {
    %c0_i32 = arith.constant 0 : i32
    %c0_i32_0 = arith.constant 0 : i32
    %c0_i32_1 = arith.constant 0 : i32
    return %c0_i32, %c0_i32_0 : i32, i32
  }
  func.func @transform_6(%arg0: i32) -> (i32, i32, i32) {
    %c0_i32 = arith.constant 0 : i32
    %c0_i32_0 = arith.constant 0 : i32
    %c0_i32_1 = arith.constant 0 : i32
    return %arg0, %c0_i32, %c0_i32_0 : i32, i32, i32
  }
  func.func @transform_7(%arg0: i32) -> (i32, i32, i32) {
    %c7_i32 = arith.constant 7 : i32
    %0 = arith.subi %c7_i32, %arg0 : i32
    %c0_i32 = arith.constant 0 : i32
    %c0_i32_0 = arith.constant 0 : i32
    %c0_i32_1 = arith.constant 0 : i32
    return %0, %c0_i32, %c0_i32_0 : i32, i32, i32
  }
  func.func @transform_8(%arg0: i32) -> (i32, i32) {
    %c0_i32 = arith.constant 0 : i32
    %c0_i32_0 = arith.constant 0 : i32
    %c0_i32_1 = arith.constant 0 : i32
    return %c0_i32, %c0_i32_0 : i32, i32
  }
  func.func @transform_9(%arg0: i32) -> (i32, i32) {
    %c0_i32 = arith.constant 0 : i32
    %c0_i32_0 = arith.constant 0 : i32
    %c0_i32_1 = arith.constant 0 : i32
    return %c0_i32, %c0_i32_0 : i32, i32
  }
}

module attributes {stable_mosaic.version = 11 : i64} {
  func.func @_linear_kernel(%arg0: i32, %arg1: memref<16x64xf32, #tpu.memory_space<vmem>>, %arg2: memref<64x96xbf16, #tpu.memory_space<vmem>>, %arg3: memref<1x96xf32, #tpu.memory_space<vmem>>, %arg4: memref<16x96xbf16, #tpu.memory_space<vmem>>) attributes {dimension_semantics = [#tpu.dimension_semantics<parallel>], iteration_bounds = array<i64: 1>, scalar_prefetch = 0 : i64, scratch_operands = 0 : i64, tpu.core_type = #tpu.core_type<tc>, window_params = [{transform_indices = @transform_0, window_bounds = array<i64: 16, 64>}, {pipeline_mode = #tpu.pipeline_mode<synchronous>, transform_indices = @transform_1, window_bounds = array<i64: 64, 96>}, {pipeline_mode = #tpu.pipeline_mode<synchronous>, transform_indices = @transform_2, window_bounds = array<i64: 1, 96>}, {transform_indices = @transform_3, window_bounds = array<i64: 16, 96>}]} {
    %c0 = arith.constant 0 : index
    %c0_0 = arith.constant 0 : index
    %0 = vector.load %arg1[%c0, %c0_0] : memref<16x64xf32, #tpu.memory_space<vmem>>, vector<16x64xf32>
    %1 = arith.truncf %0 : vector<16x64xf32> to vector<16x64xbf16>
    %c0_1 = arith.constant 0 : index
    %c0_2 = arith.constant 0 : index
    %2 = vector.load %arg2[%c0_1, %c0_2] : memref<64x96xbf16, #tpu.memory_space<vmem>>, vector<64x96xbf16>
    %cst = arith.constant dense<0.000000e+00> : vector<16x96xf32>
    %3 = tpu.matmul %1, %2, %cst {dimension_numbers = #tpu.dot_dimension_numbers<[1], [0], [0], [1], [0, 0, 1, 1], [], []>} : vector<16x64xbf16>, vector<64x96xbf16>, vector<16x96xf32> -> vector<16x96xf32>
    %c0_3 = arith.constant 0 : index
    %c0_4 = arith.constant 0 : index
    %4 = vector.load %arg3[%c0_3, %c0_4] : memref<1x96xf32, #tpu.memory_space<vmem>>, vector<1x96xf32>
    %5 = vector.broadcast %4 : vector<1x96xf32> to vector<16x96xf32>
    %6 = arith.addf %3, %5 : vector<16x96xf32>
    %cst_5 = arith.constant 0.000000e+00 : f32
    %7 = vector.broadcast %cst_5 : f32 to vector<16x96xf32>
    %8 = arith.cmpf ogt, %6, %7 : vector<16x96xf32>
    %cst_6 = arith.constant 1.000000e-01 : f32
    %9 = vector.broadcast %cst_6 : f32 to vector<16x96xf32>
    %10 = arith.mulf %9, %6 : vector<16x96xf32>
    %11 = arith.select %8, %6, %10 : vector<16x96xi1>, vector<16x96xf32>
    %12 = arith.truncf %11 : vector<16x96xf32> to vector<16x96xbf16>
    %c0_7 = arith.constant 0 : index
    %c0_8 = arith.constant 0 : index
    %13 = vector.load %arg4[%c0_7, %c0_8] : memref<16x96xbf16, #tpu.memory_space<vmem>>, vector<16x96xbf16>
    tpu.vector_store %arg4[%c0_7, %c0_8], %12 {strides = array<i32>} : memref<16x96xbf16, #tpu.memory_space<vmem>>, vector<16x96xbf16>,
    return
  }
  func.func @transform_0(%arg0: i32) -> (i32, i32) {
    %c0_i32 = arith.constant 0 : i32
    %c0_i32_0 = arith.constant 0 : i32
    return %arg0, %c0_i32 : i32, i32
  }
  func.func @transform_1(%arg0: i32) -> (i32, i32) {
    %c0_i32 = arith.constant 0 : i32
    %c0_i32_0 = arith.constant 0 : i32
    %c0_i32_1 = arith.constant 0 : i32
    return %c0_i32, %c0_i32_0 : i32, i32
  }
  func.func @transform_2(%arg0: i32) -> (i32, i32) {
    %c0_i32 = arith.constant 0 : i32
    %c0_i32_0 = arith.constant 0 : i32
    %c0_i32_1 = arith.constant 0 : i32
    return %c0_i32, %c0_i32_0 : i32, i32
  }
  func.func @transform_3(%arg0: i32) -> (i32, i32) {
    %c0_i32 = arith.constant 0 : i32
    %c0_i32_0 = arith.constant 0 : i32
    return %arg0, %c0_i32 : i32, i32
  }
}

module attributes {stable_mosaic.version = 11 : i64} {
  func.func @_rel_attn_kernel(%arg0: i32, %arg1: memref<1x8x68xbf16, #tpu.memory_space<vmem>>, %arg2: memref<1x8x16xbf16, #tpu.memory_space<vmem>>, %arg3: memref<1x4x8x8xf32, #tpu.memory_space<vmem>>) attributes {dimension_semantics = [#tpu.dimension_semantics<parallel>], iteration_bounds = array<i64: 2>, scalar_prefetch = 0 : i64, scratch_operands = 0 : i64, tpu.core_type = #tpu.core_type<tc>, window_params = [{transform_indices = @transform_0, window_bounds = array<i64: 1, 8, 68>}, {transform_indices = @transform_1, window_bounds = array<i64: 1, 8, 16>}, {transform_indices = @transform_2, window_bounds = array<i64: 1, 4, 8, 8>}]} {
    %c0 = arith.constant 0 : index
    %c0_0 = arith.constant 0 : index
    %c0_1 = arith.constant 0 : index
    %0 = vector.load %arg2[%c0, %c0_0, %c0_1] : memref<1x8x16xbf16, #tpu.memory_space<vmem>>, vector<1x8x16xbf16>
    %1 = vector.shape_cast %0 : vector<1x8x16xbf16> to vector<8x16xbf16>
    %c0_2 = arith.constant 0 : index
    %c0_3 = arith.constant 0 : index
    %c0_4 = arith.constant 0 : index
    %2 = vector.load %arg1[%c0_2, %c0_3, %c0_4] : memref<1x8x68xbf16, #tpu.memory_space<vmem>>, vector<1x8x16xbf16>
    %3 = vector.shape_cast %2 : vector<1x8x16xbf16> to vector<8x16xbf16>
    %cst = arith.constant dense<0.000000e+00> : vector<8x8xf32>
    %4 = tpu.matmul %3, %1, %cst {dimension_numbers = #tpu.dot_dimension_numbers<[1], [1], [0], [0], [0, 0, 1, 0], [], []>} : vector<8x16xbf16>, vector<8x16xbf16>, vector<8x8xf32> -> vector<8x8xf32>
    %c0_5 = arith.constant 0 : index
    %c0_6 = arith.constant 0 : index
    %c64 = arith.constant 64 : index
    %5 = vector.load %arg1[%c0_5, %c0_6, %c64] : memref<1x8x68xbf16, #tpu.memory_space<vmem>>, vector<1x8x1xbf16>
    %6 = vector.shape_cast %5 : vector<1x8x1xbf16> to vector<8x1xbf16>
    %7 = arith.extf %6 : vector<8x1xbf16> to vector<8x1xf32>
    %8 = vector.broadcast %7 : vector<8x1xf32> to vector<8x8xf32>
    %9 = arith.addf %4, %8 : vector<8x8xf32>
    %c0_7 = arith.constant 0 : index
    %c0_8 = arith.constant 0 : index
    %c0_9 = arith.constant 0 : index
    %c0_10 = arith.constant 0 : index
    %10 = vector.load %arg3[%c0_7, %c0_8, %c0_9, %c0_10] : memref<1x4x8x8xf32, #tpu.memory_space<vmem>>, vector<1x1x8x8xf32>
    %11 = vector.shape_cast %10 : vector<1x1x8x8xf32> to vector<8x8xf32>
    %12 = vector.shape_cast %9 : vector<8x8xf32> to vector<1x1x8x8xf32>
    tpu.vector_store %arg3[%c0_7, %c0_8, %c0_9, %c0_10], %12 {strides = array<i32>} : memref<1x4x8x8xf32, #tpu.memory_space<vmem>>, vector<1x1x8x8xf32>,
    %c0_11 = arith.constant 0 : index
    %c0_12 = arith.constant 0 : index
    %c16 = arith.constant 16 : index
    %13 = vector.load %arg1[%c0_11, %c0_12, %c16] : memref<1x8x68xbf16, #tpu.memory_space<vmem>>, vector<1x8x16xbf16>
    %14 = vector.shape_cast %13 : vector<1x8x16xbf16> to vector<8x16xbf16>
    %cst_13 = arith.constant dense<0.000000e+00> : vector<8x8xf32>
    %15 = tpu.matmul %14, %1, %cst_13 {dimension_numbers = #tpu.dot_dimension_numbers<[1], [1], [0], [0], [0, 0, 1, 0], [], []>} : vector<8x16xbf16>, vector<8x16xbf16>, vector<8x8xf32> -> vector<8x8xf32>
    %c0_14 = arith.constant 0 : index
    %c0_15 = arith.constant 0 : index
    %c65 = arith.constant 65 : index
    %16 = vector.load %arg1[%c0_14, %c0_15, %c65] : memref<1x8x68xbf16, #tpu.memory_space<vmem>>, vector<1x8x1xbf16>
    %17 = vector.shape_cast %16 : vector<1x8x1xbf16> to vector<8x1xbf16>
    %18 = arith.extf %17 : vector<8x1xbf16> to vector<8x1xf32>
    %19 = vector.broadcast %18 : vector<8x1xf32> to vector<8x8xf32>
    %20 = arith.addf %15, %19 : vector<8x8xf32>
    %c0_16 = arith.constant 0 : index
    %c1 = arith.constant 1 : index
    %c0_17 = arith.constant 0 : index
    %c0_18 = arith.constant 0 : index
    %21 = vector.load %arg3[%c0_16, %c1, %c0_17, %c0_18] : memref<1x4x8x8xf32, #tpu.memory_space<vmem>>, vector<1x1x8x8xf32>
    %22 = vector.shape_cast %21 : vector<1x1x8x8xf32> to vector<8x8xf32>
    %23 = vector.shape_cast %20 : vector<8x8xf32> to vector<1x1x8x8xf32>
    tpu.vector_store %arg3[%c0_16, %c1, %c0_17, %c0_18], %23 {strides = array<i32>} : memref<1x4x8x8xf32, #tpu.memory_space<vmem>>, vector<1x1x8x8xf32>,
    %c0_19 = arith.constant 0 : index
    %c0_20 = arith.constant 0 : index
    %c32 = arith.constant 32 : index
    %24 = vector.load %arg1[%c0_19, %c0_20, %c32] : memref<1x8x68xbf16, #tpu.memory_space<vmem>>, vector<1x8x16xbf16>
    %25 = vector.shape_cast %24 : vector<1x8x16xbf16> to vector<8x16xbf16>
    %cst_21 = arith.constant dense<0.000000e+00> : vector<8x8xf32>
    %26 = tpu.matmul %25, %1, %cst_21 {dimension_numbers = #tpu.dot_dimension_numbers<[1], [1], [0], [0], [0, 0, 1, 0], [], []>} : vector<8x16xbf16>, vector<8x16xbf16>, vector<8x8xf32> -> vector<8x8xf32>
    %c0_22 = arith.constant 0 : index
    %c0_23 = arith.constant 0 : index
    %c66 = arith.constant 66 : index
    %27 = vector.load %arg1[%c0_22, %c0_23, %c66] : memref<1x8x68xbf16, #tpu.memory_space<vmem>>, vector<1x8x1xbf16>
    %28 = vector.shape_cast %27 : vector<1x8x1xbf16> to vector<8x1xbf16>
    %29 = arith.extf %28 : vector<8x1xbf16> to vector<8x1xf32>
    %30 = vector.broadcast %29 : vector<8x1xf32> to vector<8x8xf32>
    %31 = arith.addf %26, %30 : vector<8x8xf32>
    %c0_24 = arith.constant 0 : index
    %c2 = arith.constant 2 : index
    %c0_25 = arith.constant 0 : index
    %c0_26 = arith.constant 0 : index
    %32 = vector.load %arg3[%c0_24, %c2, %c0_25, %c0_26] : memref<1x4x8x8xf32, #tpu.memory_space<vmem>>, vector<1x1x8x8xf32>
    %33 = vector.shape_cast %32 : vector<1x1x8x8xf32> to vector<8x8xf32>
    %34 = vector.shape_cast %31 : vector<8x8xf32> to vector<1x1x8x8xf32>
    tpu.vector_store %arg3[%c0_24, %c2, %c0_25, %c0_26], %34 {strides = array<i32>} : memref<1x4x8x8xf32, #tpu.memory_space<vmem>>, vector<1x1x8x8xf32>,
    %c0_27 = arith.constant 0 : index
    %c0_28 = arith.constant 0 : index
    %c48 = arith.constant 48 : index
    %35 = vector.load %arg1[%c0_27, %c0_28, %c48] : memref<1x8x68xbf16, #tpu.memory_space<vmem>>, vector<1x8x16xbf16>
    %36 = vector.shape_cast %35 : vector<1x8x16xbf16> to vector<8x16xbf16>
    %cst_29 = arith.constant dense<0.000000e+00> : vector<8x8xf32>
    %37 = tpu.matmul %36, %1, %cst_29 {dimension_numbers = #tpu.dot_dimension_numbers<[1], [1], [0], [0], [0, 0, 1, 0], [], []>} : vector<8x16xbf16>, vector<8x16xbf16>, vector<8x8xf32> -> vector<8x8xf32>
    %c0_30 = arith.constant 0 : index
    %c0_31 = arith.constant 0 : index
    %c67 = arith.constant 67 : index
    %38 = vector.load %arg1[%c0_30, %c0_31, %c67] : memref<1x8x68xbf16, #tpu.memory_space<vmem>>, vector<1x8x1xbf16>
    %39 = vector.shape_cast %38 : vector<1x8x1xbf16> to vector<8x1xbf16>
    %40 = arith.extf %39 : vector<8x1xbf16> to vector<8x1xf32>
    %41 = vector.broadcast %40 : vector<8x1xf32> to vector<8x8xf32>
    %42 = arith.addf %37, %41 : vector<8x8xf32>
    %c0_32 = arith.constant 0 : index
    %c3 = arith.constant 3 : index
    %c0_33 = arith.constant 0 : index
    %c0_34 = arith.constant 0 : index
    %43 = vector.load %arg3[%c0_32, %c3, %c0_33, %c0_34] : memref<1x4x8x8xf32, #tpu.memory_space<vmem>>, vector<1x1x8x8xf32>
    %44 = vector.shape_cast %43 : vector<1x1x8x8xf32> to vector<8x8xf32>
    %45 = vector.shape_cast %42 : vector<8x8xf32> to vector<1x1x8x8xf32>
    tpu.vector_store %arg3[%c0_32, %c3, %c0_33, %c0_34], %45 {strides = array<i32>} : memref<1x4x8x8xf32, #tpu.memory_space<vmem>>, vector<1x1x8x8xf32>,
    return
  }
  func.func @transform_0(%arg0: i32) -> (i32, i32, i32) {
    %c0_i32 = arith.constant 0 : i32
    %c0_i32_0 = arith.constant 0 : i32
    %c0_i32_1 = arith.constant 0 : i32
    return %arg0, %c0_i32, %c0_i32_0 : i32, i32, i32
  }
  func.func @transform_1(%arg0: i32) -> (i32, i32, i32) {
    %c0_i32 = arith.constant 0 : i32
    %c0_i32_0 = arith.constant 0 : i32
    %c0_i32_1 = arith.constant 0 : i32
    return %arg0, %c0_i32, %c0_i32_0 : i32, i32, i32
  }
  func.func @transform_2(%arg0: i32) -> (i32, i32, i32, i32) {
    %c0_i32 = arith.constant 0 : i32
    %c0_i32_0 = arith.constant 0 : i32
    %c0_i32_1 = arith.constant 0 : i32
    %c0_i32_2 = arith.constant 0 : i32
    return %arg0, %c0_i32, %c0_i32_0, %c0_i32_1 : i32, i32, i32, i32
  }
}

module attributes {stable_mosaic.version = 11 : i64} {
  func.func @_linear_kernel(%arg0: i32, %arg1: memref<16x16xbf16, #tpu.memory_space<vmem>>, %arg2: memref<16x68xbf16, #tpu.memory_space<vmem>>, %arg3: memref<1x68xf32, #tpu.memory_space<vmem>>, %arg4: memref<16x68xbf16, #tpu.memory_space<vmem>>) attributes {dimension_semantics = [#tpu.dimension_semantics<parallel>], iteration_bounds = array<i64: 1>, scalar_prefetch = 0 : i64, scratch_operands = 0 : i64, tpu.core_type = #tpu.core_type<tc>, window_params = [{transform_indices = @transform_0, window_bounds = array<i64: 16, 16>}, {pipeline_mode = #tpu.pipeline_mode<synchronous>, transform_indices = @transform_1, window_bounds = array<i64: 16, 68>}, {pipeline_mode = #tpu.pipeline_mode<synchronous>, transform_indices = @transform_2, window_bounds = array<i64: 1, 68>}, {transform_indices = @transform_3, window_bounds = array<i64: 16, 68>}]} {
    %c0 = arith.constant 0 : index
    %c0_0 = arith.constant 0 : index
    %0 = vector.load %arg1[%c0, %c0_0] : memref<16x16xbf16, #tpu.memory_space<vmem>>, vector<16x16xbf16>
    %c0_1 = arith.constant 0 : index
    %c0_2 = arith.constant 0 : index
    %1 = vector.load %arg2[%c0_1, %c0_2] : memref<16x68xbf16, #tpu.memory_space<vmem>>, vector<16x68xbf16>
    %cst = arith.constant dense<0.000000e+00> : vector<16x68xf32>
    %2 = tpu.matmul %0, %1, %cst {dimension_numbers = #tpu.dot_dimension_numbers<[1], [0], [0], [1], [0, 0, 1, 1], [], []>} : vector<16x16xbf16>, vector<16x68xbf16>, vector<16x68xf32> -> vector<16x68xf32>
    %c0_3 = arith.constant 0 : index
    %c0_4 = arith.constant 0 : index
    %3 = vector.load %arg3[%c0_3, %c0_4] : memref<1x68xf32, #tpu.memory_space<vmem>>, vector<1x68xf32>
    %4 = vector.broadcast %3 : vector<1x68xf32> to vector<16x68xf32>
    %5 = arith.addf %2, %4 : vector<16x68xf32>
    %6 = arith.truncf %5 : vector<16x68xf32> to vector<16x68xbf16>
    %c0_5 = arith.constant 0 : index
    %c0_6 = arith.constant 0 : index
    %7 = vector.load %arg4[%c0_5, %c0_6] : memref<16x68xbf16, #tpu.memory_space<vmem>>, vector<16x68xbf16>
    tpu.vector_store %arg4[%c0_5, %c0_6], %6 {strides = array<i32>} : memref<16x68xbf16, #tpu.memory_space<vmem>>, vector<16x68xbf16>,
    return
  }
  func.func @transform_0(%arg0: i32) -> (i32, i32) {
    %c0_i32 = arith.constant 0 : i32
    %c0_i32_0 = arith.constant 0 : i32
    return %arg0, %c0_i32 : i32, i32
  }
  func.func @transform_1(%arg0: i32) -> (i32, i32) {
    %c0_i32 = arith.constant 0 : i32
    %c0_i32_0 = arith.constant 0 : i32
    %c0_i32_1 = arith.constant 0 : i32
    return %c0_i32, %c0_i32_0 : i32, i32
  }
  func.func @transform_2(%arg0: i32) -> (i32, i32) {
    %c0_i32 = arith.constant 0 : i32
    %c0_i32_0 = arith.constant 0 : i32
    %c0_i32_1 = arith.constant 0 : i32
    return %c0_i32, %c0_i32_0 : i32, i32
  }
  func.func @transform_3(%arg0: i32) -> (i32, i32) {
    %c0_i32 = arith.constant 0 : i32
    %c0_i32_0 = arith.constant 0 : i32
    return %arg0, %c0_i32 : i32, i32
  }
}

module attributes {stable_mosaic.version = 11 : i64} {
  func.func @_arc_attn_kernel(%arg0: i32, %arg1: memref<1x8x32xbf16, #tpu.memory_space<vmem>>, %arg2: memref<1x8x32xbf16, #tpu.memory_space<vmem>>, %arg3: memref<1x1x8xf32, #tpu.memory_space<vmem>>, %arg4: memref<1x8x8xf32, #tpu.memory_space<vmem>>) attributes {dimension_semantics = [#tpu.dimension_semantics<parallel>], iteration_bounds = array<i64: 2>, scalar_prefetch = 0 : i64, scratch_operands = 0 : i64, tpu.core_type = #tpu.core_type<tc>, window_params = [{transform_indices = @transform_0, window_bounds = array<i64: 1, 8, 32>}, {transform_indices = @transform_1, window_bounds = array<i64: 1, 8, 32>}, {transform_indices = @transform_2, window_bounds = array<i64: 1, 1, 8>}, {transform_indices = @transform_3, window_bounds = array<i64: 1, 8, 8>}]} {
    %c0 = arith.constant 0 : index
    %c0_0 = arith.constant 0 : index
    %c0_1 = arith.constant 0 : index
    %0 = vector.load %arg1[%c0, %c0_0, %c0_1] : memref<1x8x32xbf16, #tpu.memory_space<vmem>>, vector<1x8x32xbf16>
    %1 = vector.shape_cast %0 : vector<1x8x32xbf16> to vector<8x32xbf16>
    %c0_2 = arith.constant 0 : index
    %c0_3 = arith.constant 0 : index
    %c0_4 = arith.constant 0 : index
    %2 = vector.load %arg2[%c0_2, %c0_3, %c0_4] : memref<1x8x32xbf16, #tpu.memory_space<vmem>>, vector<1x8x32xbf16>
    %3 = vector.shape_cast %2 : vector<1x8x32xbf16> to vector<8x32xbf16>
    %cst = arith.constant dense<0.000000e+00> : vector<8x8xf32>
    %4 = tpu.matmul %1, %3, %cst {dimension_numbers = #tpu.dot_dimension_numbers<[1], [1], [0], [0], [0, 0, 1, 0], [], []>} : vector<8x32xbf16>, vector<8x32xbf16>, vector<8x8xf32> -> vector<8x8xf32>
    %c0_5 = arith.constant 0 : index
    %c0_6 = arith.constant 0 : index
    %c0_7 = arith.constant 0 : index
    %5 = vector.load %arg3[%c0_5, %c0_6, %c0_7] : memref<1x1x8xf32, #tpu.memory_space<vmem>>, vector<1x1x8xf32>
    %6 = vector.shape_cast %5 : vector<1x1x8xf32> to vector<1x8xf32>
    %cst_8 = arith.constant 0.000000e+00 : f32
    %7 = vector.broadcast %cst_8 : f32 to vector<1x8xf32>
    %8 = arith.cmpf ogt, %6, %7 : vector<1x8xf32>
    %cst_9 = arith.constant 0xFF800000 : f32
    %9 = vector.shape_cast %8 : vector<1x8xi1> to vector<1x8xi1>
    %10 = vector.broadcast %9 : vector<1x8xi1> to vector<8x8xi1>
    %11 = vector.broadcast %cst_9 : f32 to vector<8x8xf32>
    %12 = arith.select %10, %4, %11 : vector<8x8xi1>, vector<8x8xf32>
    %c0_10 = arith.constant 0 : index
    %c0_11 = arith.constant 0 : index
    %c0_12 = arith.constant 0 : index
    %13 = vector.load %arg4[%c0_10, %c0_11, %c0_12] : memref<1x8x8xf32, #tpu.memory_space<vmem>>, vector<1x8x8xf32>
    %14 = vector.shape_cast %13 : vector<1x8x8xf32> to vector<8x8xf32>
    %15 = vector.shape_cast %12 : vector<8x8xf32> to vector<1x8x8xf32>
    tpu.vector_store %arg4[%c0_10, %c0_11, %c0_12], %15 {strides = array<i32>} : memref<1x8x8xf32, #tpu.memory_space<vmem>>, vector<1x8x8xf32>,
    return
  }
  func.func @transform_0(%arg0: i32) -> (i32, i32, i32) {
    %c0_i32 = arith.constant 0 : i32
    %c0_i32_0 = arith.constant 0 : i32
    %c0_i32_1 = arith.constant 0 : i32
    return %arg0, %c0_i32, %c0_i32_0 : i32, i32, i32
  }
  func.func @transform_1(%arg0: i32) -> (i32, i32, i32) {
    %c0_i32 = arith.constant 0 : i32
    %c0_i32_0 = arith.constant 0 : i32
    %c0_i32_1 = arith.constant 0 : i32
    return %arg0, %c0_i32, %c0_i32_0 : i32, i32, i32
  }
  func.func @transform_2(%arg0: i32) -> (i32, i32, i32) {
    %c0_i32 = arith.constant 0 : i32
    %c0_i32_0 = arith.constant 0 : i32
    %c0_i32_1 = arith.constant 0 : i32
    return %arg0, %c0_i32, %c0_i32_0 : i32, i32, i32
  }
  func.func @transform_3(%arg0: i32) -> (i32, i32, i32) {
    %c0_i32 = arith.constant 0 : i32
    %c0_i32_0 = arith.constant 0 : i32
    %c0_i32_1 = arith.constant 0 : i32
    return %arg0, %c0_i32, %c0_i32_0 : i32, i32, i32
  }
}

module attributes {stable_mosaic.version = 11 : i64} {
  func.func @_linear_kernel(%arg0: i32, %arg1: memref<16x32xbf16, #tpu.memory_space<vmem>>, %arg2: memref<32x32xbf16, #tpu.memory_space<vmem>>, %arg3: memref<1x32xf32, #tpu.memory_space<vmem>>, %arg4: memref<16x32xbf16, #tpu.memory_space<vmem>>) attributes {dimension_semantics = [#tpu.dimension_semantics<parallel>], iteration_bounds = array<i64: 1>, scalar_prefetch = 0 : i64, scratch_operands = 0 : i64, tpu.core_type = #tpu.core_type<tc>, window_params = [{transform_indices = @transform_0, window_bounds = array<i64: 16, 32>}, {pipeline_mode = #tpu.pipeline_mode<synchronous>, transform_indices = @transform_1, window_bounds = array<i64: 32, 32>}, {pipeline_mode = #tpu.pipeline_mode<synchronous>, transform_indices = @transform_2, window_bounds = array<i64: 1, 32>}, {transform_indices = @transform_3, window_bounds = array<i64: 16, 32>}]} {
    %c0 = arith.constant 0 : index
    %c0_0 = arith.constant 0 : index
    %0 = vector.load %arg1[%c0, %c0_0] : memref<16x32xbf16, #tpu.memory_space<vmem>>, vector<16x32xbf16>
    %c0_1 = arith.constant 0 : index
    %c0_2 = arith.constant 0 : index
    %1 = vector.load %arg2[%c0_1, %c0_2] : memref<32x32xbf16, #tpu.memory_space<vmem>>, vector<32x32xbf16>
    %cst = arith.constant dense<0.000000e+00> : vector<16x32xf32>
    %2 = tpu.matmul %0, %1, %cst {dimension_numbers = #tpu.dot_dimension_numbers<[1], [0], [0], [1], [0, 0, 1, 1], [], []>} : vector<16x32xbf16>, vector<32x32xbf16>, vector<16x32xf32> -> vector<16x32xf32>
    %c0_3 = arith.constant 0 : index
    %c0_4 = arith.constant 0 : index
    %3 = vector.load %arg3[%c0_3, %c0_4] : memref<1x32xf32, #tpu.memory_space<vmem>>, vector<1x32xf32>
    %4 = vector.broadcast %3 : vector<1x32xf32> to vector<16x32xf32>
    %5 = arith.addf %2, %4 : vector<16x32xf32>
    %6 = arith.truncf %5 : vector<16x32xf32> to vector<16x32xbf16>
    %c0_5 = arith.constant 0 : index
    %c0_6 = arith.constant 0 : index
    %7 = vector.load %arg4[%c0_5, %c0_6] : memref<16x32xbf16, #tpu.memory_space<vmem>>, vector<16x32xbf16>
    tpu.vector_store %arg4[%c0_5, %c0_6], %6 {strides = array<i32>} : memref<16x32xbf16, #tpu.memory_space<vmem>>, vector<16x32xbf16>,
    return
  }
  func.func @transform_0(%arg0: i32) -> (i32, i32) {
    %c0_i32 = arith.constant 0 : i32
    %c0_i32_0 = arith.constant 0 : i32
    return %arg0, %c0_i32 : i32, i32
  }
  func.func @transform_1(%arg0: i32) -> (i32, i32) {
    %c0_i32 = arith.constant 0 : i32
    %c0_i32_0 = arith.constant 0 : i32
    %c0_i32_1 = arith.constant 0 : i32
    return %c0_i32, %c0_i32_0 : i32, i32
  }
  func.func @transform_2(%arg0: i32) -> (i32, i32) {
    %c0_i32 = arith.constant 0 : i32
    %c0_i32_0 = arith.constant 0 : i32
    %c0_i32_1 = arith.constant 0 : i32
    return %c0_i32, %c0_i32_0 : i32, i32
  }
  func.func @transform_3(%arg0: i32) -> (i32, i32) {
    %c0_i32 = arith.constant 0 : i32
    %c0_i32_0 = arith.constant 0 : i32
    return %arg0, %c0_i32 : i32, i32
  }
}

</mosaic_0001>

<llo_original>
// kernel: forward.11
$region0: #{forward.11}
  #allocation0 [shape = 'u32[]', space=smem, size = 0x4, offset = 0x4, fixed_abs, tag = 'smem constant byte address 0x4 - core index']
  #allocation1 [shape = 'u32[144,128]{1,0:T(1,128)}', space=vmem, size = 0x12000, scoped, tag = 'internal scratch']
  %s0 = inlined_call_operand.vmem [shape: f32[64,8], index: 0, kind: input, shape index: {}]
  %s1 = inlined_call_operand.vmem [shape: bf16[8,64], index: 1, kind: input, shape index: {}]
  %s2 = inlined_call_operand.vmem [shape: f32[1,64], index: 2, kind: input, shape index: {}]
  %s3 = inlined_call_operand.vmem [shape: bf16[64,64], index: 3, kind: output, shape index: {}]
  %s4 = sld [smem:[#allocation0]]
  $region22: #{forward.11} parent=0
    _
  %s6 = ssub.s32 1, %s4
  %s7 = scalar_select 0, %s6, %s4
  // Predicated region
  $region2: #{forward.11} parent=0 // pred_check
    _
  $region3: #{forward.11} parent=0 // pred_check_branch
    %9 = sbr.rel (0) target = $region5
  $region4: #{forward.11} parent=0 // pred_region
    _
  $region5: #{forward.11} parent=0 // pred_fallthru
    _
  // Predicated region
  $region6: #{forward.11} parent=0 // pred_check
    _
  $region7: #{forward.11} parent=0 // pred_check_branch
    %11 = sbr.rel (0) target = $region9
  $region8: #{forward.11} parent=0 // pred_region
    _
  $region9: #{forward.11} parent=0 // pred_fallthru
    _
  // Predicated region
  $region10: #{forward.11} parent=0 // pred_check
    _
  $region11: #{forward.11} parent=0 // pred_check_branch
    %13 = sbr.rel (0) target = $region13
  $region12: #{forward.11} parent=0 // pred_region
    _
  $region13: #{forward.11} parent=0 // pred_fallthru
    _
  %v15 = vld [vmem:[%s0] sm:$0xff]
  %v16 = vld [vmem:[%s0 + $0x8] sm:$0xff]
  %v17 = vld [vmem:[%s0 + $0x10] sm:$0xff]
  %v18 = vld [vmem:[%s0 + $0x18] sm:$0xff]
  %v19 = vld [vmem:[%s0 + $0x20] sm:$0xff]
  %v20 = vld [vmem:[%s0 + $0x28] sm:$0xff]
  %v21 = vld [vmem:[%s0 + $0x30] sm:$0xff]
  %v22 = vld [vmem:[%s0 + $0x38] sm:$0xff]
  %v23 = vpack.c.bf16 %v16, %v15
  %v24 = vpack.c.bf16 %v18, %v17
  %v25 = vpack.c.bf16 %v20, %v19
  %v26 = vpack.c.bf16 %v22, %v21
  %v27 = vld [vmem:[%s1] sm:$0xf]
  %v28 = vld [vmem:[%s2] sm:$0x1]
  %v30 = vlaneseq
  %v31 = vshrl.u32 %v30, 7
  %v32 = vsub.s32 0, %v31
  %v33 = vrot.slane %v28, %v32
  %vm35 = vcmask 64512
  %v37 = vsel %vm35, %v23, 0
  %v40 = vsel %vm35, %v24, 0
  %v43 = vsel %vm35, %v25, 0
  %v46 = vsel %vm35, %v26, 0
  %vm48 = vcmask 1043456
  %v50 = vsel %vm48, %v27, 0
  %52 = vmatprep.subr.bf16.mxu0 0
  %53 = vmatpush1.bf16.msra.mxu0 0
  %54 = vmatprep.subr.bf16.mxu0 0
  %55 = vmatpush1.bf16.msra.mxu0 0
  %56 = vmatprep.subr.bf16.mxu0 0
  %57 = vmatpush1.bf16.msra.mxu0 0
  %58 = vmatprep.subr.bf16.mxu0 0
  %59 = vmatpush1.bf16.msra.mxu0 0
  %60 = vmatprep.subr.bf16.mxu0 0
  %61 = vmatpush1.bf16.msra.mxu0 0
  %62 = vmatprep.subr.bf16.mxu0 0
  %63 = vmatpush1.bf16.msra.mxu0 0
  %64 = vmatprep.subr.bf16.mxu0 0
  %65 = vmatpush1.bf16.msra.mxu0 0
  %66 = vmatprep.subr.bf16.mxu0 0
  %67 = vmatpush1.bf16.msra.mxu0 %v50
  %68 = vmatprep.subr.bf16.mxu0 0
  %69 = vmatpush2.bf16.msra.mxu0 0
  %70 = vmatprep.subr.bf16.mxu0 0
  %71 = vmatpush2.bf16.msra.mxu0 0
  %72 = vmatprep.subr.bf16.mxu0 0
  %73 = vmatpush2.bf16.msra.mxu0 0
  %74 = vmatprep.subr.bf16.mxu0 0
  %75 = vmatpush2.bf16.msra.mxu0 0
  %76 = vmatprep.subr.bf16.mxu0 0
  %77 = vmatpush2.bf16.msra.mxu0 0
  %78 = vmatprep.subr.bf16.mxu0 0
  %79 = vmatpush2.bf16.msra.mxu0 0
  %80 = vmatprep.subr.bf16.mxu0 0
  %81 = vmatpush2.bf16.msra.mxu0 0
  %82 = vmatprep.subr.bf16.mxu0 0
  %83 = vmatpush2.bf16.msra.mxu0 0
  %84 = vmatprep.mubr.bf16.mxu0 0
  %85 = vmatmul.mubr.bf16.gmra.mxu0 %v37
  %v86 = vpop.f32.mrf.mxu0
  %v87 = vadd.f32 %v33, %v86
  %v88 = vpop.f32.mrf.mxu0
  %v89 = vpop.f32.mrf.mxu0
  %v90 = vadd.f32 %v33, %v89
  %v91 = vpop.f32.mrf.mxu0
  %92 = vmatprep.mubr.bf16.mxu0 0
  %93 = vmatmul.mubr.bf16.gmra.mxu0 %v40
  %v94 = vpop.f32.mrf.mxu0
  %v95 = vadd.f32 %v33, %v94
  %v96 = vpop.f32.mrf.mxu0
  %v97 = vpop.f32.mrf.mxu0
  %v98 = vadd.f32 %v33, %v97
  %v99 = vpop.f32.mrf.mxu0
  %100 = vmatprep.mubr.bf16.mxu0 0
  %101 = vmatmul.mubr.bf16.gmra.mxu0 %v43
  %v102 = vpop.f32.mrf.mxu0
  %v103 = vadd.f32 %v33, %v102
  %v104 = vpop.f32.mrf.mxu0
  %v105 = vpop.f32.mrf.mxu0
  %v106 = vadd.f32 %v33, %v105
  %v107 = vpop.f32.mrf.mxu0
  %108 = vmatprep.mubr.bf16.mxu0 0
  %109 = vmatmul.mubr.bf16.gmra.mxu0 %v46
  %v110 = vpop.f32.mrf.mxu0
  %v111 = vadd.f32 %v33, %v110
  %v112 = vpop.f32.mrf.mxu0
  %v113 = vpop.f32.mrf.mxu0
  %v114 = vadd.f32 %v33, %v113
  %v115 = vpop.f32.mrf.mxu0
  %116 = vdwg.mxu0
  %v117 = vpack.c.bf16 %v90, %v87
  %v118 = vpack.c.bf16 %v98, %v95
  %v119 = vpack.c.bf16 %v106, %v103
  %v120 = vpack.c.bf16 %v114, %v111
  %v125 = vunpack.c.l.b16 %v117
  %v126 = vunpack.c.h.b16 %v117
  %v127 = vunpack.c.l.b16 %v118
  %v128 = vunpack.c.h.b16 %v118
  %v129 = vunpack.c.l.b16 %v119
  %v130 = vunpack.c.h.b16 %v119
  %v131 = vunpack.c.l.b16 %v120
  %v132 = vunpack.c.h.b16 %v120
  %v133 = vpack.c.b16 %v125, %v125
  %v134 = vpack.c.b16 %v126, %v126
  %v135 = vpack.c.b16 %v127, %v127
  %v136 = vpack.c.b16 %v128, %v128
  %v137 = vpack.c.b16 %v129, %v129
  %v138 = vpack.c.b16 %v130, %v130
  %v139 = vpack.c.b16 %v131, %v131
  %v140 = vpack.c.b16 %v132, %v132
  %vm149 = vcmask 519168
  %150 = vst.msk [vmem:[%s3] sm:$0xf] %vm149, %v133
  %151 = vst.msk [vmem:[%s3 + $0x4] sm:$0xf] %vm149, %v134
  %152 = vst.msk [vmem:[%s3 + $0x8] sm:$0xf] %vm149, %v135
  %153 = vst.msk [vmem:[%s3 + $0xc] sm:$0xf] %vm149, %v136
  %154 = vst.msk [vmem:[%s3 + $0x10] sm:$0xf] %vm149, %v137
  %155 = vst.msk [vmem:[%s3 + $0x14] sm:$0xf] %vm149, %v138
  %156 = vst.msk [vmem:[%s3 + $0x18] sm:$0xf] %vm149, %v139
  %157 = vst.msk [vmem:[%s3 + $0x1c] sm:$0xf] %vm149, %v140
  // Predicated region
  $region14: #{forward.11} parent=0 // pred_check
    _
  $region15: #{forward.11} parent=0 // pred_check_branch
    %159 = sbr.rel (0) target = $region17
  $region16: #{forward.11} parent=0 // pred_region
    _
  $region17: #{forward.11} parent=0 // pred_fallthru
    _
  // Predicated region
  $region18: #{forward.11} parent=0 // pred_check
    _
  $region19: #{forward.11} parent=0 // pred_check_branch
    %161 = sbr.rel (0) target = $region21
  $region20: #{forward.11} parent=0 // pred_region
    _
  $region21: #{forward.11} parent=0 // pred_fallthru
    _

// kernel: forward.12
$region0: #{forward.12}
  #allocation0 [shape = 'u32[]', space=smem, size = 0x4, offset = 0x4, fixed_abs, tag = 'smem constant byte address 0x4 - core index']
  #allocation1 [shape = 'u32[144,128]{1,0:T(1,128)}', space=vmem, size = 0x12000, scoped, tag = 'internal scratch']
  #allocation2 [shape = 'f32[16,8]{1,0:T(8,128)}', space=vmem, size = 0x2000, scoped, tag = 'scratch operand']
  #allocation3 [shape = 'f32[16,8]{1,0:T(8,128)}', space=vmem, size = 0x2000, scoped, tag = 'scratch operand']
  #allocation4 [shape = 'f32[16,8]{1,0:T(8,128)}', space=vmem, size = 0x2000, scoped, tag = 'scratch operand']
  #allocation5 [shape = 'f32[16,8]{1,0:T(8,128)}', space=vmem, size = 0x2000, scoped, tag = 'scratch operand']
  %s0 = inlined_call_operand.vmem [shape: bf16[4,16,64], index: 0, kind: input, shape index: {}, may-alias: {0,1}]
  %s1 = inlined_call_operand.vmem [shape: bf16[4,16,64], index: 1, kind: input, shape index: {}, may-alias: {0,1}]
  %s2 = inlined_call_operand.vmem [shape: f32[4,16,1], index: 2, kind: input, shape index: {}, may-alias: {2,3}]
  %s3 = inlined_call_operand.vmem [shape: f32[4,16,1], index: 3, kind: input, shape index: {}, may-alias: {2,3}]
  %s4 = inlined_call_operand.vmem [shape: bf16[8,32], index: 4, kind: input, shape index: {}]
  %s5 = inlined_call_operand.vmem [shape: bf16[8,32], index: 5, kind: input, shape index: {}]
  %s6 = inlined_call_operand.hbm [shape: f32[4,16,8], index: 6, kind: output, shape index: {0}]
  %s7 = inlined_call_operand.hbm [shape: f32[4,16,8], index: 7, kind: output, shape index: {1}]
  %s8 = inlined_call_operand.vmem [shape: f32[16,8], index: 8, kind: output, shape index: {2}]
  %s9 = inlined_call_operand.vmem [shape: f32[16,8], index: 9, kind: output, shape index: {3}]
  %10 = xla_tuple %s6, %s7, %s8, %s9
  %s11 = sld [smem:[#allocation0]]
  $region85: #{forward.12} parent=0
    _
  %s13 = ssub.s32 1, %s11
  %s14 = scalar_select 0, %s13, %s11
  $region1: #{forward.12} parent=0
    #allocation6 [shape = 'u8[16384]{0}', space=vmem, size = 0x4000, scoped, tag = 'output window, operand 0']
    #allocation7 [shape = 's32[2]{0}', space=sflag, size = 0x8, scoped, tag = 'scoped memory for forward.12']
    #allocation8 [shape = 'u8[16384]{0}', space=vmem, size = 0x4000, scoped, tag = 'output window, operand 1']
    #allocation9 [shape = 's32[2]{0}', space=sflag, size = 0x8, scoped, tag = 'scoped memory for forward.12']
    %15 = vsyncpa [#allocation7], 0
    %s16 = scalar_lea.sflag [#allocation7], 1
    %17 = vsyncpa %s16, 0
    %18 = vsyncpa [#allocation9], 0
    %s19 = scalar_lea.sflag [#allocation9], 1
    %20 = vsyncpa %s19, 0
    loop: start=0, step=1, limit=6
    $region2: #{forward.12} parent=1 // loop_pre_header
      _
    $region3: #{forward.12} parent=1 // loop_header
      %s22 = sphi 0, %s26
      %p23 = scmp.ge.s32.totalorder %s22, 6
      %s32 = sphi 0, %s34
      %s35 = sphi 0, %s32
      %s36 = sphi 0, %s35
      %s52 = sphi 0, %s36
      %s60 = sphi 0, %s62
      %s63 = sphi 0, %s60
      %s64 = sphi 0, %s63
      %s80 = sphi 0, %s64
      %s86 = sphi 0, %s88
      %s89 = sphi 0, %s86
      %s90 = sphi 0, %s89
      %s106 = sphi 0, %s90
      %s114 = sphi 0, %s116
      %s117 = sphi 0, %s114
      %s118 = sphi 0, %s117
      %s134 = sphi 0, %s118
      %s138 = sphi 0, %s138
      %s140 = sphi 0, %s138
      %s141 = sphi 0, %s140
      %s155 = sphi 0, %s141
      %s159 = sphi 0, %s159
      %s161 = sphi 0, %s159
      %s162 = sphi 0, %s161
      %s176 = sphi 0, %s162
      %s182 = sphi 0, %s184
      %s185 = sphi 0, %s182
      %s186 = sphi 0, %s185
      %s202 = sphi 0, %s186
      %s210 = sphi 0, %s212
      %s213 = sphi 0, %s210
      %s214 = sphi 0, %s213
      %s230 = sphi 0, %s214
      %s234 = sphi 0, %s234
      %s236 = sphi 0, %s234
      %s237 = sphi 0, %s236
      %s251 = sphi 0, %s237
      %s255 = sphi 0, %s255
      %s257 = sphi 0, %s255
      %s258 = sphi 0, %s257
      %s272 = sphi 0, %s258
    $region4: #{forward.12} parent=1 // loop_header_branch
      %25 = sbr.rel (%p23) target = $region8
    $region5: #{forward.12} parent=1 // loop_body
      %s27 = ssub.s32 %s22, 1
      %s28 = ssub.s32 %s22, 2
      %s29 = sadd.s32 %s22, 1
      %s30 = ssub.s32 %s22, %s29
      %p31 = scmp.eq.s32.totalorder %s30, 0
      %s33 = sadd.s32 %s32, 1
      %s34 = scalar_select %p31, %s32, %s33
      %p37 = pneg %p31
      %p38 = scmp.eq.s32.totalorder %s22, 3
      %p39 = por %p37, %p38
      %p40 = scmp.ne.s32.totalorder %s32, %s35
      %p41 = scmp.eq.s32.totalorder %s22, 0
      %p42 = por %p40, %p41
      %p43 = scmp.ne.s32.totalorder %s32, %s35
      %p44 = scmp.eq.s32.totalorder %s27, 3
      %p45 = por %p43, %p44
      %p46 = scmp.ne.s32.totalorder %s35, %s36
      %p47 = scmp.eq.s32.totalorder %s27, 0
      %p48 = por %p46, %p47
      %p49 = scmp.ne.s32.totalorder %s35, %s36
      %p50 = scmp.eq.s32.totalorder %s28, 3
      %p51 = por %p49, %p50
      %p53 = scmp.ne.s32.totalorder %s36, %s52
      %p54 = scmp.eq.s32.totalorder %s28, 0
      %p55 = por %p53, %p54
      %s56 = ssub.s32 3, %s22
      %s57 = ssub.s32 3, %s29
      %s58 = ssub.s32 %s56, %s57
      %p59 = scmp.eq.s32.totalorder %s58, 0
      %s61 = sadd.s32 %s60, 1
      %s62 = scalar_select %p59, %s60, %s61
      %p65 = pneg %p59
      %p66 = scmp.eq.s32.totalorder %s22, 3
      %p67 = por %p65, %p66
      %p68 = scmp.ne.s32.totalorder %s60, %s63
      %p69 = scmp.eq.s32.totalorder %s22, 0
      %p70 = por %p68, %p69
      %p71 = scmp.ne.s32.totalorder %s60, %s63
      %p72 = scmp.eq.s32.totalorder %s27, 3
      %p73 = por %p71, %p72
      %p74 = scmp.ne.s32.totalorder %s63, %s64
      %p75 = scmp.eq.s32.totalorder %s27, 0
      %p76 = por %p74, %p75
      %p77 = scmp.ne.s32.totalorder %s63, %s64
      %p78 = scmp.eq.s32.totalorder %s28, 3
      %p79 = por %p77, %p78
      %p81 = scmp.ne.s32.totalorder %s64, %s80
      %p82 = scmp.eq.s32.totalorder %s28, 0
      %p83 = por %p81, %p82
      %s84 = ssub.s32 %s22, %s29
      %p85 = scmp.eq.s32.totalorder %s84, 0
      %s87 = sadd.s32 %s86, 1
      %s88 = scalar_select %p85, %s86, %s87
      %p91 = pneg %p85
      %p92 = scmp.eq.s32.totalorder %s22, 3
      %p93 = por %p91, %p92
      %p94 = scmp.ne.s32.totalorder %s86, %s89
      %p95 = scmp.eq.s32.totalorder %s22, 0
      %p96 = por %p94, %p95
      %p97 = scmp.ne.s32.totalorder %s86, %s89
      %p98 = scmp.eq.s32.totalorder %s27, 3
      %p99 = por %p97, %p98
      %p100 = scmp.ne.s32.totalorder %s89, %s90
      %p101 = scmp.eq.s32.totalorder %s27, 0
      %p102 = por %p100, %p101
      %p103 = scmp.ne.s32.totalorder %s89, %s90
      %p104 = scmp.eq.s32.totalorder %s28, 3
      %p105 = por %p103, %p104
      %p107 = scmp.ne.s32.totalorder %s90, %s106
      %p108 = scmp.eq.s32.totalorder %s28, 0
      %p109 = por %p107, %p108
      %s110 = ssub.s32 3, %s22
      %s111 = ssub.s32 3, %s29
      %s112 = ssub.s32 %s110, %s111
      %p113 = scmp.eq.s32.totalorder %s112, 0
      %s115 = sadd.s32 %s114, 1
      %s116 = scalar_select %p113, %s114, %s115
      %p119 = pneg %p113
      %p120 = scmp.eq.s32.totalorder %s22, 3
      %p121 = por %p119, %p120
      %p122 = scmp.ne.s32.totalorder %s114, %s117
      %p123 = scmp.eq.s32.totalorder %s22, 0
      %p124 = por %p122, %p123
      %p125 = scmp.ne.s32.totalorder %s114, %s117
      %p126 = scmp.eq.s32.totalorder %s27, 3
      %p127 = por %p125, %p126
      %p128 = scmp.ne.s32.totalorder %s117, %s118
      %p129 = scmp.eq.s32.totalorder %s27, 0
      %p130 = por %p128, %p129
      %p131 = scmp.ne.s32.totalorder %s117, %s118
      %p132 = scmp.eq.s32.totalorder %s28, 3
      %p133 = por %p131, %p132
      %p135 = scmp.ne.s32.totalorder %s118, %s134
      %p136 = scmp.eq.s32.totalorder %s28, 0
      %p137 = por %p135, %p136
      %s139 = sadd.s32 %s138, 1
      %p142 = scmp.eq.s32.totalorder %s22, 3
      %p143 = scmp.ne.s32.totalorder %s138, %s140
      %p144 = scmp.eq.s32.totalorder %s22, 0
      %p145 = por %p143, %p144
      %p146 = scmp.ne.s32.totalorder %s138, %s140
      %p147 = scmp.eq.s32.totalorder %s27, 3
      %p148 = por %p146, %p147
      %p149 = scmp.ne.s32.totalorder %s140, %s141
      %p150 = scmp.eq.s32.totalorder %s27, 0
      %p151 = por %p149, %p150
      %p152 = scmp.ne.s32.totalorder %s140, %s141
      %p153 = scmp.eq.s32.totalorder %s28, 3
      %p154 = por %p152, %p153
      %p156 = scmp.ne.s32.totalorder %s141, %s155
      %p157 = scmp.eq.s32.totalorder %s28, 0
      %p158 = por %p156, %p157
      %s160 = sadd.s32 %s159, 1
      %p163 = scmp.eq.s32.totalorder %s22, 3
      %p164 = scmp.ne.s32.totalorder %s159, %s161
      %p165 = scmp.eq.s32.totalorder %s22, 0
      %p166 = por %p164, %p165
      %p167 = scmp.ne.s32.totalorder %s159, %s161
      %p168 = scmp.eq.s32.totalorder %s27, 3
      %p169 = por %p167, %p168
      %p170 = scmp.ne.s32.totalorder %s161, %s162
      %p171 = scmp.eq.s32.totalorder %s27, 0
      %p172 = por %p170, %p171
      %p173 = scmp.ne.s32.totalorder %s161, %s162
      %p174 = scmp.eq.s32.totalorder %s28, 3
      %p175 = por %p173, %p174
      %p177 = scmp.ne.s32.totalorder %s162, %s176
      %p178 = scmp.eq.s32.totalorder %s28, 0
      %p179 = por %p177, %p178
      %s180 = ssub.s32 %s22, %s29
      %p181 = scmp.eq.s32.totalorder %s180, 0
      %s183 = sadd.s32 %s182, 1
      %s184 = scalar_select %p181, %s182, %s183
      %p187 = pneg %p181
      %p188 = scmp.eq.s32.totalorder %s22, 3
      %p189 = por %p187, %p188
      %p190 = scmp.ne.s32.totalorder %s182, %s185
      %p191 = scmp.eq.s32.totalorder %s22, 0
      %p192 = por %p190, %p191
      %p193 = scmp.ne.s32.totalorder %s182, %s185
      %p194 = scmp.eq.s32.totalorder %s27, 3
      %p195 = por %p193, %p194
      %p196 = scmp.ne.s32.totalorder %s185, %s186
      %p197 = scmp.eq.s32.totalorder %s27, 0
      %p198 = por %p196, %p197
      %p199 = scmp.ne.s32.totalorder %s185, %s186
      %p200 = scmp.eq.s32.totalorder %s28, 3
      %p201 = por %p199, %p200
      %p203 = scmp.ne.s32.totalorder %s186, %s202
      %p204 = scmp.eq.s32.totalorder %s28, 0
      %p205 = por %p203, %p204
      %s206 = ssub.s32 3, %s22
      %s207 = ssub.s32 3, %s29
      %s208 = ssub.s32 %s206, %s207
      %p209 = scmp.eq.s32.totalorder %s208, 0
      %s211 = sadd.s32 %s210, 1
      %s212 = scalar_select %p209, %s210, %s211
      %p215 = pneg %p209
      %p216 = scmp.eq.s32.totalorder %s22, 3
      %p217 = por %p215, %p216
      %p218 = scmp.ne.s32.totalorder %s210, %s213
      %p219 = scmp.eq.s32.totalorder %s22, 0
      %p220 = por %p218, %p219
      %p221 = scmp.ne.s32.totalorder %s210, %s213
      %p222 = scmp.eq.s32.totalorder %s27, 3
      %p223 = por %p221, %p222
      %p224 = scmp.ne.s32.totalorder %s213, %s214
      %p225 = scmp.eq.s32.totalorder %s27, 0
      %p226 = por %p224, %p225
      %p227 = scmp.ne.s32.totalorder %s213, %s214
      %p228 = scmp.eq.s32.totalorder %s28, 3
      %p229 = por %p227, %p228
      %p231 = scmp.ne.s32.totalorder %s214, %s230
      %p232 = scmp.eq.s32.totalorder %s28, 0
      %p233 = por %p231, %p232
      %s235 = sadd.s32 %s234, 1
      %p238 = scmp.eq.s32.totalorder %s22, 3
      %p239 = scmp.ne.s32.totalorder %s234, %s236
      %p240 = scmp.eq.s32.totalorder %s22, 0
      %p241 = por %p239, %p240
      %p242 = scmp.ne.s32.totalorder %s234, %s236
      %p243 = scmp.eq.s32.totalorder %s27, 3
      %p244 = por %p242, %p243
      %p245 = scmp.ne.s32.totalorder %s236, %s237
      %p246 = scmp.eq.s32.totalorder %s27, 0
      %p247 = por %p245, %p246
      %p248 = scmp.ne.s32.totalorder %s236, %s237
      %p249 = scmp.eq.s32.totalorder %s28, 3
      %p250 = por %p248, %p249
      %p252 = scmp.ne.s32.totalorder %s237, %s251
      %p253 = scmp.eq.s32.totalorder %s28, 0
      %p254 = por %p252, %p253
      %s256 = sadd.s32 %s255, 1
      %p259 = scmp.eq.s32.totalorder %s22, 3
      %p260 = scmp.ne.s32.totalorder %s255, %s257
      %p261 = scmp.eq.s32.totalorder %s22, 0
      %p262 = por %p260, %p261
      %p263 = scmp.ne.s32.totalorder %s255, %s257
      %p264 = scmp.eq.s32.totalorder %s27, 3
      %p265 = por %p263, %p264
      %p266 = scmp.ne.s32.totalorder %s257, %s258
      %p267 = scmp.eq.s32.totalorder %s27, 0
      %p268 = por %p266, %p267
      %p269 = scmp.ne.s32.totalorder %s257, %s258
      %p270 = scmp.eq.s32.totalorder %s28, 3
      %p271 = por %p269, %p270
      %p273 = scmp.ne.s32.totalorder %s258, %s272
      %p274 = scmp.eq.s32.totalorder %s28, 0
      %p275 = por %p273, %p274
      %p276 = scmp.le.s32.totalorder 1, %s22
      %p277 = scmp.lt.s32.totalorder %s22, 5
      %p278 = pnand %p276, %p277
      %p279 = pneg %p278
      // Predicated region
      $region9: #{forward.12} parent=5 // pred_check
        _
      $region10: #{forward.12} parent=5 // pred_check_branch
        %281 = sbr.rel (%p278) target = $region12
      $region11: #{forward.12} parent=5 // pred_region
        %s282 = ssub.s32 %s22, 1
        // Predicated region
        $region13: #{forward.12} parent=11 // pred_check
          %p283 = pneg %p151
        $region14: #{forward.12} parent=11 // pred_check_branch
          %285 = sbr.rel (%p283) target = $region16
        $region15: #{forward.12} parent=11 // pred_region
          _
        $region16: #{forward.12} parent=11 // pred_fallthru
          _
        // Predicated region
        $region17: #{forward.12} parent=11 // pred_check
          %p286 = pneg %p172
        $region18: #{forward.12} parent=11 // pred_check_branch
          %288 = sbr.rel (%p286) target = $region20
        $region19: #{forward.12} parent=11 // pred_region
          _
        $region20: #{forward.12} parent=11 // pred_fallthru
          _
      $region12: #{forward.12} parent=5 // pred_fallthru
        _
      %p289 = scmp.lt.s32.totalorder %s22, 4
      // Predicated region
      $region21: #{forward.12} parent=5 // pred_check
        %p290 = pneg %p289
      $region22: #{forward.12} parent=5 // pred_check_branch
        %292 = sbr.rel (%p290) target = $region24
      $region23: #{forward.12} parent=5 // pred_region
        // Predicated region
        $region25: #{forward.12} parent=23 // pred_check
          %p293 = pneg %p42
        $region26: #{forward.12} parent=23 // pred_check_branch
          %295 = sbr.rel (%p293) target = $region28
        $region27: #{forward.12} parent=23 // pred_region
          %p296 = scmp.lt.s32.totalorder %s22, 3
          %s297 = scalar_select %p296, %s22, 3
          %s298 = smul.addr %s297, 2
          %s299 = smul.addr %s298, 4
          %s300 = scalar_lea.vmem %s0, %s299
        $region28: #{forward.12} parent=23 // pred_fallthru
          _
        // Predicated region
        $region29: #{forward.12} parent=23 // pred_check
          %p301 = pneg %p70
        $region30: #{forward.12} parent=23 // pred_check_branch
          %303 = sbr.rel (%p301) target = $region32
        $region31: #{forward.12} parent=23 // pred_region
          %s304 = ssub.s32 3, %s22
          %p305 = scmp.lt.s32.totalorder %s304, 3
          %s306 = scalar_select %p305, %s304, 3
          %s307 = smul.addr %s306, 2
          %s308 = smul.addr %s307, 4
          %s309 = scalar_lea.vmem %s1, %s308
          %s310 = ssub.s32 3, %s22
        $region32: #{forward.12} parent=23 // pred_fallthru
          _
        // Predicated region
        $region33: #{forward.12} parent=23 // pred_check
          %p311 = pneg %p96
        $region34: #{forward.12} parent=23 // pred_check_branch
          %313 = sbr.rel (%p311) target = $region36
        $region35: #{forward.12} parent=23 // pred_region
          %p314 = scmp.lt.s32.totalorder %s22, 3
          %s315 = scalar_select %p314, %s22, 3
          %s316 = smul.addr %s315, 2
          %s317 = smul.addr %s316, 8
          %s318 = scalar_lea.vmem %s2, %s317
        $region36: #{forward.12} parent=23 // pred_fallthru
          _
        // Predicated region
        $region37: #{forward.12} parent=23 // pred_check
          %p319 = pneg %p124
        $region38: #{forward.12} parent=23 // pred_check_branch
          %321 = sbr.rel (%p319) target = $region40
        $region39: #{forward.12} parent=23 // pred_region
          %s322 = ssub.s32 3, %s22
          %p323 = scmp.lt.s32.totalorder %s322, 3
          %s324 = scalar_select %p323, %s322, 3
          %s325 = smul.addr %s324, 2
          %s326 = smul.addr %s325, 8
          %s327 = scalar_lea.vmem %s3, %s326
          %s328 = ssub.s32 3, %s22
        $region40: #{forward.12} parent=23 // pred_fallthru
          _
      $region24: #{forward.12} parent=5 // pred_fallthru
        _
      %p329 = scmp.le.s32.totalorder 1, %s22
      %p330 = scmp.lt.s32.totalorder %s22, 5
      %p331 = pnand %p329, %p330
      %p332 = pneg %p331
      // Predicated region
      $region41: #{forward.12} parent=5 // pred_check
        _
      $region42: #{forward.12} parent=5 // pred_check_branch
        %334 = sbr.rel (%p331) target = $region44
      $region43: #{forward.12} parent=5 // pred_region
        %s335 = ssub.s32 %s22, 1
        %p336 = scmp.lt.s32.totalorder %s27, 3
        %s337 = scalar_select %p336, %s27, 3
        %s338 = smul.addr %s337, 2
        %s339 = smul.addr %s338, 4
        %s340 = scalar_lea.vmem %s0, %s339
        %p341 = pneg %p48
        %p342 = pneg %p45
        %s343 = ssub.s32 3, %s27
        %p344 = scmp.lt.s32.totalorder %s343, 3
        %s345 = scalar_select %p344, %s343, 3
        %s346 = smul.addr %s345, 2
        %s347 = smul.addr %s346, 4
        %s348 = scalar_lea.vmem %s1, %s347
        %p349 = pneg %p76
        %p350 = pneg %p73
        %p351 = scmp.lt.s32.totalorder %s27, 3
        %s352 = scalar_select %p351, %s27, 3
        %s353 = smul.addr %s352, 2
        %s354 = smul.addr %s353, 8
        %s355 = scalar_lea.vmem %s2, %s354
        %p356 = pneg %p102
        %p357 = pneg %p99
        %s358 = ssub.s32 3, %s27
        %p359 = scmp.lt.s32.totalorder %s358, 3
        %s360 = scalar_select %p359, %s358, 3
        %s361 = smul.addr %s360, 2
        %s362 = smul.addr %s361, 8
        %s363 = scalar_lea.vmem %s3, %s362
        %p364 = pneg %p130
        %p365 = pneg %p127
        %p366 = pneg %p151
        %p367 = pneg %p148
        %p368 = pneg %p172
        %p369 = pneg %p169
        %p370 = pneg %p198
        %p371 = pneg %p195
        %s372 = sand.u32 %s185, 1
        %s373 = scalar_lea.sflag [#allocation7], %s372
        %s374 = sand.u32 %s185, 1
        %s375 = smul.addr %s374, 16
        %s376 = scalar_lea.vmem [#allocation6], %s375
        %p377 = pneg %p226
        %p378 = pneg %p223
        %s379 = sand.u32 %s213, 1
        %s380 = scalar_lea.sflag [#allocation9], %s379
        %s381 = sand.u32 %s213, 1
        %s382 = smul.addr %s381, 16
        %s383 = scalar_lea.vmem [#allocation8], %s382
        %p384 = pneg %p247
        %p385 = pneg %p244
        %p386 = pneg %p268
        %p387 = pneg %p265
        %p388 = scmp.lt.s32.totalorder %s27, 3
        %s389 = scalar_select %p388, %s27, 3
        %s390 = smul.addr %s389, 2
        %s391 = smul.addr %s390, 4
        %s392 = scalar_lea.vmem %s0, %s391
        %s393 = ssub.s32 3, %s27
        %p394 = scmp.lt.s32.totalorder %s393, 3
        %s395 = scalar_select %p394, %s393, 3
        %s396 = smul.addr %s395, 2
        %s397 = smul.addr %s396, 4
        %s398 = scalar_lea.vmem %s1, %s397
        %s399 = ssub.s32 3, %s27
        %p400 = scmp.lt.s32.totalorder %s27, 3
        %s401 = scalar_select %p400, %s27, 3
        %s402 = smul.addr %s401, 2
        %s403 = smul.addr %s402, 8
        %s404 = scalar_lea.vmem %s2, %s403
        %s405 = ssub.s32 3, %s27
        %p406 = scmp.lt.s32.totalorder %s405, 3
        %s407 = scalar_select %p406, %s405, 3
        %s408 = smul.addr %s407, 2
        %s409 = smul.addr %s408, 8
        %s410 = scalar_lea.vmem %s3, %s409
        %s411 = ssub.s32 3, %s27
        %s412 = ssub.s32 3, %s27
        %p414 = scmp.eq.s32.totalorder %s27, 0
        // Predicated region
        $region45: #{forward.12} parent=43 // pred_check
          %p415 = pneg %p414
        $region46: #{forward.12} parent=43 // pred_check_branch
          %417 = sbr.rel (%p415) target = $region48
        $region47: #{forward.12} parent=43 // pred_region
          %vm418 = vcmask 64512
          %419 = vst.msk [vmem:[#allocation2] sm:$0xff] %vm418, 0.0
          %420 = vst.msk [vmem:[#allocation2 + $0x8] sm:$0xff] %vm418, 0.0
          %421 = vst.msk [vmem:[#allocation3] sm:$0xff] %vm418, 0.0
          %422 = vst.msk [vmem:[#allocation3 + $0x8] sm:$0xff] %vm418, 0.0
          %423 = vst.msk [vmem:[#allocation4] sm:$0xff] %vm418, 0.0
          %424 = vst.msk [vmem:[#allocation4 + $0x8] sm:$0xff] %vm418, 0.0
          %425 = vst.msk [vmem:[#allocation5] sm:$0xff] %vm418, 0.0
          %426 = vst.msk [vmem:[#allocation5 + $0x8] sm:$0xff] %vm418, 0.0
        $region48: #{forward.12} parent=43 // pred_fallthru
          _
        %v427 = vld [vmem:[%s392] sm:$0xf]
        %v428 = vld [vmem:[%s392 + $0x4] sm:$0xf]
        %v429 = vld [vmem:[%s404] sm:$0xff]
        %v430 = vld [vmem:[%s404 + $0x8] sm:$0xff]
        %v431 = vunpack.c.l.bf16 %v427
        %v432 = vunpack.c.l.bf16 %v428
        %v433 = vld [vmem:[#allocation2] sm:$0xff]
        %v434 = vld [vmem:[#allocation2 + $0x8] sm:$0xff]
        %v435 = vpack.c.bf16 %v434, %v433
        %v436 = vld [vmem:[%s4] sm:$0xf]
        %vm437 = vcmask 64512
        %v439 = vsel %vm437, %v435, 0
        %vm441 = vcmask 1043456
        %v443 = vsel %vm441, %v436, 0
        %445 = vmatprep.subr.bf16.mxu0 0
        %446 = vmatpush1.bf16.msra.mxu0 0
        %447 = vmatprep.subr.bf16.mxu0 0
        %448 = vmatpush1.bf16.msra.mxu0 0
        %449 = vmatprep.subr.bf16.mxu0 0
        %450 = vmatpush1.bf16.msra.mxu0 0
        %451 = vmatprep.subr.bf16.mxu0 0
        %452 = vmatpush1.bf16.msra.mxu0 0
        %453 = vmatprep.subr.bf16.mxu0 0
        %454 = vmatpush1.bf16.msra.mxu0 0
        %455 = vmatprep.subr.bf16.mxu0 0
        %456 = vmatpush1.bf16.msra.mxu0 0
        %457 = vmatprep.subr.bf16.mxu0 0
        %458 = vmatpush1.bf16.msra.mxu0 0
        %459 = vmatprep.subr.bf16.mxu0 0
        %460 = vmatpush1.bf16.msra.mxu0 %v443
        %461 = vmatprep.subr.bf16.mxu0 0
        %462 = vmatpush2.bf16.msra.mxu0 0
        %463 = vmatprep.subr.bf16.mxu0 0
        %464 = vmatpush2.bf16.msra.mxu0 0
        %465 = vmatprep.subr.bf16.mxu0 0
        %466 = vmatpush2.bf16.msra.mxu0 0
        %467 = vmatprep.subr.bf16.mxu0 0
        %468 = vmatpush2.bf16.msra.mxu0 0
        %469 = vmatprep.subr.bf16.mxu0 0
        %470 = vmatpush2.bf16.msra.mxu0 0
        %471 = vmatprep.subr.bf16.mxu0 0
        %472 = vmatpush2.bf16.msra.mxu0 0
        %473 = vmatprep.subr.bf16.mxu0 0
        %474 = vmatpush2.bf16.msra.mxu0 0
        %475 = vmatprep.subr.bf16.mxu0 0
        %476 = vmatpush2.bf16.msra.mxu0 0
        %477 = vmatprep.mubr.bf16.mxu0 0
        %478 = vmatmul.mubr.bf16.gmra.mxu0 %v439
        %v479 = vpop.f32.mrf.mxu0
        %v480 = vadd.f32 0.0, %v479
        %v481 = vpop.f32.mrf.mxu0
        %v482 = vpop.f32.mrf.mxu0
        %v483 = vadd.f32 0.0, %v482
        %v484 = vpop.f32.mrf.mxu0
        %485 = vdwg.mxu0
        %v486 = vadd.f32 %v431, %v480
        %v487 = vadd.f32 %v432, %v483
        %v488 = vxor.u32 %v486, 2147483648
        %v489 = vxor.u32 %v487, 2147483648
        %v490 = vmul.f32 %v488, 1.442695
        %v491 = vpow.pop %v490
        %v492 = vmul.f32 %v489, 1.442695
        %v493 = vpow.pop %v492
        %v494 = vadd.f32 %v491, 1.0
        %v495 = vadd.f32 %v493, 1.0
        %v496 = vrcp.pop %v494
        %v497 = vmul.f32 1.0, %v496
        %v498 = vrcp.pop %v495
        %v499 = vmul.f32 1.0, %v498
        %v500 = vtanh.pop %v486
        %v501 = vtanh.pop %v487
        %v502 = vld [vmem:[#allocation3] sm:$0xff]
        %v503 = vld [vmem:[#allocation3 + $0x8] sm:$0xff]
        %506 = vrot.lane.b32.xlu0 %v502, 8
        %v507 = vpop.permute.xlu0 %506
        %508 = vrot.lane.b32.xlu0 %v503, 8
        %v509 = vpop.permute.xlu0 %508
        %v512 = vmul.f32 %v497, %v507
        %v513 = vmul.f32 %v499, %v509
        %516 = vrot.lane.b32.xlu0 %v500, 112
        %v517 = vpop.permute.xlu0 %516
        %518 = vrot.lane.b32.xlu0 %v501, 112
        %v519 = vpop.permute.xlu0 %518
        %v522 = vmul.f32 %v497, %v517
        %v523 = vmul.f32 %v499, %v519
        %526 = vrot.lane.b32.xlu0 %v522, 8
        %v527 = vpop.permute.xlu0 %526
        %528 = vrot.lane.b32.xlu0 %v523, 8
        %v529 = vpop.permute.xlu0 %528
        %v532 = vadd.f32 %v512, %v527
        %v533 = vadd.f32 %v513, %v529
        %v534 = vtanh.pop %v532
        %v535 = vtanh.pop %v533
        %538 = vrot.lane.b32.xlu0 %v534, 16
        %v539 = vpop.permute.xlu0 %538
        %540 = vrot.lane.b32.xlu0 %v535, 16
        %v541 = vpop.permute.xlu0 %540
        %v544 = vmul.f32 %v497, %v539
        %v545 = vmul.f32 %v499, %v541
        %547 = vset.pattern.permute.xlu0 0
        %548 = vperm.xlu0 %547, %v429
        %v549 = vpop.permute.xlu0 %548
        %552 = vset.pattern.permute.xlu0 0
        %553 = vperm.xlu0 %552, %v430
        %v554 = vpop.permute.xlu0 %553
        %v556 = vmul.f32 %v549, %v544
        %v557 = vmul.f32 %v554, %v545
        %v558 = vsub.f32 1.0, %v429
        %v559 = vsub.f32 1.0, %v430
        %561 = vset.pattern.permute.xlu0 0
        %562 = vperm.xlu0 %561, %v558
        %v563 = vpop.permute.xlu0 %562
        %566 = vset.pattern.permute.xlu0 0
        %567 = vperm.xlu0 %566, %v559
        %v568 = vpop.permute.xlu0 %567
        %v570 = vmul.f32 %v563, %v433
        %v571 = vmul.f32 %v568, %v434
        %574 = vrot.lane.b32.xlu0 %v570, 24
        %v575 = vpop.permute.xlu0 %574
        %576 = vrot.lane.b32.xlu0 %v571, 24
        %v577 = vpop.permute.xlu0 %576
        %v580 = vadd.f32 %v556, %v575
        %v581 = vadd.f32 %v557, %v577
        %v582 = vmul.f32 %v549, %v532
        %v583 = vmul.f32 %v554, %v533
        %v584 = vmul.f32 %v563, %v502
        %v585 = vmul.f32 %v568, %v503
        %588 = vrot.lane.b32.xlu0 %v584, 8
        %v589 = vpop.permute.xlu0 %588
        %590 = vrot.lane.b32.xlu0 %v585, 8
        %v591 = vpop.permute.xlu0 %590
        %v594 = vadd.f32 %v582, %v589
        %v595 = vadd.f32 %v583, %v591
        %598 = vrot.lane.b32.xlu0 %v594, 120
        %v599 = vpop.permute.xlu0 %598
        %600 = vrot.lane.b32.xlu0 %v595, 120
        %v601 = vpop.permute.xlu0 %600
        %604 = vst.msk [vmem:[#allocation3] sm:$0xff] %vm437, %v599
        %605 = vst.msk [vmem:[#allocation3 + $0x8] sm:$0xff] %vm437, %v601
        %608 = vrot.lane.b32.xlu0 %v580, 104
        %v609 = vpop.permute.xlu0 %608
        %610 = vrot.lane.b32.xlu0 %v581, 104
        %v611 = vpop.permute.xlu0 %610
        %614 = vst.msk [vmem:[#allocation2] sm:$0xff] %vm437, %v609
        %615 = vst.msk [vmem:[#allocation2 + $0x8] sm:$0xff] %vm437, %v611
        %v616 = vmul.f32 %v580, %v549
        %v617 = vmul.f32 %v581, %v554
        %620 = vrot.lane.b32.xlu0 %v616, 104
        %v621 = vpop.permute.xlu0 %620
        %622 = vrot.lane.b32.xlu0 %v617, 104
        %v623 = vpop.permute.xlu0 %622
        %626 = vst.msk [vmem:[%s376] sm:$0xff] %vm437, %v621
        %627 = vst.msk [vmem:[%s376 + $0x8] sm:$0xff] %vm437, %v623
        %v628 = vld [vmem:[%s398] sm:$0xf]
        %v629 = vld [vmem:[%s398 + $0x4] sm:$0xf]
        %v630 = vld [vmem:[%s410] sm:$0xff]
        %v631 = vld [vmem:[%s410 + $0x8] sm:$0xff]
        %v632 = vunpack.c.l.bf16 %v628
        %v633 = vunpack.c.l.bf16 %v629
        %v634 = vld [vmem:[#allocation4] sm:$0xff]
        %v635 = vld [vmem:[#allocation4 + $0x8] sm:$0xff]
        %v636 = vpack.c.bf16 %v635, %v634
        %v637 = vld [vmem:[%s5] sm:$0xf]
        %v639 = vsel %vm437, %v636, 0
        %v642 = vsel %vm441, %v637, 0
        %644 = vmatprep.subr.bf16.mxu0 0
        %645 = vmatpush1.bf16.msra.mxu0 0
        %646 = vmatprep.subr.bf16.mxu0 0
        %647 = vmatpush1.bf16.msra.mxu0 0
        %648 = vmatprep.subr.bf16.mxu0 0
        %649 = vmatpush1.bf16.msra.mxu0 0
        %650 = vmatprep.subr.bf16.mxu0 0
        %651 = vmatpush1.bf16.msra.mxu0 0
        %652 = vmatprep.subr.bf16.mxu0 0
        %653 = vmatpush1.bf16.msra.mxu0 0
        %654 = vmatprep.subr.bf16.mxu0 0
        %655 = vmatpush1.bf16.msra.mxu0 0
        %656 = vmatprep.subr.bf16.mxu0 0
        %657 = vmatpush1.bf16.msra.mxu0 0
        %658 = vmatprep.subr.bf16.mxu0 0
        %659 = vmatpush1.bf16.msra.mxu0 %v642
        %660 = vmatprep.subr.bf16.mxu0 0
        %661 = vmatpush2.bf16.msra.mxu0 0
        %662 = vmatprep.subr.bf16.mxu0 0
        %663 = vmatpush2.bf16.msra.mxu0 0
        %664 = vmatprep.subr.bf16.mxu0 0
        %665 = vmatpush2.bf16.msra.mxu0 0
        %666 = vmatprep.subr.bf16.mxu0 0
        %667 = vmatpush2.bf16.msra.mxu0 0
        %668 = vmatprep.subr.bf16.mxu0 0
        %669 = vmatpush2.bf16.msra.mxu0 0
        %670 = vmatprep.subr.bf16.mxu0 0
        %671 = vmatpush2.bf16.msra.mxu0 0
        %672 = vmatprep.subr.bf16.mxu0 0
        %673 = vmatpush2.bf16.msra.mxu0 0
        %674 = vmatprep.subr.bf16.mxu0 0
        %675 = vmatpush2.bf16.msra.mxu0 0
        %676 = vmatprep.mubr.bf16.mxu0 0
        %677 = vmatmul.mubr.bf16.gmra.mxu0 %v639
        %v678 = vpop.f32.mrf.mxu0
        %v679 = vadd.f32 0.0, %v678
        %v680 = vpop.f32.mrf.mxu0
        %v681 = vpop.f32.mrf.mxu0
        %v682 = vadd.f32 0.0, %v681
        %v683 = vpop.f32.mrf.mxu0
        %684 = vdwg.mxu0
        %687 = vrot.lane.b32.xlu0 %v679, 32
        %v688 = vpop.permute.xlu0 %687
        %689 = vrot.lane.b32.xlu0 %v682, 32
        %v690 = vpop.permute.xlu0 %689
        %v693 = vadd.f32 %v632, %v688
        %v694 = vadd.f32 %v633, %v690
        %v695 = vxor.u32 %v693, 2147483648
        %v696 = vxor.u32 %v694, 2147483648
        %v697 = vmul.f32 %v695, 1.442695
        %v698 = vpow.pop %v697
        %v699 = vmul.f32 %v696, 1.442695
        %v700 = vpow.pop %v699
        %v701 = vadd.f32 %v698, 1.0
        %v702 = vadd.f32 %v700, 1.0
        %v703 = vrcp.pop %v701
        %v704 = vmul.f32 1.0, %v703
        %v705 = vrcp.pop %v702
        %v706 = vmul.f32 1.0, %v705
        %v707 = vtanh.pop %v693
        %v708 = vtanh.pop %v694
        %v709 = vld [vmem:[#allocation5] sm:$0xff]
        %v710 = vld [vmem:[#allocation5 + $0x8] sm:$0xff]
        %713 = vrot.lane.b32.xlu0 %v709, 40
        %v714 = vpop.permute.xlu0 %713
        %715 = vrot.lane.b32.xlu0 %v710, 40
        %v716 = vpop.permute.xlu0 %715
        %v719 = vmul.f32 %v704, %v714
        %v720 = vmul.f32 %v706, %v716
        %723 = vrot.lane.b32.xlu0 %v707, 112
        %v724 = vpop.permute.xlu0 %723
        %725 = vrot.lane.b32.xlu0 %v708, 112
        %v726 = vpop.permute.xlu0 %725
        %v729 = vmul.f32 %v704, %v724
        %v730 = vmul.f32 %v706, %v726
        %733 = vrot.lane.b32.xlu0 %v729, 8
        %v734 = vpop.permute.xlu0 %733
        %735 = vrot.lane.b32.xlu0 %v730, 8
        %v736 = vpop.permute.xlu0 %735
        %v739 = vadd.f32 %v719, %v734
        %v740 = vadd.f32 %v720, %v736
        %v741 = vtanh.pop %v739
        %v742 = vtanh.pop %v740
        %745 = vrot.lane.b32.xlu0 %v741, 16
        %v746 = vpop.permute.xlu0 %745
        %747 = vrot.lane.b32.xlu0 %v742, 16
        %v748 = vpop.permute.xlu0 %747
        %v751 = vmul.f32 %v704, %v746
        %v752 = vmul.f32 %v706, %v748
        %754 = vset.pattern.permute.xlu0 0
        %755 = vperm.xlu0 %754, %v630
        %v756 = vpop.permute.xlu0 %755
        %759 = vset.pattern.permute.xlu0 0
        %760 = vperm.xlu0 %759, %v631
        %v761 = vpop.permute.xlu0 %760
        %v763 = vmul.f32 %v756, %v751
        %v764 = vmul.f32 %v761, %v752
        %v765 = vsub.f32 1.0, %v630
        %v766 = vsub.f32 1.0, %v631
        %768 = vset.pattern.permute.xlu0 0
        %769 = vperm.xlu0 %768, %v765
        %v770 = vpop.permute.xlu0 %769
        %773 = vset.pattern.permute.xlu0 0
        %774 = vperm.xlu0 %773, %v766
        %v775 = vpop.permute.xlu0 %774
        %v777 = vmul.f32 %v770, %v634
        %v778 = vmul.f32 %v775, %v635
        %781 = vrot.lane.b32.xlu0 %v777, 56
        %v782 = vpop.permute.xlu0 %781
        %783 = vrot.lane.b32.xlu0 %v778, 56
        %v784 = vpop.permute.xlu0 %783
        %v787 = vadd.f32 %v763, %v782
        %v788 = vadd.f32 %v764, %v784
        %v789 = vmul.f32 %v756, %v739
        %v790 = vmul.f32 %v761, %v740
        %v791 = vmul.f32 %v770, %v709
        %v792 = vmul.f32 %v775, %v710
        %795 = vrot.lane.b32.xlu0 %v791, 40
        %v796 = vpop.permute.xlu0 %795
        %797 = vrot.lane.b32.xlu0 %v792, 40
        %v798 = vpop.permute.xlu0 %797
        %v801 = vadd.f32 %v789, %v796
        %v802 = vadd.f32 %v790, %v798
        %805 = vrot.lane.b32.xlu0 %v801, 88
        %v806 = vpop.permute.xlu0 %805
        %807 = vrot.lane.b32.xlu0 %v802, 88
        %v808 = vpop.permute.xlu0 %807
        %811 = vst.msk [vmem:[#allocation5] sm:$0xff] %vm437, %v806
        %812 = vst.msk [vmem:[#allocation5 + $0x8] sm:$0xff] %vm437, %v808
        %815 = vrot.lane.b32.xlu0 %v787, 72
        %v816 = vpop.permute.xlu0 %815
        %817 = vrot.lane.b32.xlu0 %v788, 72
        %v818 = vpop.permute.xlu0 %817
        %821 = vst.msk [vmem:[#allocation4] sm:$0xff] %vm437, %v816
        %822 = vst.msk [vmem:[#allocation4 + $0x8] sm:$0xff] %vm437, %v818
        %v823 = vmul.f32 %v787, %v756
        %v824 = vmul.f32 %v788, %v761
        %827 = vrot.lane.b32.xlu0 %v823, 72
        %v828 = vpop.permute.xlu0 %827
        %829 = vrot.lane.b32.xlu0 %v824, 72
        %v830 = vpop.permute.xlu0 %829
        %833 = vst.msk [vmem:[%s383] sm:$0xff] %vm437, %v828
        %834 = vst.msk [vmem:[%s383 + $0x8] sm:$0xff] %vm437, %v830
        %v835 = vld [vmem:[#allocation2] sm:$0xff]
        %v836 = vld [vmem:[#allocation2 + $0x8] sm:$0xff]
        %837 = vst.msk [vmem:[%s8] sm:$0xff] %vm437, %v835
        %838 = vst.msk [vmem:[%s8 + $0x8] sm:$0xff] %vm437, %v836
        %v839 = vld [vmem:[#allocation4] sm:$0xff]
        %v840 = vld [vmem:[#allocation4 + $0x8] sm:$0xff]
        %841 = vst.msk [vmem:[%s9] sm:$0xff] %vm437, %v839
        %842 = vst.msk [vmem:[%s9 + $0x8] sm:$0xff] %vm437, %v840
        %s843 = sand.u32 %s185, 1
        %s844 = scalar_lea.sflag [#allocation7], %s843
        %s845 = sand.u32 %s185, 1
        %s846 = smul.addr %s845, 16
        %s847 = scalar_lea.vmem [#allocation6], %s846
        %s848 = sand.u32 %s213, 1
        %s849 = scalar_lea.sflag [#allocation9], %s848
        %s850 = sand.u32 %s213, 1
        %s851 = smul.addr %s850, 16
        %s852 = scalar_lea.vmem [#allocation8], %s851
        // Predicated region
        $region49: #{forward.12} parent=43 // pred_check
          %p853 = pneg %p195
        $region50: #{forward.12} parent=43 // pred_check_branch
          %855 = sbr.rel (%p853) target = $region52
        $region51: #{forward.12} parent=43 // pred_region
          %s857 = ssub.s32 256, 256
          %858 = vsyncadd %s844, %s857
          %s859 = smul.addr %s27, 2
          %s860 = smul.addr %s859, 128
          %s861 = scalar_lea.hbm %s6, %s860
          %s862 = sshll.u32 %s847, 4
          %s863 = int_to_ptr.vmem [resolvable:$true] %s862
          %868 = dma.vmem_to_hbm [thread:$0]  %s863, 256, %s861, %s844, 128, 128, 8
        $region52: #{forward.12} parent=43 // pred_fallthru
          _
        // Predicated region
        $region53: #{forward.12} parent=43 // pred_check
          %p869 = pneg %p223
        $region54: #{forward.12} parent=43 // pred_check_branch
          %871 = sbr.rel (%p869) target = $region56
        $region55: #{forward.12} parent=43 // pred_region
          %s872 = ssub.s32 3, %s27
          %s874 = ssub.s32 256, 256
          %875 = vsyncadd %s849, %s874
          %s876 = smul.addr %s872, 2
          %s877 = smul.addr %s876, 128
          %s878 = scalar_lea.hbm %s7, %s877
          %s879 = sshll.u32 %s852, 4
          %s880 = int_to_ptr.vmem [resolvable:$true] %s879
          %885 = dma.vmem_to_hbm [thread:$0]  %s880, 256, %s878, %s849, 128, 128, 8
        $region56: #{forward.12} parent=43 // pred_fallthru
          _
        // Predicated region
        $region57: #{forward.12} parent=43 // pred_check
          %p886 = pneg %p244
        $region58: #{forward.12} parent=43 // pred_check_branch
          %888 = sbr.rel (%p886) target = $region60
        $region59: #{forward.12} parent=43 // pred_region
          _
        $region60: #{forward.12} parent=43 // pred_fallthru
          _
        // Predicated region
        $region61: #{forward.12} parent=43 // pred_check
          %p889 = pneg %p265
        $region62: #{forward.12} parent=43 // pred_check_branch
          %891 = sbr.rel (%p889) target = $region64
        $region63: #{forward.12} parent=43 // pred_region
          _
        $region64: #{forward.12} parent=43 // pred_fallthru
          _
        // Predicated region
        $region65: #{forward.12} parent=43 // pred_check
          %p892 = pneg %p244
        $region66: #{forward.12} parent=43 // pred_check_branch
          %894 = sbr.rel (%p892) target = $region68
        $region67: #{forward.12} parent=43 // pred_region
          _
        $region68: #{forward.12} parent=43 // pred_fallthru
          _
        // Predicated region
        $region69: #{forward.12} parent=43 // pred_check
          %p895 = pneg %p265
        $region70: #{forward.12} parent=43 // pred_check_branch
          %897 = sbr.rel (%p895) target = $region72
        $region71: #{forward.12} parent=43 // pred_region
          _
        $region72: #{forward.12} parent=43 // pred_fallthru
          _
      $region44: #{forward.12} parent=5 // pred_fallthru
        _
      %p898 = scmp.le.s32.totalorder 2, %s22
      // Predicated region
      $region73: #{forward.12} parent=5 // pred_check
        %p899 = pneg %p898
      $region74: #{forward.12} parent=5 // pred_check_branch
        %901 = sbr.rel (%p899) target = $region76
      $region75: #{forward.12} parent=5 // pred_region
        %s902 = ssub.s32 %s22, 2
        // Predicated region
        $region77: #{forward.12} parent=75 // pred_check
          %p903 = pneg %p201
        $region78: #{forward.12} parent=75 // pred_check_branch
          %905 = sbr.rel (%p903) target = $region80
        $region79: #{forward.12} parent=75 // pred_region
          %s906 = sand.u32 %s186, 1
          %s907 = scalar_lea.sflag [#allocation7], %s906
          %s908 = sand.u32 %s186, 1
          %s909 = smul.addr %s908, 16
          %s910 = scalar_lea.vmem [#allocation6], %s909
          %911 = dma.done %s907, 256
        $region80: #{forward.12} parent=75 // pred_fallthru
          _
        // Predicated region
        $region81: #{forward.12} parent=75 // pred_check
          %p912 = pneg %p229
        $region82: #{forward.12} parent=75 // pred_check_branch
          %914 = sbr.rel (%p912) target = $region84
        $region83: #{forward.12} parent=75 // pred_region
          %s915 = sand.u32 %s214, 1
          %s916 = scalar_lea.sflag [#allocation9], %s915
          %s917 = sand.u32 %s214, 1
          %s918 = smul.addr %s917, 16
          %s919 = scalar_lea.vmem [#allocation8], %s918
          %920 = dma.done %s916, 256
        $region84: #{forward.12} parent=75 // pred_fallthru
          _
      $region76: #{forward.12} parent=5 // pred_fallthru
        _
    $region6: #{forward.12} parent=1 // loop_footer
      %s26 = sadd.s32 1, %s22
    $region7: #{forward.12} parent=1 // loop_footer_branch
      %21 = sbr.rel target = $region3
    $region8: #{forward.12} parent=1 // loop_exit
      _
    %921 = vsyncpa [#allocation7], 1
    %s922 = scalar_lea.sflag [#allocation7], 1
    %923 = vsyncpa %s922, 1
    %924 = vsyncpa [#allocation9], 1
    %s925 = scalar_lea.sflag [#allocation9], 1
    %926 = vsyncpa %s925, 1

// kernel: forward.13
$region0: #{forward.13}
  #allocation0 [shape = 'u32[]', space=smem, size = 0x4, offset = 0x4, fixed_abs, tag = 'smem constant byte address 0x4 - core index']
  #allocation1 [shape = 'u32[144,128]{1,0:T(1,128)}', space=vmem, size = 0x12000, scoped, tag = 'internal scratch']
  %s0 = inlined_call_operand.vmem [shape: f32[16,32], index: 0, kind: input, shape index: {}]
  %s1 = inlined_call_operand.vmem [shape: bf16[32,256], index: 1, kind: input, shape index: {}]
  %s2 = inlined_call_operand.vmem [shape: f32[1,256], index: 2, kind: input, shape index: {}]
  %s3 = inlined_call_operand.vmem [shape: bf16[16,256], index: 3, kind: output, shape index: {}]
  %s4 = sld [smem:[#allocation0]]
  $region22: #{forward.13} parent=0
    _
  %s6 = ssub.s32 1, %s4
  %s7 = scalar_select 0, %s6, %s4
  // Predicated region
  $region2: #{forward.13} parent=0 // pred_check
    _
  $region3: #{forward.13} parent=0 // pred_check_branch
    %9 = sbr.rel (0) target = $region5
  $region4: #{forward.13} parent=0 // pred_region
    _
  $region5: #{forward.13} parent=0 // pred_fallthru
    _
  // Predicated region
  $region6: #{forward.13} parent=0 // pred_check
    _
  $region7: #{forward.13} parent=0 // pred_check_branch
    %11 = sbr.rel (0) target = $region9
  $region8: #{forward.13} parent=0 // pred_region
    _
  $region9: #{forward.13} parent=0 // pred_fallthru
    _
  // Predicated region
  $region10: #{forward.13} parent=0 // pred_check
    _
  $region11: #{forward.13} parent=0 // pred_check_branch
    %13 = sbr.rel (0) target = $region13
  $region12: #{forward.13} parent=0 // pred_region
    _
  $region13: #{forward.13} parent=0 // pred_fallthru
    _
  %v15 = vld [vmem:[%s0] sm:$0xff]
  %v16 = vld [vmem:[%s0 + $0x8] sm:$0xff]
  %v17 = vpack.c.bf16 %v16, %v15
  %v18 = vld [vmem:[%s1] sm:$0xff]
  %v19 = vld [vmem:[%s1 + $0x8] sm:$0xff]
  %v20 = vld [vmem:[%s1 + $0x10] sm:$0xff]
  %v21 = vld [vmem:[%s1 + $0x18] sm:$0xff]
  %v22 = vld [vmem:[%s2] sm:$0x3]
  %v24 = vlaneseq
  %v25 = vshrl.u32 %v24, 7
  %v26 = vsub.s32 0, %v25
  %v27 = vrot.slane %v22, %v26
  %v28 = vlaneseq
  %v29 = vshrl.u32 %v28, 7
  %v30 = vsub.s32 1, %v29
  %v31 = vrot.slane %v22, %v30
  %v38 = vunpack.c.l.b16 %v18
  %v39 = vunpack.c.h.b16 %v18
  %v40 = vunpack.c.l.b16 %v19
  %v41 = vunpack.c.h.b16 %v19
  %v42 = vunpack.c.l.b16 %v20
  %v43 = vunpack.c.h.b16 %v20
  %v44 = vunpack.c.l.b16 %v21
  %v45 = vunpack.c.h.b16 %v21
  %v46 = vpack.c.b16 %v40, %v38
  %v47 = vpack.c.b16 %v41, %v39
  %v48 = vpack.c.b16 %v44, %v42
  %v49 = vpack.c.b16 %v45, %v43
  %vm54 = vcmask 261120
  %v56 = vsel %vm54, %v17, 0
  %58 = vmatprep.subr.bf16.mxu0 0
  %59 = vmatpush1.bf16.msra.mxu0 0
  %60 = vmatprep.subr.bf16.mxu0 0
  %61 = vmatpush1.bf16.msra.mxu0 0
  %62 = vmatprep.subr.bf16.mxu0 0
  %63 = vmatpush1.bf16.msra.mxu0 0
  %64 = vmatprep.subr.bf16.mxu0 0
  %65 = vmatpush1.bf16.msra.mxu0 0
  %66 = vmatprep.subr.bf16.mxu0 0
  %67 = vmatpush1.bf16.msra.mxu0 0
  %68 = vmatprep.subr.bf16.mxu0 0
  %69 = vmatpush1.bf16.msra.mxu0 0
  %70 = vmatprep.subr.bf16.mxu0 %v49
  %71 = vmatpush1.bf16.msra.mxu0 %v48
  %72 = vmatprep.subr.bf16.mxu0 %v47
  %73 = vmatpush1.bf16.msra.mxu0 %v46
  %74 = vmatprep.subr.bf16.mxu0 0
  %75 = vmatpush2.bf16.msra.mxu0 0
  %76 = vmatprep.subr.bf16.mxu0 0
  %77 = vmatpush2.bf16.msra.mxu0 0
  %78 = vmatprep.subr.bf16.mxu0 0
  %79 = vmatpush2.bf16.msra.mxu0 0
  %80 = vmatprep.subr.bf16.mxu0 0
  %81 = vmatpush2.bf16.msra.mxu0 0
  %82 = vmatprep.subr.bf16.mxu0 0
  %83 = vmatpush2.bf16.msra.mxu0 0
  %84 = vmatprep.subr.bf16.mxu0 0
  %85 = vmatpush2.bf16.msra.mxu0 0
  %86 = vmatprep.subr.bf16.mxu0 0
  %87 = vmatpush2.bf16.msra.mxu0 0
  %88 = vmatprep.subr.bf16.mxu0 0
  %89 = vmatpush2.bf16.msra.mxu0 0
  %90 = vmatprep.mubr.bf16.mxu0 0
  %91 = vmatmul.mubr.bf16.gmra.mxu0 %v56
  %v92 = vpop.f32.mrf.mxu0
  %v93 = vadd.f32 %v27, %v92
  %v94 = vpop.f32.mrf.mxu0
  %v95 = vadd.f32 %v31, %v94
  %v96 = vpop.f32.mrf.mxu0
  %v97 = vadd.f32 %v27, %v96
  %v98 = vpop.f32.mrf.mxu0
  %v99 = vadd.f32 %v31, %v98
  %100 = vdwg.mxu0
  %v101 = vpack.c.bf16 %v97, %v93
  %v102 = vpack.c.bf16 %v99, %v95
  %v105 = vunpack.c.l.b16 %v101
  %v106 = vunpack.c.l.b16 %v102
  %v107 = vunpack.c.h.b16 %v101
  %v108 = vunpack.c.h.b16 %v102
  %v109 = vpack.c.b16 %v106, %v105
  %v110 = vpack.c.b16 %v108, %v107
  %113 = vst [vmem:[%s3] sm:$0xff] %v109
  %114 = vst [vmem:[%s3 + $0x8] sm:$0xff] %v110
  // Predicated region
  $region14: #{forward.13} parent=0 // pred_check
    _
  $region15: #{forward.13} parent=0 // pred_check_branch
    %116 = sbr.rel (0) target = $region17
  $region16: #{forward.13} parent=0 // pred_region
    _
  $region17: #{forward.13} parent=0 // pred_fallthru
    _
  // Predicated region
  $region18: #{forward.13} parent=0 // pred_check
    _
  $region19: #{forward.13} parent=0 // pred_check_branch
    %118 = sbr.rel (0) target = $region21
  $region20: #{forward.13} parent=0 // pred_region
    _
  $region21: #{forward.13} parent=0 // pred_fallthru
    _

// kernel: forward.15
$region0: #{forward.15}
  #allocation0 [shape = 'u32[]', space=smem, size = 0x4, offset = 0x4, fixed_abs, tag = 'smem constant byte address 0x4 - core index']
  #allocation1 [shape = 'u32[144,128]{1,0:T(1,128)}', space=vmem, size = 0x12000, scoped, tag = 'internal scratch']
  %s0 = inlined_call_operand.vmem [shape: f32[16,64], index: 0, kind: input, shape index: {}]
  %s1 = inlined_call_operand.vmem [shape: bf16[64,256], index: 1, kind: input, shape index: {}]
  %s2 = inlined_call_operand.vmem [shape: f32[1,256], index: 2, kind: input, shape index: {}]
  %s3 = inlined_call_operand.vmem [shape: bf16[16,256], index: 3, kind: output, shape index: {}]
  %s4 = sld [smem:[#allocation0]]
  $region22: #{forward.15} parent=0
    _
  %s6 = ssub.s32 1, %s4
  %s7 = scalar_select 0, %s6, %s4
  // Predicated region
  $region2: #{forward.15} parent=0 // pred_check
    _
  $region3: #{forward.15} parent=0 // pred_check_branch
    %9 = sbr.rel (0) target = $region5
  $region4: #{forward.15} parent=0 // pred_region
    _
  $region5: #{forward.15} parent=0 // pred_fallthru
    _
  // Predicated region
  $region6: #{forward.15} parent=0 // pred_check
    _
  $region7: #{forward.15} parent=0 // pred_check_branch
    %11 = sbr.rel (0) target = $region9
  $region8: #{forward.15} parent=0 // pred_region
    _
  $region9: #{forward.15} parent=0 // pred_fallthru
    _
  // Predicated region
  $region10: #{forward.15} parent=0 // pred_check
    _
  $region11: #{forward.15} parent=0 // pred_check_branch
    %13 = sbr.rel (0) target = $region13
  $region12: #{forward.15} parent=0 // pred_region
    _
  $region13: #{forward.15} parent=0 // pred_fallthru
    _
  %v15 = vld [vmem:[%s0] sm:$0xff]
  %v16 = vld [vmem:[%s0 + $0x8] sm:$0xff]
  %v17 = vpack.c.bf16 %v16, %v15
  %v18 = vld [vmem:[%s1] sm:$0xff]
  %v19 = vld [vmem:[%s1 + $0x8] sm:$0xff]
  %v20 = vld [vmem:[%s1 + $0x10] sm:$0xff]
  %v21 = vld [vmem:[%s1 + $0x18] sm:$0xff]
  %v22 = vld [vmem:[%s1 + $0x20] sm:$0xff]
  %v23 = vld [vmem:[%s1 + $0x28] sm:$0xff]
  %v24 = vld [vmem:[%s1 + $0x30] sm:$0xff]
  %v25 = vld [vmem:[%s1 + $0x38] sm:$0xff]
  %v26 = vld [vmem:[%s2] sm:$0x3]
  %v28 = vlaneseq
  %v29 = vshrl.u32 %v28, 7
  %v30 = vsub.s32 0, %v29
  %v31 = vrot.slane %v26, %v30
  %v32 = vlaneseq
  %v33 = vshrl.u32 %v32, 7
  %v34 = vsub.s32 1, %v33
  %v35 = vrot.slane %v26, %v34
  %v46 = vunpack.c.l.b16 %v18
  %v47 = vunpack.c.h.b16 %v18
  %v48 = vunpack.c.l.b16 %v19
  %v49 = vunpack.c.h.b16 %v19
  %v50 = vunpack.c.l.b16 %v20
  %v51 = vunpack.c.h.b16 %v20
  %v52 = vunpack.c.l.b16 %v21
  %v53 = vunpack.c.h.b16 %v21
  %v54 = vunpack.c.l.b16 %v22
  %v55 = vunpack.c.h.b16 %v22
  %v56 = vunpack.c.l.b16 %v23
  %v57 = vunpack.c.h.b16 %v23
  %v58 = vunpack.c.l.b16 %v24
  %v59 = vunpack.c.h.b16 %v24
  %v60 = vunpack.c.l.b16 %v25
  %v61 = vunpack.c.h.b16 %v25
  %v62 = vpack.c.b16 %v48, %v46
  %v63 = vpack.c.b16 %v49, %v47
  %v64 = vpack.c.b16 %v52, %v50
  %v65 = vpack.c.b16 %v53, %v51
  %v66 = vpack.c.b16 %v56, %v54
  %v67 = vpack.c.b16 %v57, %v55
  %v68 = vpack.c.b16 %v60, %v58
  %v69 = vpack.c.b16 %v61, %v59
  %vm78 = vcmask 523264
  %v80 = vsel %vm78, %v17, 0
  %82 = vmatprep.subr.bf16.mxu0 0
  %83 = vmatpush1.bf16.msra.mxu0 0
  %84 = vmatprep.subr.bf16.mxu0 0
  %85 = vmatpush1.bf16.msra.mxu0 0
  %86 = vmatprep.subr.bf16.mxu0 0
  %87 = vmatpush1.bf16.msra.mxu0 0
  %88 = vmatprep.subr.bf16.mxu0 0
  %89 = vmatpush1.bf16.msra.mxu0 0
  %90 = vmatprep.subr.bf16.mxu0 %v69
  %91 = vmatpush1.bf16.msra.mxu0 %v68
  %92 = vmatprep.subr.bf16.mxu0 %v67
  %93 = vmatpush1.bf16.msra.mxu0 %v66
  %94 = vmatprep.subr.bf16.mxu0 %v65
  %95 = vmatpush1.bf16.msra.mxu0 %v64
  %96 = vmatprep.subr.bf16.mxu0 %v63
  %97 = vmatpush1.bf16.msra.mxu0 %v62
  %98 = vmatprep.subr.bf16.mxu0 0
  %99 = vmatpush2.bf16.msra.mxu0 0
  %100 = vmatprep.subr.bf16.mxu0 0
  %101 = vmatpush2.bf16.msra.mxu0 0
  %102 = vmatprep.subr.bf16.mxu0 0
  %103 = vmatpush2.bf16.msra.mxu0 0
  %104 = vmatprep.subr.bf16.mxu0 0
  %105 = vmatpush2.bf16.msra.mxu0 0
  %106 = vmatprep.subr.bf16.mxu0 0
  %107 = vmatpush2.bf16.msra.mxu0 0
  %108 = vmatprep.subr.bf16.mxu0 0
  %109 = vmatpush2.bf16.msra.mxu0 0
  %110 = vmatprep.subr.bf16.mxu0 0
  %111 = vmatpush2.bf16.msra.mxu0 0
  %112 = vmatprep.subr.bf16.mxu0 0
  %113 = vmatpush2.bf16.msra.mxu0 0
  %114 = vmatprep.mubr.bf16.mxu0 0
  %115 = vmatmul.mubr.bf16.gmra.mxu0 %v80
  %v116 = vpop.f32.mrf.mxu0
  %v117 = vadd.f32 %v31, %v116
  %v118 = vpop.f32.mrf.mxu0
  %v119 = vadd.f32 %v35, %v118
  %v120 = vpop.f32.mrf.mxu0
  %v121 = vadd.f32 %v31, %v120
  %v122 = vpop.f32.mrf.mxu0
  %v123 = vadd.f32 %v35, %v122
  %124 = vdwg.mxu0
  %v125 = vpack.c.bf16 %v121, %v117
  %v126 = vpack.c.bf16 %v123, %v119
  %v129 = vunpack.c.l.b16 %v125
  %v130 = vunpack.c.l.b16 %v126
  %v131 = vunpack.c.h.b16 %v125
  %v132 = vunpack.c.h.b16 %v126
  %v133 = vpack.c.b16 %v130, %v129
  %v134 = vpack.c.b16 %v132, %v131
  %137 = vst [vmem:[%s3] sm:$0xff] %v133
  %138 = vst [vmem:[%s3 + $0x8] sm:$0xff] %v134
  // Predicated region
  $region14: #{forward.15} parent=0 // pred_check
    _
  $region15: #{forward.15} parent=0 // pred_check_branch
    %140 = sbr.rel (0) target = $region17
  $region16: #{forward.15} parent=0 // pred_region
    _
  $region17: #{forward.15} parent=0 // pred_fallthru
    _
  // Predicated region
  $region18: #{forward.15} parent=0 // pred_check
    _
  $region19: #{forward.15} parent=0 // pred_check_branch
    %142 = sbr.rel (0) target = $region21
  $region20: #{forward.15} parent=0 // pred_region
    _
  $region21: #{forward.15} parent=0 // pred_fallthru
    _

// kernel: squeeze.4
$region0: #{squeeze.4}
  %s0 = inlined_call_operand.vmem [shape: f32[4,1,16], index: 0, kind: input, shape index: {}]
  %s1 = inlined_call_operand.vmem [shape: f32[1,64], index: 1, kind: output, shape index: {}]
  $region1: #{squeeze.4} parent=0
    #allocation0 [shape = 'u8[4096]{0}', space=vmem, size = 0x1000, scoped, tag = 'scoped mem for output reshape']
    #allocation1 [shape = 'u8[4096]{0}', space=vmem, size = 0x1000, scoped, tag = 'scoped mem for input reshape']
    %s3 = sshll.u32 1, 4
    %s4 = ssub.s32 %s3, 1
    %v5 = vld [vmem:[%s0] sm:%s4]
    %6 = vst [vmem:[#allocation1] sm:%s4] %v5
    %v7 = vld [vmem:[#allocation1] sm:$0x1]
    %vm8 = vcmask 130048
    %9 = vst.msk [vmem:[#allocation0] sm:$0x1] %vm8, %v7
    %s10 = scalar_lea.vmem [#allocation1], 3
    %v11 = vld [vmem:[%s10] sm:$0x1]
    %12 = vrot.lane.b32.xlu0 %v11, 48
    %v13 = vpop.permute.xlu0 %12
    %vm14 = vcmask 523648
    %15 = vst.msk [vmem:[#allocation0] sm:$0x1] %vm14, %v13
    %s16 = scalar_lea.vmem [#allocation1], 2
    %v17 = vld [vmem:[%s16] sm:$0x1]
    %18 = vrot.lane.b32.xlu0 %v17, 32
    %v19 = vpop.permute.xlu0 %18
    %vm20 = vcmask 392448
    %21 = vst.msk [vmem:[#allocation0] sm:$0x1] %vm20, %v19
    %s22 = scalar_lea.vmem [#allocation1], 1
    %v23 = vld [vmem:[%s22] sm:$0x1]
    %24 = vrot.lane.b32.xlu0 %v23, 16
    %v25 = vpop.permute.xlu0 %24
    %vm26 = vcmask 261248
    %27 = vst.msk [vmem:[#allocation0] sm:$0x1] %vm26, %v25
    %s29 = sshll.u32 1, 1
    %s30 = ssub.s32 %s29, 1
    %v32 = vld [vmem:[#allocation0] sm:%s30]
    %s33 = sshll.u32 1, 1
    %s34 = ssub.s32 %s33, 1
    %35 = vst [vmem:[%s1] sm:%s34] %v32

// kernel: forward.14
$region0: #{forward.14}
  #allocation0 [shape = 'u32[]', space=smem, size = 0x4, offset = 0x4, fixed_abs, tag = 'smem constant byte address 0x4 - core index']
  #allocation1 [shape = 'u32[144,128]{1,0:T(1,128)}', space=vmem, size = 0x12000, scoped, tag = 'internal scratch']
  #allocation2 [shape = 'f32[2,32]{1,0:T(2,128)}', space=vmem, size = 0x400, scoped, tag = 'scratch operand']
  #allocation3 [shape = 'f32[2,32]{1,0:T(2,128)}', space=vmem, size = 0x400, scoped, tag = 'scratch operand']
  #allocation4 [shape = 'f32[2,32]{1,0:T(2,128)}', space=vmem, size = 0x400, scoped, tag = 'scratch operand']
  #allocation5 [shape = 'f32[2,32]{1,0:T(2,128)}', space=vmem, size = 0x400, scoped, tag = 'scratch operand']
  %s0 = inlined_call_operand.vmem [shape: bf16[8,2,256], index: 0, kind: input, shape index: {}, may-alias: {0,1}]
  %s1 = inlined_call_operand.vmem [shape: bf16[8,2,256], index: 1, kind: input, shape index: {}, may-alias: {0,1}]
  %s2 = inlined_call_operand.vmem [shape: f32[8,2,1], index: 2, kind: input, shape index: {}, may-alias: {2,3}]
  %s3 = inlined_call_operand.vmem [shape: f32[8,2,1], index: 3, kind: input, shape index: {}, may-alias: {2,3}]
  %s4 = inlined_call_operand.vmem [shape: bf16[32,128], index: 4, kind: input, shape index: {}]
  %s5 = inlined_call_operand.vmem [shape: bf16[32,128], index: 5, kind: input, shape index: {}]
  %s6 = inlined_call_operand.vmem [shape: f32[8,2,32], index: 6, kind: output, shape index: {0}]
  %s7 = inlined_call_operand.vmem [shape: f32[8,2,32], index: 7, kind: output, shape index: {1}]
  %s8 = inlined_call_operand.hbm [shape: f32[2,32], index: 8, kind: output, shape index: {2}]
  %s9 = inlined_call_operand.hbm [shape: f32[2,32], index: 9, kind: output, shape index: {3}]
  %10 = xla_tuple %s6, %s7, %s8, %s9
  %s11 = sld [smem:[#allocation0]]
  $region85: #{forward.14} parent=0
    _
  %s13 = ssub.s32 1, %s11
  %s14 = scalar_select 0, %s13, %s11
  $region1: #{forward.14} parent=0
    #allocation6 [shape = 'u8[1024]{0}', space=vmem, size = 0x400, scoped, tag = 'output window, operand 2, single buffered']
    #allocation7 [shape = 's32[2]{0}', space=sflag, size = 0x8, scoped, tag = 'scoped memory for forward.14']
    #allocation8 [shape = 'u8[1024]{0}', space=vmem, size = 0x400, scoped, tag = 'output window, operand 3, single buffered']
    #allocation9 [shape = 's32[1]{0}', space=sflag, size = 0x4, scoped, tag = 'scoped memory for forward.14']
    %15 = vsyncpa [#allocation7], 0
    %16 = vsyncpa [#allocation9], 0
    loop: start=0, step=1, limit=10
    $region2: #{forward.14} parent=1 // loop_pre_header
      _
    $region3: #{forward.14} parent=1 // loop_header
      %s18 = sphi 0, %s22
      %p19 = scmp.ge.s32.totalorder %s18, 10
      %s28 = sphi 0, %s30
      %s31 = sphi 0, %s28
      %s32 = sphi 0, %s31
      %s48 = sphi 0, %s32
      %s56 = sphi 0, %s58
      %s59 = sphi 0, %s56
      %s60 = sphi 0, %s59
      %s76 = sphi 0, %s60
      %s82 = sphi 0, %s84
      %s85 = sphi 0, %s82
      %s86 = sphi 0, %s85
      %s102 = sphi 0, %s86
      %s110 = sphi 0, %s112
      %s113 = sphi 0, %s110
      %s114 = sphi 0, %s113
      %s130 = sphi 0, %s114
      %s134 = sphi 0, %s134
      %s136 = sphi 0, %s134
      %s137 = sphi 0, %s136
      %s151 = sphi 0, %s137
      %s155 = sphi 0, %s155
      %s157 = sphi 0, %s155
      %s158 = sphi 0, %s157
      %s172 = sphi 0, %s158
      %s178 = sphi 0, %s180
      %s181 = sphi 0, %s178
      %s182 = sphi 0, %s181
      %s198 = sphi 0, %s182
      %s206 = sphi 0, %s208
      %s209 = sphi 0, %s206
      %s210 = sphi 0, %s209
      %s226 = sphi 0, %s210
      %s230 = sphi 0, %s230
      %s232 = sphi 0, %s230
      %s233 = sphi 0, %s232
      %s247 = sphi 0, %s233
      %s251 = sphi 0, %s251
      %s253 = sphi 0, %s251
      %s254 = sphi 0, %s253
      %s268 = sphi 0, %s254
    $region4: #{forward.14} parent=1 // loop_header_branch
      %21 = sbr.rel (%p19) target = $region8
    $region5: #{forward.14} parent=1 // loop_body
      %s23 = ssub.s32 %s18, 1
      %s24 = ssub.s32 %s18, 2
      %s25 = sadd.s32 %s18, 1
      %s26 = ssub.s32 %s18, %s25
      %p27 = scmp.eq.s32.totalorder %s26, 0
      %s29 = sadd.s32 %s28, 1
      %s30 = scalar_select %p27, %s28, %s29
      %p33 = pneg %p27
      %p34 = scmp.eq.s32.totalorder %s18, 7
      %p35 = por %p33, %p34
      %p36 = scmp.ne.s32.totalorder %s28, %s31
      %p37 = scmp.eq.s32.totalorder %s18, 0
      %p38 = por %p36, %p37
      %p39 = scmp.ne.s32.totalorder %s28, %s31
      %p40 = scmp.eq.s32.totalorder %s23, 7
      %p41 = por %p39, %p40
      %p42 = scmp.ne.s32.totalorder %s31, %s32
      %p43 = scmp.eq.s32.totalorder %s23, 0
      %p44 = por %p42, %p43
      %p45 = scmp.ne.s32.totalorder %s31, %s32
      %p46 = scmp.eq.s32.totalorder %s24, 7
      %p47 = por %p45, %p46
      %p49 = scmp.ne.s32.totalorder %s32, %s48
      %p50 = scmp.eq.s32.totalorder %s24, 0
      %p51 = por %p49, %p50
      %s52 = ssub.s32 7, %s18
      %s53 = ssub.s32 7, %s25
      %s54 = ssub.s32 %s52, %s53
      %p55 = scmp.eq.s32.totalorder %s54, 0
      %s57 = sadd.s32 %s56, 1
      %s58 = scalar_select %p55, %s56, %s57
      %p61 = pneg %p55
      %p62 = scmp.eq.s32.totalorder %s18, 7
      %p63 = por %p61, %p62
      %p64 = scmp.ne.s32.totalorder %s56, %s59
      %p65 = scmp.eq.s32.totalorder %s18, 0
      %p66 = por %p64, %p65
      %p67 = scmp.ne.s32.totalorder %s56, %s59
      %p68 = scmp.eq.s32.totalorder %s23, 7
      %p69 = por %p67, %p68
      %p70 = scmp.ne.s32.totalorder %s59, %s60
      %p71 = scmp.eq.s32.totalorder %s23, 0
      %p72 = por %p70, %p71
      %p73 = scmp.ne.s32.totalorder %s59, %s60
      %p74 = scmp.eq.s32.totalorder %s24, 7
      %p75 = por %p73, %p74
      %p77 = scmp.ne.s32.totalorder %s60, %s76
      %p78 = scmp.eq.s32.totalorder %s24, 0
      %p79 = por %p77, %p78
      %s80 = ssub.s32 %s18, %s25
      %p81 = scmp.eq.s32.totalorder %s80, 0
      %s83 = sadd.s32 %s82, 1
      %s84 = scalar_select %p81, %s82, %s83
      %p87 = pneg %p81
      %p88 = scmp.eq.s32.totalorder %s18, 7
      %p89 = por %p87, %p88
      %p90 = scmp.ne.s32.totalorder %s82, %s85
      %p91 = scmp.eq.s32.totalorder %s18, 0
      %p92 = por %p90, %p91
      %p93 = scmp.ne.s32.totalorder %s82, %s85
      %p94 = scmp.eq.s32.totalorder %s23, 7
      %p95 = por %p93, %p94
      %p96 = scmp.ne.s32.totalorder %s85, %s86
      %p97 = scmp.eq.s32.totalorder %s23, 0
      %p98 = por %p96, %p97
      %p99 = scmp.ne.s32.totalorder %s85, %s86
      %p100 = scmp.eq.s32.totalorder %s24, 7
      %p101 = por %p99, %p100
      %p103 = scmp.ne.s32.totalorder %s86, %s102
      %p104 = scmp.eq.s32.totalorder %s24, 0
      %p105 = por %p103, %p104
      %s106 = ssub.s32 7, %s18
      %s107 = ssub.s32 7, %s25
      %s108 = ssub.s32 %s106, %s107
      %p109 = scmp.eq.s32.totalorder %s108, 0
      %s111 = sadd.s32 %s110, 1
      %s112 = scalar_select %p109, %s110, %s111
      %p115 = pneg %p109
      %p116 = scmp.eq.s32.totalorder %s18, 7
      %p117 = por %p115, %p116
      %p118 = scmp.ne.s32.totalorder %s110, %s113
      %p119 = scmp.eq.s32.totalorder %s18, 0
      %p120 = por %p118, %p119
      %p121 = scmp.ne.s32.totalorder %s110, %s113
      %p122 = scmp.eq.s32.totalorder %s23, 7
      %p123 = por %p121, %p122
      %p124 = scmp.ne.s32.totalorder %s113, %s114
      %p125 = scmp.eq.s32.totalorder %s23, 0
      %p126 = por %p124, %p125
      %p127 = scmp.ne.s32.totalorder %s113, %s114
      %p128 = scmp.eq.s32.totalorder %s24, 7
      %p129 = por %p127, %p128
      %p131 = scmp.ne.s32.totalorder %s114, %s130
      %p132 = scmp.eq.s32.totalorder %s24, 0
      %p133 = por %p131, %p132
      %s135 = sadd.s32 %s134, 1
      %p138 = scmp.eq.s32.totalorder %s18, 7
      %p139 = scmp.ne.s32.totalorder %s134, %s136
      %p140 = scmp.eq.s32.totalorder %s18, 0
      %p141 = por %p139, %p140
      %p142 = scmp.ne.s32.totalorder %s134, %s136
      %p143 = scmp.eq.s32.totalorder %s23, 7
      %p144 = por %p142, %p143
      %p145 = scmp.ne.s32.totalorder %s136, %s137
      %p146 = scmp.eq.s32.totalorder %s23, 0
      %p147 = por %p145, %p146
      %p148 = scmp.ne.s32.totalorder %s136, %s137
      %p149 = scmp.eq.s32.totalorder %s24, 7
      %p150 = por %p148, %p149
      %p152 = scmp.ne.s32.totalorder %s137, %s151
      %p153 = scmp.eq.s32.totalorder %s24, 0
      %p154 = por %p152, %p153
      %s156 = sadd.s32 %s155, 1
      %p159 = scmp.eq.s32.totalorder %s18, 7
      %p160 = scmp.ne.s32.totalorder %s155, %s157
      %p161 = scmp.eq.s32.totalorder %s18, 0
      %p162 = por %p160, %p161
      %p163 = scmp.ne.s32.totalorder %s155, %s157
      %p164 = scmp.eq.s32.totalorder %s23, 7
      %p165 = por %p163, %p164
      %p166 = scmp.ne.s32.totalorder %s157, %s158
      %p167 = scmp.eq.s32.totalorder %s23, 0
      %p168 = por %p166, %p167
      %p169 = scmp.ne.s32.totalorder %s157, %s158
      %p170 = scmp.eq.s32.totalorder %s24, 7
      %p171 = por %p169, %p170
      %p173 = scmp.ne.s32.totalorder %s158, %s172
      %p174 = scmp.eq.s32.totalorder %s24, 0
      %p175 = por %p173, %p174
      %s176 = ssub.s32 %s18, %s25
      %p177 = scmp.eq.s32.totalorder %s176, 0
      %s179 = sadd.s32 %s178, 1
      %s180 = scalar_select %p177, %s178, %s179
      %p183 = pneg %p177
      %p184 = scmp.eq.s32.totalorder %s18, 7
      %p185 = por %p183, %p184
      %p186 = scmp.ne.s32.totalorder %s178, %s181
      %p187 = scmp.eq.s32.totalorder %s18, 0
      %p188 = por %p186, %p187
      %p189 = scmp.ne.s32.totalorder %s178, %s181
      %p190 = scmp.eq.s32.totalorder %s23, 7
      %p191 = por %p189, %p190
      %p192 = scmp.ne.s32.totalorder %s181, %s182
      %p193 = scmp.eq.s32.totalorder %s23, 0
      %p194 = por %p192, %p193
      %p195 = scmp.ne.s32.totalorder %s181, %s182
      %p196 = scmp.eq.s32.totalorder %s24, 7
      %p197 = por %p195, %p196
      %p199 = scmp.ne.s32.totalorder %s182, %s198
      %p200 = scmp.eq.s32.totalorder %s24, 0
      %p201 = por %p199, %p200
      %s202 = ssub.s32 7, %s18
      %s203 = ssub.s32 7, %s25
      %s204 = ssub.s32 %s202, %s203
      %p205 = scmp.eq.s32.totalorder %s204, 0
      %s207 = sadd.s32 %s206, 1
      %s208 = scalar_select %p205, %s206, %s207
      %p211 = pneg %p205
      %p212 = scmp.eq.s32.totalorder %s18, 7
      %p213 = por %p211, %p212
      %p214 = scmp.ne.s32.totalorder %s206, %s209
      %p215 = scmp.eq.s32.totalorder %s18, 0
      %p216 = por %p214, %p215
      %p217 = scmp.ne.s32.totalorder %s206, %s209
      %p218 = scmp.eq.s32.totalorder %s23, 7
      %p219 = por %p217, %p218
      %p220 = scmp.ne.s32.totalorder %s209, %s210
      %p221 = scmp.eq.s32.totalorder %s23, 0
      %p222 = por %p220, %p221
      %p223 = scmp.ne.s32.totalorder %s209, %s210
      %p224 = scmp.eq.s32.totalorder %s24, 7
      %p225 = por %p223, %p224
      %p227 = scmp.ne.s32.totalorder %s210, %s226
      %p228 = scmp.eq.s32.totalorder %s24, 0
      %p229 = por %p227, %p228
      %s231 = sadd.s32 %s230, 1
      %p234 = scmp.eq.s32.totalorder %s18, 7
      %p235 = scmp.ne.s32.totalorder %s230, %s232
      %p236 = scmp.eq.s32.totalorder %s18, 0
      %p237 = por %p235, %p236
      %p238 = scmp.ne.s32.totalorder %s230, %s232
      %p239 = scmp.eq.s32.totalorder %s23, 7
      %p240 = por %p238, %p239
      %p241 = scmp.ne.s32.totalorder %s232, %s233
      %p242 = scmp.eq.s32.totalorder %s23, 0
      %p243 = por %p241, %p242
      %p244 = scmp.ne.s32.totalorder %s232, %s233
      %p245 = scmp.eq.s32.totalorder %s24, 7
      %p246 = por %p244, %p245
      %p248 = scmp.ne.s32.totalorder %s233, %s247
      %p249 = scmp.eq.s32.totalorder %s24, 0
      %p250 = por %p248, %p249
      %s252 = sadd.s32 %s251, 1
      %p255 = scmp.eq.s32.totalorder %s18, 7
      %p256 = scmp.ne.s32.totalorder %s251, %s253
      %p257 = scmp.eq.s32.totalorder %s18, 0
      %p258 = por %p256, %p257
      %p259 = scmp.ne.s32.totalorder %s251, %s253
      %p260 = scmp.eq.s32.totalorder %s23, 7
      %p261 = por %p259, %p260
      %p262 = scmp.ne.s32.totalorder %s253, %s254
      %p263 = scmp.eq.s32.totalorder %s23, 0
      %p264 = por %p262, %p263
      %p265 = scmp.ne.s32.totalorder %s253, %s254
      %p266 = scmp.eq.s32.totalorder %s24, 7
      %p267 = por %p265, %p266
      %p269 = scmp.ne.s32.totalorder %s254, %s268
      %p270 = scmp.eq.s32.totalorder %s24, 0
      %p271 = por %p269, %p270
      %p272 = scmp.le.s32.totalorder 1, %s18
      %p273 = scmp.lt.s32.totalorder %s18, 9
      %p274 = pnand %p272, %p273
      %p275 = pneg %p274
      // Predicated region
      $region9: #{forward.14} parent=5 // pred_check
        _
      $region10: #{forward.14} parent=5 // pred_check_branch
        %277 = sbr.rel (%p274) target = $region12
      $region11: #{forward.14} parent=5 // pred_region
        %s278 = ssub.s32 %s18, 1
        // Predicated region
        $region13: #{forward.14} parent=11 // pred_check
          %p279 = pneg %p147
        $region14: #{forward.14} parent=11 // pred_check_branch
          %281 = sbr.rel (%p279) target = $region16
        $region15: #{forward.14} parent=11 // pred_region
          _
        $region16: #{forward.14} parent=11 // pred_fallthru
          _
        // Predicated region
        $region17: #{forward.14} parent=11 // pred_check
          %p282 = pneg %p168
        $region18: #{forward.14} parent=11 // pred_check_branch
          %284 = sbr.rel (%p282) target = $region20
        $region19: #{forward.14} parent=11 // pred_region
          _
        $region20: #{forward.14} parent=11 // pred_fallthru
          _
      $region12: #{forward.14} parent=5 // pred_fallthru
        _
      %p285 = scmp.lt.s32.totalorder %s18, 8
      // Predicated region
      $region21: #{forward.14} parent=5 // pred_check
        %p286 = pneg %p285
      $region22: #{forward.14} parent=5 // pred_check_branch
        %288 = sbr.rel (%p286) target = $region24
      $region23: #{forward.14} parent=5 // pred_region
        // Predicated region
        $region25: #{forward.14} parent=23 // pred_check
          %p289 = pneg %p38
        $region26: #{forward.14} parent=23 // pred_check_branch
          %291 = sbr.rel (%p289) target = $region28
        $region27: #{forward.14} parent=23 // pred_region
          %p292 = scmp.lt.s32.totalorder %s18, 7
          %s293 = scalar_select %p292, %s18, 7
          %s294 = smul.addr %s293, 2
          %s295 = scalar_lea.vmem %s0, %s294
        $region28: #{forward.14} parent=23 // pred_fallthru
          _
        // Predicated region
        $region29: #{forward.14} parent=23 // pred_check
          %p296 = pneg %p66
        $region30: #{forward.14} parent=23 // pred_check_branch
          %298 = sbr.rel (%p296) target = $region32
        $region31: #{forward.14} parent=23 // pred_region
          %s299 = ssub.s32 7, %s18
          %p300 = scmp.lt.s32.totalorder %s299, 7
          %s301 = scalar_select %p300, %s299, 7
          %s302 = smul.addr %s301, 2
          %s303 = scalar_lea.vmem %s1, %s302
          %s304 = ssub.s32 7, %s18
        $region32: #{forward.14} parent=23 // pred_fallthru
          _
        // Predicated region
        $region33: #{forward.14} parent=23 // pred_check
          %p305 = pneg %p92
        $region34: #{forward.14} parent=23 // pred_check_branch
          %307 = sbr.rel (%p305) target = $region36
        $region35: #{forward.14} parent=23 // pred_region
          %p308 = scmp.lt.s32.totalorder %s18, 7
          %s309 = scalar_select %p308, %s18, 7
          %s310 = smul.addr %s309, 2
          %s311 = scalar_lea.vmem %s2, %s310
        $region36: #{forward.14} parent=23 // pred_fallthru
          _
        // Predicated region
        $region37: #{forward.14} parent=23 // pred_check
          %p312 = pneg %p120
        $region38: #{forward.14} parent=23 // pred_check_branch
          %314 = sbr.rel (%p312) target = $region40
        $region39: #{forward.14} parent=23 // pred_region
          %s315 = ssub.s32 7, %s18
          %p316 = scmp.lt.s32.totalorder %s315, 7
          %s317 = scalar_select %p316, %s315, 7
          %s318 = smul.addr %s317, 2
          %s319 = scalar_lea.vmem %s3, %s318
          %s320 = ssub.s32 7, %s18
        $region40: #{forward.14} parent=23 // pred_fallthru
          _
      $region24: #{forward.14} parent=5 // pred_fallthru
        _
      %p321 = scmp.le.s32.totalorder 1, %s18
      %p322 = scmp.lt.s32.totalorder %s18, 9
      %p323 = pnand %p321, %p322
      %p324 = pneg %p323
      // Predicated region
      $region41: #{forward.14} parent=5 // pred_check
        _
      $region42: #{forward.14} parent=5 // pred_check_branch
        %326 = sbr.rel (%p323) target = $region44
      $region43: #{forward.14} parent=5 // pred_region
        %s327 = ssub.s32 %s18, 1
        %p328 = scmp.lt.s32.totalorder %s23, 7
        %s329 = scalar_select %p328, %s23, 7
        %s330 = smul.addr %s329, 2
        %s331 = scalar_lea.vmem %s0, %s330
        %p332 = pneg %p44
        %p333 = pneg %p41
        %s334 = ssub.s32 7, %s23
        %p335 = scmp.lt.s32.totalorder %s334, 7
        %s336 = scalar_select %p335, %s334, 7
        %s337 = smul.addr %s336, 2
        %s338 = scalar_lea.vmem %s1, %s337
        %p339 = pneg %p72
        %p340 = pneg %p69
        %p341 = scmp.lt.s32.totalorder %s23, 7
        %s342 = scalar_select %p341, %s23, 7
        %s343 = smul.addr %s342, 2
        %s344 = scalar_lea.vmem %s2, %s343
        %p345 = pneg %p98
        %p346 = pneg %p95
        %s347 = ssub.s32 7, %s23
        %p348 = scmp.lt.s32.totalorder %s347, 7
        %s349 = scalar_select %p348, %s347, 7
        %s350 = smul.addr %s349, 2
        %s351 = scalar_lea.vmem %s3, %s350
        %p352 = pneg %p126
        %p353 = pneg %p123
        %p354 = pneg %p147
        %p355 = pneg %p144
        %p356 = pneg %p168
        %p357 = pneg %p165
        %p358 = pneg %p194
        %p359 = pneg %p191
        %p360 = scmp.lt.s32.totalorder %s23, 7
        %s361 = scalar_select %p360, %s23, 7
        %s362 = smul.addr %s361, 2
        %s363 = scalar_lea.vmem %s6, %s362
        %p364 = pneg %p222
        %p365 = pneg %p219
        %s366 = ssub.s32 7, %s23
        %p367 = scmp.lt.s32.totalorder %s366, 7
        %s368 = scalar_select %p367, %s366, 7
        %s369 = smul.addr %s368, 2
        %s370 = scalar_lea.vmem %s7, %s369
        %p371 = pneg %p243
        %p372 = pneg %p240
        %p373 = pneg %p264
        %p374 = pneg %p261
        %p375 = scmp.lt.s32.totalorder %s23, 7
        %s376 = scalar_select %p375, %s23, 7
        %s377 = smul.addr %s376, 2
        %s378 = scalar_lea.vmem %s0, %s377
        %s379 = ssub.s32 7, %s23
        %p380 = scmp.lt.s32.totalorder %s379, 7
        %s381 = scalar_select %p380, %s379, 7
        %s382 = smul.addr %s381, 2
        %s383 = scalar_lea.vmem %s1, %s382
        %s384 = ssub.s32 7, %s23
        %p385 = scmp.lt.s32.totalorder %s23, 7
        %s386 = scalar_select %p385, %s23, 7
        %s387 = smul.addr %s386, 2
        %s388 = scalar_lea.vmem %s2, %s387
        %s389 = ssub.s32 7, %s23
        %p390 = scmp.lt.s32.totalorder %s389, 7
        %s391 = scalar_select %p390, %s389, 7
        %s392 = smul.addr %s391, 2
        %s393 = scalar_lea.vmem %s3, %s392
        %s394 = ssub.s32 7, %s23
        %p395 = scmp.lt.s32.totalorder %s23, 7
        %s396 = scalar_select %p395, %s23, 7
        %s397 = smul.addr %s396, 2
        %s398 = scalar_lea.vmem %s6, %s397
        %s399 = ssub.s32 7, %s23
        %p400 = scmp.lt.s32.totalorder %s399, 7
        %s401 = scalar_select %p400, %s399, 7
        %s402 = smul.addr %s401, 2
        %s403 = scalar_lea.vmem %s7, %s402
        %s404 = ssub.s32 7, %s23
        %p406 = scmp.eq.s32.totalorder %s23, 0
        // Predicated region
        $region45: #{forward.14} parent=43 // pred_check
          %p407 = pneg %p406
        $region46: #{forward.14} parent=43 // pred_check_branch
          %409 = sbr.rel (%p407) target = $region48
        $region47: #{forward.14} parent=43 // pred_region
          %vm410 = vcmask 254976
          %411 = vst.msk [vmem:[#allocation2] sm:$0x3] %vm410, 0.0
          %412 = vst.msk [vmem:[#allocation3] sm:$0x3] %vm410, 0.0
          %413 = vst.msk [vmem:[#allocation4] sm:$0x3] %vm410, 0.0
          %414 = vst.msk [vmem:[#allocation5] sm:$0x3] %vm410, 0.0
        $region48: #{forward.14} parent=43 // pred_fallthru
          _
        %v415 = vld [vmem:[%s378] sm:$0x1]
        %v416 = vld [vmem:[%s388] sm:$0x3]
        %v417 = vunpack.c.l.bf16 %v415
        %v418 = vld [vmem:[#allocation2] sm:$0x3]
        %v419 = vpack.c.bf16 %v418, %v418
        %v420 = vld [vmem:[%s4] sm:$0xf]
        %v421 = vld [vmem:[%s4 + $0x4] sm:$0xf]
        %v422 = vld [vmem:[%s4 + $0x8] sm:$0xf]
        %v423 = vld [vmem:[%s4 + $0xc] sm:$0xf]
        %v428 = vunpack.c.l.b16 %v420
        %v429 = vunpack.c.l.b16 %v421
        %v430 = vunpack.c.l.b16 %v422
        %v431 = vunpack.c.l.b16 %v423
        %v432 = vpack.c.b16 %v429, %v428
        %v433 = vpack.c.b16 %v431, %v430
        %vm436 = vcmask 261120
        %v438 = vsel %vm436, %v419, 0
        %440 = vmatprep.subr.bf16.mxu0 0
        %441 = vmatpush1.bf16.msra.mxu0 0
        %442 = vmatprep.subr.bf16.mxu0 0
        %443 = vmatpush1.bf16.msra.mxu0 0
        %444 = vmatprep.subr.bf16.mxu0 0
        %445 = vmatpush1.bf16.msra.mxu0 0
        %446 = vmatprep.subr.bf16.mxu0 0
        %447 = vmatpush1.bf16.msra.mxu0 0
        %448 = vmatprep.subr.bf16.mxu0 0
        %449 = vmatpush1.bf16.msra.mxu0 0
        %450 = vmatprep.subr.bf16.mxu0 0
        %451 = vmatpush1.bf16.msra.mxu0 0
        %452 = vmatprep.subr.bf16.mxu0 0
        %453 = vmatpush1.bf16.msra.mxu0 %v433
        %454 = vmatprep.subr.bf16.mxu0 0
        %455 = vmatpush1.bf16.msra.mxu0 %v432
        %456 = vmatprep.subr.bf16.mxu0 0
        %457 = vmatpush2.bf16.msra.mxu0 0
        %458 = vmatprep.subr.bf16.mxu0 0
        %459 = vmatpush2.bf16.msra.mxu0 0
        %460 = vmatprep.subr.bf16.mxu0 0
        %461 = vmatpush2.bf16.msra.mxu0 0
        %462 = vmatprep.subr.bf16.mxu0 0
        %463 = vmatpush2.bf16.msra.mxu0 0
        %464 = vmatprep.subr.bf16.mxu0 0
        %465 = vmatpush2.bf16.msra.mxu0 0
        %466 = vmatprep.subr.bf16.mxu0 0
        %467 = vmatpush2.bf16.msra.mxu0 0
        %468 = vmatprep.subr.bf16.mxu0 0
        %469 = vmatpush2.bf16.msra.mxu0 0
        %470 = vmatprep.subr.bf16.mxu0 0
        %471 = vmatpush2.bf16.msra.mxu0 0
        %472 = vmatprep.mubr.bf16.mxu0 0
        %473 = vmatmul.mubr.bf16.gmra.mxu0 %v438
        %v474 = vpop.f32.mrf.mxu0
        %v475 = vadd.f32 0.0, %v474
        %v476 = vpop.f32.mrf.mxu0
        %v477 = vpop.f32.mrf.mxu0
        %v478 = vpop.f32.mrf.mxu0
        %479 = vdwg.mxu0
        %v480 = vadd.f32 %v417, %v475
        %v481 = vxor.u32 %v480, 2147483648
        %v482 = vmul.f32 %v481, 1.442695
        %v483 = vpow.pop %v482
        %v484 = vadd.f32 %v483, 1.0
        %v485 = vrcp.pop %v484
        %v486 = vmul.f32 1.0, %v485
        %v487 = vtanh.pop %v480
        %v488 = vld [vmem:[#allocation3] sm:$0x3]
        %v491 = vunpack.c.l.s4 1983009808
        %v492 = vunpack.c.0.s8 %v491
        %v493 = vlaneseq
        %v494 = vshrl.u32 %v493, 7
        %v495 = vsub.s32 %v492, %v494
        %v496 = vrot.slane %v488, %v495
        %497 = vrot.lane.b32.xlu0 %v496, 32
        %v498 = vpop.permute.xlu0 %497
        %v500 = vmul.f32 %v486, %v498
        %502 = vrot.lane.b32.xlu0 %v487, 64
        %v503 = vpop.permute.xlu0 %502
        %v505 = vmul.f32 %v486, %v503
        %507 = vrot.lane.b32.xlu0 %v505, 32
        %v508 = vpop.permute.xlu0 %507
        %v510 = vadd.f32 %v500, %v508
        %v511 = vtanh.pop %v510
        %513 = vrot.lane.b32.xlu0 %v511, 64
        %v514 = vpop.permute.xlu0 %513
        %v516 = vmul.f32 %v486, %v514
        %518 = vset.pattern.permute.xlu0 0
        %519 = vperm.xlu0 %518, %v416
        %v520 = vpop.permute.xlu0 %519
        %v524 = vunpack.c.l.s4 1983009808
        %v525 = vunpack.c.0.s8 %v524
        %v526 = vlaneseq
        %v527 = vshrl.u32 %v526, 7
        %v528 = vsub.s32 %v525, %v527
        %v529 = vrot.slane %v516, %v528
        %530 = vrot.lane.b32.xlu0 %v529, 32
        %v531 = vpop.permute.xlu0 %530
        %v533 = vmul.f32 %v520, %v531
        %v534 = vsub.f32 1.0, %v416
        %536 = vset.pattern.permute.xlu0 0
        %537 = vperm.xlu0 %536, %v534
        %v538 = vpop.permute.xlu0 %537
        %v540 = vmul.f32 %v538, %v418
        %v541 = vadd.f32 %v533, %v540
        %v544 = vunpack.c.l.s4 1983009808
        %v545 = vunpack.c.0.s8 %v544
        %v546 = vlaneseq
        %v547 = vshrl.u32 %v546, 7
        %v548 = vsub.s32 %v545, %v547
        %v549 = vrot.slane %v510, %v548
        %550 = vrot.lane.b32.xlu0 %v549, 96
        %v551 = vpop.permute.xlu0 %550
        %v553 = vmul.f32 %v520, %v551
        %v554 = vmul.f32 %v538, %v488
        %v555 = vadd.f32 %v553, %v554
        %vm556 = vcmask 254976
        %557 = vst.msk [vmem:[#allocation3] sm:$0x3] %vm556, %v555
        %558 = vst.msk [vmem:[#allocation2] sm:$0x3] %vm556, %v541
        %v559 = vmul.f32 %v541, %v520
        %560 = vst.msk [vmem:[%s398] sm:$0x3] %vm556, %v559
        %v561 = vld [vmem:[%s383 + $0x1] sm:$0x1]
        %v562 = vld [vmem:[%s393] sm:$0x3]
        %v563 = vunpack.c.l.bf16 %v561
        %v564 = vld [vmem:[#allocation4] sm:$0x3]
        %v565 = vpack.c.bf16 %v564, %v564
        %v566 = vld [vmem:[%s5] sm:$0xf]
        %v567 = vld [vmem:[%s5 + $0x4] sm:$0xf]
        %v568 = vld [vmem:[%s5 + $0x8] sm:$0xf]
        %v569 = vld [vmem:[%s5 + $0xc] sm:$0xf]
        %v574 = vunpack.c.l.b16 %v566
        %v575 = vunpack.c.l.b16 %v567
        %v576 = vunpack.c.l.b16 %v568
        %v577 = vunpack.c.l.b16 %v569
        %v578 = vpack.c.b16 %v575, %v574
        %v579 = vpack.c.b16 %v577, %v576
        %v583 = vsel %vm436, %v565, 0
        %585 = vmatprep.subr.bf16.mxu0 0
        %586 = vmatpush1.bf16.msra.mxu0 0
        %587 = vmatprep.subr.bf16.mxu0 0
        %588 = vmatpush1.bf16.msra.mxu0 0
        %589 = vmatprep.subr.bf16.mxu0 0
        %590 = vmatpush1.bf16.msra.mxu0 0
        %591 = vmatprep.subr.bf16.mxu0 0
        %592 = vmatpush1.bf16.msra.mxu0 0
        %593 = vmatprep.subr.bf16.mxu0 0
        %594 = vmatpush1.bf16.msra.mxu0 0
        %595 = vmatprep.subr.bf16.mxu0 0
        %596 = vmatpush1.bf16.msra.mxu0 0
        %597 = vmatprep.subr.bf16.mxu0 0
        %598 = vmatpush1.bf16.msra.mxu0 %v579
        %599 = vmatprep.subr.bf16.mxu0 0
        %600 = vmatpush1.bf16.msra.mxu0 %v578
        %601 = vmatprep.subr.bf16.mxu0 0
        %602 = vmatpush2.bf16.msra.mxu0 0
        %603 = vmatprep.subr.bf16.mxu0 0
        %604 = vmatpush2.bf16.msra.mxu0 0
        %605 = vmatprep.subr.bf16.mxu0 0
        %606 = vmatpush2.bf16.msra.mxu0 0
        %607 = vmatprep.subr.bf16.mxu0 0
        %608 = vmatpush2.bf16.msra.mxu0 0
        %609 = vmatprep.subr.bf16.mxu0 0
        %610 = vmatpush2.bf16.msra.mxu0 0
        %611 = vmatprep.subr.bf16.mxu0 0
        %612 = vmatpush2.bf16.msra.mxu0 0
        %613 = vmatprep.subr.bf16.mxu0 0
        %614 = vmatpush2.bf16.msra.mxu0 0
        %615 = vmatprep.subr.bf16.mxu0 0
        %616 = vmatpush2.bf16.msra.mxu0 0
        %617 = vmatprep.mubr.bf16.mxu0 0
        %618 = vmatmul.mubr.bf16.gmra.mxu0 %v583
        %v619 = vpop.f32.mrf.mxu0
        %v620 = vadd.f32 0.0, %v619
        %v621 = vpop.f32.mrf.mxu0
        %v622 = vpop.f32.mrf.mxu0
        %v623 = vpop.f32.mrf.mxu0
        %624 = vdwg.mxu0
        %v625 = vadd.f32 %v563, %v620
        %v626 = vxor.u32 %v625, 2147483648
        %v627 = vmul.f32 %v626, 1.442695
        %v628 = vpow.pop %v627
        %v629 = vadd.f32 %v628, 1.0
        %v630 = vrcp.pop %v629
        %v631 = vmul.f32 1.0, %v630
        %v632 = vtanh.pop %v625
        %v633 = vld [vmem:[#allocation5] sm:$0x3]
        %v636 = vunpack.c.l.s4 1983009808
        %v637 = vunpack.c.0.s8 %v636
        %v638 = vlaneseq
        %v639 = vshrl.u32 %v638, 7
        %v640 = vsub.s32 %v637, %v639
        %v641 = vrot.slane %v633, %v640
        %642 = vrot.lane.b32.xlu0 %v641, 32
        %v643 = vpop.permute.xlu0 %642
        %v645 = vmul.f32 %v631, %v643
        %647 = vrot.lane.b32.xlu0 %v632, 64
        %v648 = vpop.permute.xlu0 %647
        %v650 = vmul.f32 %v631, %v648
        %652 = vrot.lane.b32.xlu0 %v650, 32
        %v653 = vpop.permute.xlu0 %652
        %v655 = vadd.f32 %v645, %v653
        %v656 = vtanh.pop %v655
        %658 = vrot.lane.b32.xlu0 %v656, 64
        %v659 = vpop.permute.xlu0 %658
        %v661 = vmul.f32 %v631, %v659
        %663 = vset.pattern.permute.xlu0 0
        %664 = vperm.xlu0 %663, %v562
        %v665 = vpop.permute.xlu0 %664
        %v669 = vunpack.c.l.s4 1983009808
        %v670 = vunpack.c.0.s8 %v669
        %v671 = vlaneseq
        %v672 = vshrl.u32 %v671, 7
        %v673 = vsub.s32 %v670, %v672
        %v674 = vrot.slane %v661, %v673
        %675 = vrot.lane.b32.xlu0 %v674, 32
        %v676 = vpop.permute.xlu0 %675
        %v678 = vmul.f32 %v665, %v676
        %v679 = vsub.f32 1.0, %v562
        %681 = vset.pattern.permute.xlu0 0
        %682 = vperm.xlu0 %681, %v679
        %v683 = vpop.permute.xlu0 %682
        %v685 = vmul.f32 %v683, %v564
        %v686 = vadd.f32 %v678, %v685
        %v689 = vunpack.c.l.s4 1983009808
        %v690 = vunpack.c.0.s8 %v689
        %v691 = vlaneseq
        %v692 = vshrl.u32 %v691, 7
        %v693 = vsub.s32 %v690, %v692
        %v694 = vrot.slane %v655, %v693
        %695 = vrot.lane.b32.xlu0 %v694, 96
        %v696 = vpop.permute.xlu0 %695
        %v698 = vmul.f32 %v665, %v696
        %v699 = vmul.f32 %v683, %v633
        %v700 = vadd.f32 %v698, %v699
        %701 = vst.msk [vmem:[#allocation5] sm:$0x3] %vm556, %v700
        %702 = vst.msk [vmem:[#allocation4] sm:$0x3] %vm556, %v686
        %v703 = vmul.f32 %v686, %v665
        %704 = vst.msk [vmem:[%s403] sm:$0x3] %vm556, %v703
        %v705 = vld [vmem:[#allocation2] sm:$0x3]
        %706 = vst.msk [vmem:[#allocation6] sm:$0x3] %vm556, %v705
        %v707 = vld [vmem:[#allocation4] sm:$0x3]
        %708 = vst.msk [vmem:[#allocation8] sm:$0x3] %vm556, %v707
        %p709 = scmp.lt.s32.totalorder %s23, 7
        %s710 = scalar_select %p709, %s23, 7
        %s711 = smul.addr %s710, 2
        %s712 = scalar_lea.vmem %s6, %s711
        %s713 = ssub.s32 7, %s23
        %p714 = scmp.lt.s32.totalorder %s713, 7
        %s715 = scalar_select %p714, %s713, 7
        %s716 = smul.addr %s715, 2
        %s717 = scalar_lea.vmem %s7, %s716
        // Predicated region
        $region49: #{forward.14} parent=43 // pred_check
          %p718 = pneg %p191
        $region50: #{forward.14} parent=43 // pred_check_branch
          %720 = sbr.rel (%p718) target = $region52
        $region51: #{forward.14} parent=43 // pred_region
          _
        $region52: #{forward.14} parent=43 // pred_fallthru
          _
        // Predicated region
        $region53: #{forward.14} parent=43 // pred_check
          %p721 = pneg %p219
        $region54: #{forward.14} parent=43 // pred_check_branch
          %723 = sbr.rel (%p721) target = $region56
        $region55: #{forward.14} parent=43 // pred_region
          %s724 = ssub.s32 7, %s23
        $region56: #{forward.14} parent=43 // pred_fallthru
          _
        // Predicated region
        $region57: #{forward.14} parent=43 // pred_check
          %p725 = pneg %p240
        $region58: #{forward.14} parent=43 // pred_check_branch
          %727 = sbr.rel (%p725) target = $region60
        $region59: #{forward.14} parent=43 // pred_region
          %s729 = ssub.s32 32, 32
          %730 = vsyncadd [#allocation7], %s729
          %s732 = sshll.u32 [#allocation6], 4
          %s733 = int_to_ptr.vmem [resolvable:$true] %s732
          %735 = dma.vmem_to_hbm [thread:$0]  %s733, 32, %s8, [#allocation7]
        $region60: #{forward.14} parent=43 // pred_fallthru
          _
        // Predicated region
        $region61: #{forward.14} parent=43 // pred_check
          %p736 = pneg %p261
        $region62: #{forward.14} parent=43 // pred_check_branch
          %738 = sbr.rel (%p736) target = $region64
        $region63: #{forward.14} parent=43 // pred_region
          %s740 = ssub.s32 32, 32
          %741 = vsyncadd [#allocation9], %s740
          %s743 = sshll.u32 [#allocation8], 4
          %s744 = int_to_ptr.vmem [resolvable:$true] %s743
          %746 = dma.vmem_to_hbm [thread:$0]  %s744, 32, %s9, [#allocation9]
        $region64: #{forward.14} parent=43 // pred_fallthru
          _
        // Predicated region
        $region65: #{forward.14} parent=43 // pred_check
          %p747 = pneg %p240
        $region66: #{forward.14} parent=43 // pred_check_branch
          %749 = sbr.rel (%p747) target = $region68
        $region67: #{forward.14} parent=43 // pred_region
          %750 = dma.done [#allocation7], 32
        $region68: #{forward.14} parent=43 // pred_fallthru
          _
        // Predicated region
        $region69: #{forward.14} parent=43 // pred_check
          %p751 = pneg %p261
        $region70: #{forward.14} parent=43 // pred_check_branch
          %753 = sbr.rel (%p751) target = $region72
        $region71: #{forward.14} parent=43 // pred_region
          %754 = dma.done [#allocation9], 32
        $region72: #{forward.14} parent=43 // pred_fallthru
          _
      $region44: #{forward.14} parent=5 // pred_fallthru
        _
      %p755 = scmp.le.s32.totalorder 2, %s18
      // Predicated region
      $region73: #{forward.14} parent=5 // pred_check
        %p756 = pneg %p755
      $region74: #{forward.14} parent=5 // pred_check_branch
        %758 = sbr.rel (%p756) target = $region76
      $region75: #{forward.14} parent=5 // pred_region
        %s759 = ssub.s32 %s18, 2
        // Predicated region
        $region77: #{forward.14} parent=75 // pred_check
          %p760 = pneg %p197
        $region78: #{forward.14} parent=75 // pred_check_branch
          %762 = sbr.rel (%p760) target = $region80
        $region79: #{forward.14} parent=75 // pred_region
          %p763 = scmp.lt.s32.totalorder %s24, 7
          %s764 = scalar_select %p763, %s24, 7
          %s765 = smul.addr %s764, 2
          %s766 = scalar_lea.vmem %s6, %s765
        $region80: #{forward.14} parent=75 // pred_fallthru
          _
        // Predicated region
        $region81: #{forward.14} parent=75 // pred_check
          %p767 = pneg %p225
        $region82: #{forward.14} parent=75 // pred_check_branch
          %769 = sbr.rel (%p767) target = $region84
        $region83: #{forward.14} parent=75 // pred_region
          %s770 = ssub.s32 7, %s24
          %p771 = scmp.lt.s32.totalorder %s770, 7
          %s772 = scalar_select %p771, %s770, 7
          %s773 = smul.addr %s772, 2
          %s774 = scalar_lea.vmem %s7, %s773
        $region84: #{forward.14} parent=75 // pred_fallthru
          _
      $region76: #{forward.14} parent=5 // pred_fallthru
        _
    $region6: #{forward.14} parent=1 // loop_footer
      %s22 = sadd.s32 1, %s18
    $region7: #{forward.14} parent=1 // loop_footer_branch
      %17 = sbr.rel target = $region3
    $region8: #{forward.14} parent=1 // loop_exit
      _
    %775 = vsyncpa [#allocation7], 1
    %s776 = scalar_lea.sflag [#allocation7], 1
    %777 = vsyncpa %s776, 1
    %778 = vsyncpa [#allocation9], 1

// kernel: forward.17
$region0: #{forward.17}
  #allocation0 [shape = 'u32[]', space=smem, size = 0x4, offset = 0x4, fixed_abs, tag = 'smem constant byte address 0x4 - core index']
  #allocation1 [shape = 'u32[144,128]{1,0:T(1,128)}', space=vmem, size = 0x12000, scoped, tag = 'internal scratch']
  %s0 = inlined_call_operand.vmem [shape: f32[16,64], index: 0, kind: input, shape index: {}]
  %s1 = inlined_call_operand.vmem [shape: bf16[64,96], index: 1, kind: input, shape index: {}]
  %s2 = inlined_call_operand.vmem [shape: f32[1,96], index: 2, kind: input, shape index: {}]
  %s3 = inlined_call_operand.vmem [shape: bf16[16,96], index: 3, kind: output, shape index: {}]
  %s4 = sld [smem:[#allocation0]]
  $region22: #{forward.17} parent=0
    _
  %s6 = ssub.s32 1, %s4
  %s7 = scalar_select 0, %s6, %s4
  // Predicated region
  $region2: #{forward.17} parent=0 // pred_check
    _
  $region3: #{forward.17} parent=0 // pred_check_branch
    %9 = sbr.rel (0) target = $region5
  $region4: #{forward.17} parent=0 // pred_region
    _
  $region5: #{forward.17} parent=0 // pred_fallthru
    _
  // Predicated region
  $region6: #{forward.17} parent=0 // pred_check
    _
  $region7: #{forward.17} parent=0 // pred_check_branch
    %11 = sbr.rel (0) target = $region9
  $region8: #{forward.17} parent=0 // pred_region
    _
  $region9: #{forward.17} parent=0 // pred_fallthru
    _
  // Predicated region
  $region10: #{forward.17} parent=0 // pred_check
    _
  $region11: #{forward.17} parent=0 // pred_check_branch
    %13 = sbr.rel (0) target = $region13
  $region12: #{forward.17} parent=0 // pred_region
    _
  $region13: #{forward.17} parent=0 // pred_fallthru
    _
  %v15 = vld [vmem:[%s0] sm:$0xff]
  %v16 = vld [vmem:[%s0 + $0x8] sm:$0xff]
  %v17 = vpack.c.bf16 %v16, %v15
  %v18 = vld [vmem:[%s1] sm:$0xf]
  %v19 = vld [vmem:[%s1 + $0x4] sm:$0xf]
  %v20 = vld [vmem:[%s1 + $0x8] sm:$0xf]
  %v21 = vld [vmem:[%s1 + $0xc] sm:$0xf]
  %v22 = vld [vmem:[%s1 + $0x10] sm:$0xf]
  %v23 = vld [vmem:[%s1 + $0x14] sm:$0xf]
  %v24 = vld [vmem:[%s1 + $0x18] sm:$0xf]
  %v25 = vld [vmem:[%s1 + $0x1c] sm:$0xf]
  %v26 = vld [vmem:[%s2] sm:$0x1]
  %v28 = vlaneseq
  %v29 = vshrl.u32 %v28, 7
  %v30 = vsub.s32 0, %v29
  %v31 = vrot.slane %v26, %v30
  %v41 = vunpack.c.l.b16 %v18
  %v42 = vunpack.c.l.b16 %v19
  %v43 = vunpack.c.l.b16 %v20
  %v44 = vunpack.c.l.b16 %v21
  %v45 = vunpack.c.l.b16 %v22
  %v46 = vunpack.c.l.b16 %v23
  %v47 = vunpack.c.l.b16 %v24
  %v48 = vunpack.c.l.b16 %v25
  %v49 = vpack.c.b16 %v42, %v41
  %v50 = vpack.c.b16 %v44, %v43
  %v51 = vpack.c.b16 %v46, %v45
  %v52 = vpack.c.b16 %v48, %v47
  %vm57 = vcmask 523264
  %v59 = vsel %vm57, %v17, 0
  %61 = vmatprep.subr.bf16.mxu0 0
  %62 = vmatpush1.bf16.msra.mxu0 0
  %63 = vmatprep.subr.bf16.mxu0 0
  %64 = vmatpush1.bf16.msra.mxu0 0
  %65 = vmatprep.subr.bf16.mxu0 0
  %66 = vmatpush1.bf16.msra.mxu0 0
  %67 = vmatprep.subr.bf16.mxu0 0
  %68 = vmatpush1.bf16.msra.mxu0 0
  %69 = vmatprep.subr.bf16.mxu0 0
  %70 = vmatpush1.bf16.msra.mxu0 %v52
  %71 = vmatprep.subr.bf16.mxu0 0
  %72 = vmatpush1.bf16.msra.mxu0 %v51
  %73 = vmatprep.subr.bf16.mxu0 0
  %74 = vmatpush1.bf16.msra.mxu0 %v50
  %75 = vmatprep.subr.bf16.mxu0 0
  %76 = vmatpush1.bf16.msra.mxu0 %v49
  %77 = vmatprep.subr.bf16.mxu0 0
  %78 = vmatpush2.bf16.msra.mxu0 0
  %79 = vmatprep.subr.bf16.mxu0 0
  %80 = vmatpush2.bf16.msra.mxu0 0
  %81 = vmatprep.subr.bf16.mxu0 0
  %82 = vmatpush2.bf16.msra.mxu0 0
  %83 = vmatprep.subr.bf16.mxu0 0
  %84 = vmatpush2.bf16.msra.mxu0 0
  %85 = vmatprep.subr.bf16.mxu0 0
  %86 = vmatpush2.bf16.msra.mxu0 0
  %87 = vmatprep.subr.bf16.mxu0 0
  %88 = vmatpush2.bf16.msra.mxu0 0
  %89 = vmatprep.subr.bf16.mxu0 0
  %90 = vmatpush2.bf16.msra.mxu0 0
  %91 = vmatprep.subr.bf16.mxu0 0
  %92 = vmatpush2.bf16.msra.mxu0 0
  %93 = vmatprep.mubr.bf16.mxu0 0
  %94 = vmatmul.mubr.bf16.gmra.mxu0 %v59
  %v95 = vpop.f32.mrf.mxu0
  %v96 = vadd.f32 %v31, %v95
  %v97 = vpop.f32.mrf.mxu0
  %v98 = vpop.f32.mrf.mxu0
  %v99 = vadd.f32 %v31, %v98
  %v100 = vpop.f32.mrf.mxu0
  %101 = vdwg.mxu0
  %vm102 = vcmp.gt.f32.partialorder %v96, 0.0
  %vm103 = vcmp.gt.f32.partialorder %v99, 0.0
  %v104 = vmul.f32 %v96, 0.1
  %v105 = vmul.f32 %v99, 0.1
  %v106 = vsel %vm102, %v96, %v104
  %v107 = vsel %vm103, %v99, %v105
  %v108 = vpack.c.bf16 %v107, %v106
  %v110 = vunpack.c.l.b16 %v108
  %v111 = vunpack.c.h.b16 %v108
  %v112 = vpack.c.b16 %v110, %v110
  %v113 = vpack.c.b16 %v111, %v111
  %vm116 = vcmask 781312
  %117 = vst.msk [vmem:[%s3] sm:$0xf] %vm116, %v112
  %118 = vst.msk [vmem:[%s3 + $0x4] sm:$0xf] %vm116, %v113
  // Predicated region
  $region14: #{forward.17} parent=0 // pred_check
    _
  $region15: #{forward.17} parent=0 // pred_check_branch
    %120 = sbr.rel (0) target = $region17
  $region16: #{forward.17} parent=0 // pred_region
    _
  $region17: #{forward.17} parent=0 // pred_fallthru
    _
  // Predicated region
  $region18: #{forward.17} parent=0 // pred_check
    _
  $region19: #{forward.17} parent=0 // pred_check_branch
    %122 = sbr.rel (0) target = $region21
  $region20: #{forward.17} parent=0 // pred_region
    _
  $region21: #{forward.17} parent=0 // pred_fallthru
    _

// kernel: forward.19
$region0: #{forward.19}
  #allocation0 [shape = 'u32[]', space=smem, size = 0x4, offset = 0x4, fixed_abs, tag = 'smem constant byte address 0x4 - core index']
  #allocation1 [shape = 'u32[144,128]{1,0:T(1,128)}', space=vmem, size = 0x12000, scoped, tag = 'internal scratch']
  %s0 = inlined_call_operand.vmem [shape: bf16[16,16], index: 0, kind: input, shape index: {}]
  %s1 = inlined_call_operand.vmem [shape: bf16[16,68], index: 1, kind: input, shape index: {}]
  %s2 = inlined_call_operand.vmem [shape: f32[1,68], index: 2, kind: input, shape index: {}]
  %s3 = inlined_call_operand.vmem [shape: bf16[16,68], index: 3, kind: output, shape index: {}]
  %s4 = sld [smem:[#allocation0]]
  $region22: #{forward.19} parent=0
    _
  %s6 = ssub.s32 1, %s4
  %s7 = scalar_select 0, %s6, %s4
  // Predicated region
  $region2: #{forward.19} parent=0 // pred_check
    _
  $region3: #{forward.19} parent=0 // pred_check_branch
    %9 = sbr.rel (0) target = $region5
  $region4: #{forward.19} parent=0 // pred_region
    _
  $region5: #{forward.19} parent=0 // pred_fallthru
    _
  // Predicated region
  $region6: #{forward.19} parent=0 // pred_check
    _
  $region7: #{forward.19} parent=0 // pred_check_branch
    %11 = sbr.rel (0) target = $region9
  $region8: #{forward.19} parent=0 // pred_region
    _
  $region9: #{forward.19} parent=0 // pred_fallthru
    _
  // Predicated region
  $region10: #{forward.19} parent=0 // pred_check
    _
  $region11: #{forward.19} parent=0 // pred_check_branch
    %13 = sbr.rel (0) target = $region13
  $region12: #{forward.19} parent=0 // pred_region
    _
  $region13: #{forward.19} parent=0 // pred_fallthru
    _
  %v15 = vld [vmem:[%s0] sm:$0xf]
  %v16 = vld [vmem:[%s0 + $0x4] sm:$0xf]
  %v17 = vld [vmem:[%s1] sm:$0xf]
  %v18 = vld [vmem:[%s1 + $0x4] sm:$0xf]
  %v19 = vld [vmem:[%s2] sm:$0x1]
  %v21 = vlaneseq
  %v22 = vshrl.u32 %v21, 7
  %v23 = vsub.s32 0, %v22
  %v24 = vrot.slane %v19, %v23
  %v28 = vunpack.c.l.b16 %v15
  %v29 = vunpack.c.l.b16 %v16
  %v30 = vpack.c.b16 %v29, %v28
  %v33 = vunpack.c.l.b16 %v17
  %v34 = vunpack.c.l.b16 %v18
  %v35 = vpack.c.b16 %v34, %v33
  %vm37 = vcmask 130048
  %v39 = vsel %vm37, %v30, 0
  %41 = vmatprep.subr.bf16.mxu0 0
  %42 = vmatpush1.bf16.msra.mxu0 0
  %43 = vmatprep.subr.bf16.mxu0 0
  %44 = vmatpush1.bf16.msra.mxu0 0
  %45 = vmatprep.subr.bf16.mxu0 0
  %46 = vmatpush1.bf16.msra.mxu0 0
  %47 = vmatprep.subr.bf16.mxu0 0
  %48 = vmatpush1.bf16.msra.mxu0 0
  %49 = vmatprep.subr.bf16.mxu0 0
  %50 = vmatpush1.bf16.msra.mxu0 0
  %51 = vmatprep.subr.bf16.mxu0 0
  %52 = vmatpush1.bf16.msra.mxu0 0
  %53 = vmatprep.subr.bf16.mxu0 0
  %54 = vmatpush1.bf16.msra.mxu0 0
  %55 = vmatprep.subr.bf16.mxu0 0
  %56 = vmatpush1.bf16.msra.mxu0 %v35
  %57 = vmatprep.subr.bf16.mxu0 0
  %58 = vmatpush2.bf16.msra.mxu0 0
  %59 = vmatprep.subr.bf16.mxu0 0
  %60 = vmatpush2.bf16.msra.mxu0 0
  %61 = vmatprep.subr.bf16.mxu0 0
  %62 = vmatpush2.bf16.msra.mxu0 0
  %63 = vmatprep.subr.bf16.mxu0 0
  %64 = vmatpush2.bf16.msra.mxu0 0
  %65 = vmatprep.subr.bf16.mxu0 0
  %66 = vmatpush2.bf16.msra.mxu0 0
  %67 = vmatprep.subr.bf16.mxu0 0
  %68 = vmatpush2.bf16.msra.mxu0 0
  %69 = vmatprep.subr.bf16.mxu0 0
  %70 = vmatpush2.bf16.msra.mxu0 0
  %71 = vmatprep.subr.bf16.mxu0 0
  %72 = vmatpush2.bf16.msra.mxu0 0
  %73 = vmatprep.mubr.bf16.mxu0 0
  %74 = vmatmul.mubr.bf16.gmra.mxu0 %v39
  %v75 = vpop.f32.mrf.mxu0
  %v76 = vadd.f32 %v24, %v75
  %v77 = vpop.f32.mrf.mxu0
  %v78 = vpop.f32.mrf.mxu0
  %v79 = vadd.f32 %v24, %v78
  %v80 = vpop.f32.mrf.mxu0
  %81 = vdwg.mxu0
  %v82 = vpack.c.bf16 %v79, %v76
  %v84 = vunpack.c.l.b16 %v82
  %v85 = vunpack.c.h.b16 %v82
  %v86 = vpack.c.b16 %v84, %v84
  %v87 = vpack.c.b16 %v85, %v85
  %vm90 = vcmask 551936
  %91 = vst.msk [vmem:[%s3] sm:$0xf] %vm90, %v86
  %92 = vst.msk [vmem:[%s3 + $0x4] sm:$0xf] %vm90, %v87
  // Predicated region
  $region14: #{forward.19} parent=0 // pred_check
    _
  $region15: #{forward.19} parent=0 // pred_check_branch
    %94 = sbr.rel (0) target = $region17
  $region16: #{forward.19} parent=0 // pred_region
    _
  $region17: #{forward.19} parent=0 // pred_fallthru
    _
  // Predicated region
  $region18: #{forward.19} parent=0 // pred_check
    _
  $region19: #{forward.19} parent=0 // pred_check_branch
    %96 = sbr.rel (0) target = $region21
  $region20: #{forward.19} parent=0 // pred_region
    _
  $region21: #{forward.19} parent=0 // pred_fallthru
    _

// kernel: forward.21
$region0: #{forward.21}
  #allocation0 [shape = 'u32[]', space=smem, size = 0x4, offset = 0x4, fixed_abs, tag = 'smem constant byte address 0x4 - core index']
  #allocation1 [shape = 'u32[144,128]{1,0:T(1,128)}', space=vmem, size = 0x12000, scoped, tag = 'internal scratch']
  %s0 = inlined_call_operand.vmem [shape: bf16[2,8,68], index: 0, kind: input, shape index: {}]
  %s1 = inlined_call_operand.vmem [shape: bf16[2,8,16], index: 1, kind: input, shape index: {}]
  %s2 = inlined_call_operand.vmem [shape: f32[2,4,8,8], index: 2, kind: output, shape index: {}]
  %s3 = sld [smem:[#allocation0]]
  $region41: #{forward.21} parent=0
    _
  %s5 = ssub.s32 1, %s3
  %s6 = scalar_select 0, %s5, %s3
  loop: start=0, step=1, limit=4
  $region2: #{forward.21} parent=0 // loop_pre_header
    _
  $region3: #{forward.21} parent=0 // loop_header
    %s8 = sphi 0, %s12
    %p9 = scmp.ge.s32.totalorder %s8, 4
    %s18 = sphi 0, %s20
    %s21 = sphi 0, %s18
    %s22 = sphi 0, %s21
    %s38 = sphi 0, %s22
    %s44 = sphi 0, %s46
    %s47 = sphi 0, %s44
    %s48 = sphi 0, %s47
    %s64 = sphi 0, %s48
    %s70 = sphi 0, %s72
    %s73 = sphi 0, %s70
    %s74 = sphi 0, %s73
    %s90 = sphi 0, %s74
  $region4: #{forward.21} parent=0 // loop_header_branch
    %11 = sbr.rel (%p9) target = $region8
  $region5: #{forward.21} parent=0 // loop_body
    %s13 = ssub.s32 %s8, 1
    %s14 = ssub.s32 %s8, 2
    %s15 = sadd.s32 %s8, 1
    %s16 = ssub.s32 %s8, %s15
    %p17 = scmp.eq.s32.totalorder %s16, 0
    %s19 = sadd.s32 %s18, 1
    %s20 = scalar_select %p17, %s18, %s19
    %p23 = pneg %p17
    %p24 = scmp.eq.s32.totalorder %s8, 1
    %p25 = por %p23, %p24
    %p26 = scmp.ne.s32.totalorder %s18, %s21
    %p27 = scmp.eq.s32.totalorder %s8, 0
    %p28 = por %p26, %p27
    %p29 = scmp.ne.s32.totalorder %s18, %s21
    %p30 = scmp.eq.s32.totalorder %s13, 1
    %p31 = por %p29, %p30
    %p32 = scmp.ne.s32.totalorder %s21, %s22
    %p33 = scmp.eq.s32.totalorder %s13, 0
    %p34 = por %p32, %p33
    %p35 = scmp.ne.s32.totalorder %s21, %s22
    %p36 = scmp.eq.s32.totalorder %s14, 1
    %p37 = por %p35, %p36
    %p39 = scmp.ne.s32.totalorder %s22, %s38
    %p40 = scmp.eq.s32.totalorder %s14, 0
    %p41 = por %p39, %p40
    %s42 = ssub.s32 %s8, %s15
    %p43 = scmp.eq.s32.totalorder %s42, 0
    %s45 = sadd.s32 %s44, 1
    %s46 = scalar_select %p43, %s44, %s45
    %p49 = pneg %p43
    %p50 = scmp.eq.s32.totalorder %s8, 1
    %p51 = por %p49, %p50
    %p52 = scmp.ne.s32.totalorder %s44, %s47
    %p53 = scmp.eq.s32.totalorder %s8, 0
    %p54 = por %p52, %p53
    %p55 = scmp.ne.s32.totalorder %s44, %s47
    %p56 = scmp.eq.s32.totalorder %s13, 1
    %p57 = por %p55, %p56
    %p58 = scmp.ne.s32.totalorder %s47, %s48
    %p59 = scmp.eq.s32.totalorder %s13, 0
    %p60 = por %p58, %p59
    %p61 = scmp.ne.s32.totalorder %s47, %s48
    %p62 = scmp.eq.s32.totalorder %s14, 1
    %p63 = por %p61, %p62
    %p65 = scmp.ne.s32.totalorder %s48, %s64
    %p66 = scmp.eq.s32.totalorder %s14, 0
    %p67 = por %p65, %p66
    %s68 = ssub.s32 %s8, %s15
    %p69 = scmp.eq.s32.totalorder %s68, 0
    %s71 = sadd.s32 %s70, 1
    %s72 = scalar_select %p69, %s70, %s71
    %p75 = pneg %p69
    %p76 = scmp.eq.s32.totalorder %s8, 1
    %p77 = por %p75, %p76
    %p78 = scmp.ne.s32.totalorder %s70, %s73
    %p79 = scmp.eq.s32.totalorder %s8, 0
    %p80 = por %p78, %p79
    %p81 = scmp.ne.s32.totalorder %s70, %s73
    %p82 = scmp.eq.s32.totalorder %s13, 1
    %p83 = por %p81, %p82
    %p84 = scmp.ne.s32.totalorder %s73, %s74
    %p85 = scmp.eq.s32.totalorder %s13, 0
    %p86 = por %p84, %p85
    %p87 = scmp.ne.s32.totalorder %s73, %s74
    %p88 = scmp.eq.s32.totalorder %s14, 1
    %p89 = por %p87, %p88
    %p91 = scmp.ne.s32.totalorder %s74, %s90
    %p92 = scmp.eq.s32.totalorder %s14, 0
    %p93 = por %p91, %p92
    %p94 = scmp.le.s32.totalorder 1, %s8
    %p95 = scmp.lt.s32.totalorder %s8, 3
    %p96 = pnand %p94, %p95
    %p97 = pneg %p96
    // Predicated region
    $region9: #{forward.21} parent=5 // pred_check
      _
    $region10: #{forward.21} parent=5 // pred_check_branch
      %99 = sbr.rel (%p96) target = $region12
    $region11: #{forward.21} parent=5 // pred_region
      %s100 = ssub.s32 %s8, 1
    $region12: #{forward.21} parent=5 // pred_fallthru
      _
    %p101 = scmp.lt.s32.totalorder %s8, 2
    // Predicated region
    $region13: #{forward.21} parent=5 // pred_check
      %p102 = pneg %p101
    $region14: #{forward.21} parent=5 // pred_check_branch
      %104 = sbr.rel (%p102) target = $region16
    $region15: #{forward.21} parent=5 // pred_region
      // Predicated region
      $region17: #{forward.21} parent=15 // pred_check
        %p105 = pneg %p28
      $region18: #{forward.21} parent=15 // pred_check_branch
        %107 = sbr.rel (%p105) target = $region20
      $region19: #{forward.21} parent=15 // pred_region
        %p108 = scmp.lt.s32.totalorder %s8, 1
        %s109 = scalar_select %p108, %s8, 1
        %s110 = smul.addr %s109, 4
        %s111 = scalar_lea.vmem %s0, %s110
      $region20: #{forward.21} parent=15 // pred_fallthru
        _
      // Predicated region
      $region21: #{forward.21} parent=15 // pred_check
        %p112 = pneg %p54
      $region22: #{forward.21} parent=15 // pred_check_branch
        %114 = sbr.rel (%p112) target = $region24
      $region23: #{forward.21} parent=15 // pred_region
        %p115 = scmp.lt.s32.totalorder %s8, 1
        %s116 = scalar_select %p115, %s8, 1
        %s117 = smul.addr %s116, 4
        %s118 = scalar_lea.vmem %s1, %s117
      $region24: #{forward.21} parent=15 // pred_fallthru
        _
    $region16: #{forward.21} parent=5 // pred_fallthru
      _
    %p119 = scmp.le.s32.totalorder 1, %s8
    %p120 = scmp.lt.s32.totalorder %s8, 3
    %p121 = pnand %p119, %p120
    %p122 = pneg %p121
    // Predicated region
    $region25: #{forward.21} parent=5 // pred_check
      _
    $region26: #{forward.21} parent=5 // pred_check_branch
      %124 = sbr.rel (%p121) target = $region28
    $region27: #{forward.21} parent=5 // pred_region
      %s125 = ssub.s32 %s8, 1
      %p126 = scmp.lt.s32.totalorder %s13, 1
      %s127 = scalar_select %p126, %s13, 1
      %s128 = smul.addr %s127, 4
      %s129 = scalar_lea.vmem %s0, %s128
      %p130 = pneg %p34
      %p131 = pneg %p31
      %p132 = scmp.lt.s32.totalorder %s13, 1
      %s133 = scalar_select %p132, %s13, 1
      %s134 = smul.addr %s133, 4
      %s135 = scalar_lea.vmem %s1, %s134
      %p136 = pneg %p60
      %p137 = pneg %p57
      %p138 = pneg %p86
      %p139 = pneg %p83
      %p140 = scmp.lt.s32.totalorder %s13, 1
      %s141 = scalar_select %p140, %s13, 1
      %s142 = smul.addr %s141, 4
      %s143 = smul.addr %s142, 8
      %s144 = scalar_lea.vmem %s2, %s143
      %p145 = scmp.lt.s32.totalorder %s13, 1
      %s146 = scalar_select %p145, %s13, 1
      %s147 = smul.addr %s146, 4
      %s148 = scalar_lea.vmem %s0, %s147
      %p149 = scmp.lt.s32.totalorder %s13, 1
      %s150 = scalar_select %p149, %s13, 1
      %s151 = smul.addr %s150, 4
      %s152 = scalar_lea.vmem %s1, %s151
      %p153 = scmp.lt.s32.totalorder %s13, 1
      %s154 = scalar_select %p153, %s13, 1
      %s155 = smul.addr %s154, 4
      %s156 = smul.addr %s155, 8
      %s157 = scalar_lea.vmem %s2, %s156
      %v159 = vld [vmem:[%s152] sm:$0xf]
      %v160 = vld [vmem:[%s148] sm:$0xf]
      %v161 = vunpack.c.l.bf16 %v160
      %163 = vset.pattern.permute.xlu0 64
      %164 = vperm.xlu0 %163, %v161
      %v165 = vpop.permute.xlu0 %164
      %vm167 = vcmask 130048
      %v169 = vsel %vm167, %v160, 0
      %v172 = vsel %vm167, %v159, 0
      %174 = vmatprep.subr.bf16.mxu0 0
      %175 = vmatpush1.bf16.xpose.msra.mxu0 0
      %176 = vmatprep.subr.bf16.mxu0 0
      %177 = vmatpush1.bf16.xpose.msra.mxu0 0
      %178 = vmatprep.subr.bf16.mxu0 0
      %179 = vmatpush1.bf16.xpose.msra.mxu0 0
      %180 = vmatprep.subr.bf16.mxu0 0
      %181 = vmatpush1.bf16.xpose.msra.mxu0 0
      %182 = vmatprep.subr.bf16.mxu0 0
      %183 = vmatpush1.bf16.xpose.msra.mxu0 0
      %184 = vmatprep.subr.bf16.mxu0 0
      %185 = vmatpush1.bf16.xpose.msra.mxu0 0
      %186 = vmatprep.subr.bf16.mxu0 0
      %187 = vmatpush1.bf16.xpose.msra.mxu0 0
      %188 = vmatprep.subr.bf16.mxu0 0
      %189 = vmatpush1.bf16.xpose.msra.mxu0 %v172
      %190 = vmatprep.subr.bf16.mxu0 0
      %191 = vmatpush2.bf16.xpose.msra.mxu0 0
      %192 = vmatprep.subr.bf16.mxu0 0
      %193 = vmatpush2.bf16.xpose.msra.mxu0 0
      %194 = vmatprep.subr.bf16.mxu0 0
      %195 = vmatpush2.bf16.xpose.msra.mxu0 0
      %196 = vmatprep.subr.bf16.mxu0 0
      %197 = vmatpush2.bf16.xpose.msra.mxu0 0
      %198 = vmatprep.subr.bf16.mxu0 0
      %199 = vmatpush2.bf16.xpose.msra.mxu0 0
      %200 = vmatprep.subr.bf16.mxu0 0
      %201 = vmatpush2.bf16.xpose.msra.mxu0 0
      %202 = vmatprep.subr.bf16.mxu0 0
      %203 = vmatpush2.bf16.xpose.msra.mxu0 0
      %204 = vmatprep.subr.bf16.mxu0 0
      %205 = vmatpush2.bf16.xpose.msra.mxu0 0
      %206 = vmatprep.mubr.bf16.mxu0 0
      %207 = vmatmul.mubr.bf16.gmra.mxu0 %v169
      %v208 = vpop.f32.mrf.mxu0
      %v209 = vadd.f32 %v165, %v208
      %v210 = vpop.f32.mrf.mxu0
      %v211 = vpop.f32.mrf.mxu0
      %v212 = vpop.f32.mrf.mxu0
      %213 = vdwg.mxu0
      %vm214 = vcmask 64512
      %215 = vst.msk [vmem:[%s157] sm:$0xff] %vm214, %v209
      %v216 = vld [vmem:[%s148] sm:$0xf]
      %v217 = vunpack.c.l.bf16 %v216
      %219 = vset.pattern.permute.xlu0 65
      %220 = vperm.xlu0 %219, %v217
      %v221 = vpop.permute.xlu0 %220
      %v224 = vunpack.c.l.b16 %v216
      %v225 = vpack.c.b16 %v224, %v224
      %226 = vrot.lane.b32.xlu0 %v225, 112
      %v227 = vpop.permute.xlu0 %226
      %v229 = vsel %vm167, %v227, 0
      %231 = vmatprep.subr.bf16.mxu0 0
      %232 = vmatpush1.bf16.xpose.msra.mxu0 0
      %233 = vmatprep.subr.bf16.mxu0 0
      %234 = vmatpush1.bf16.xpose.msra.mxu0 0
      %235 = vmatprep.subr.bf16.mxu0 0
      %236 = vmatpush1.bf16.xpose.msra.mxu0 0
      %237 = vmatprep.subr.bf16.mxu0 0
      %238 = vmatpush1.bf16.xpose.msra.mxu0 0
      %239 = vmatprep.subr.bf16.mxu0 0
      %240 = vmatpush1.bf16.xpose.msra.mxu0 0
      %241 = vmatprep.subr.bf16.mxu0 0
      %242 = vmatpush1.bf16.xpose.msra.mxu0 0
      %243 = vmatprep.subr.bf16.mxu0 0
      %244 = vmatpush1.bf16.xpose.msra.mxu0 0
      %245 = vmatprep.subr.bf16.mxu0 0
      %246 = vmatpush1.bf16.xpose.msra.mxu0 %v172
      %247 = vmatprep.subr.bf16.mxu0 0
      %248 = vmatpush2.bf16.xpose.msra.mxu0 0
      %249 = vmatprep.subr.bf16.mxu0 0
      %250 = vmatpush2.bf16.xpose.msra.mxu0 0
      %251 = vmatprep.subr.bf16.mxu0 0
      %252 = vmatpush2.bf16.xpose.msra.mxu0 0
      %253 = vmatprep.subr.bf16.mxu0 0
      %254 = vmatpush2.bf16.xpose.msra.mxu0 0
      %255 = vmatprep.subr.bf16.mxu0 0
      %256 = vmatpush2.bf16.xpose.msra.mxu0 0
      %257 = vmatprep.subr.bf16.mxu0 0
      %258 = vmatpush2.bf16.xpose.msra.mxu0 0
      %259 = vmatprep.subr.bf16.mxu0 0
      %260 = vmatpush2.bf16.xpose.msra.mxu0 0
      %261 = vmatprep.subr.bf16.mxu0 0
      %262 = vmatpush2.bf16.xpose.msra.mxu0 0
      %263 = vmatprep.mubr.bf16.mxu0 0
      %264 = vmatmul.mubr.bf16.gmra.mxu0 %v229
      %v265 = vpop.f32.mrf.mxu0
      %v266 = vadd.f32 %v221, %v265
      %v267 = vpop.f32.mrf.mxu0
      %v268 = vpop.f32.mrf.mxu0
      %v269 = vpop.f32.mrf.mxu0
      %270 = vdwg.mxu0
      %s271 = scalar_lea.vmem %s157, 8
      %272 = vst.msk [vmem:[%s271] sm:$0xff] %vm214, %v266
      %v273 = vld [vmem:[%s148] sm:$0xf]
      %v274 = vunpack.c.l.bf16 %v273
      %276 = vset.pattern.permute.xlu0 66
      %277 = vperm.xlu0 %276, %v274
      %v278 = vpop.permute.xlu0 %277
      %v281 = vunpack.c.l.b16 %v273
      %v282 = vpack.c.b16 %v281, %v281
      %283 = vrot.lane.b32.xlu0 %v282, 96
      %v284 = vpop.permute.xlu0 %283
      %v286 = vsel %vm167, %v284, 0
      %288 = vmatprep.subr.bf16.mxu0 0
      %289 = vmatpush1.bf16.xpose.msra.mxu0 0
      %290 = vmatprep.subr.bf16.mxu0 0
      %291 = vmatpush1.bf16.xpose.msra.mxu0 0
      %292 = vmatprep.subr.bf16.mxu0 0
      %293 = vmatpush1.bf16.xpose.msra.mxu0 0
      %294 = vmatprep.subr.bf16.mxu0 0
      %295 = vmatpush1.bf16.xpose.msra.mxu0 0
      %296 = vmatprep.subr.bf16.mxu0 0
      %297 = vmatpush1.bf16.xpose.msra.mxu0 0
      %298 = vmatprep.subr.bf16.mxu0 0
      %299 = vmatpush1.bf16.xpose.msra.mxu0 0
      %300 = vmatprep.subr.bf16.mxu0 0
      %301 = vmatpush1.bf16.xpose.msra.mxu0 0
      %302 = vmatprep.subr.bf16.mxu0 0
      %303 = vmatpush1.bf16.xpose.msra.mxu0 %v172
      %304 = vmatprep.subr.bf16.mxu0 0
      %305 = vmatpush2.bf16.xpose.msra.mxu0 0
      %306 = vmatprep.subr.bf16.mxu0 0
      %307 = vmatpush2.bf16.xpose.msra.mxu0 0
      %308 = vmatprep.subr.bf16.mxu0 0
      %309 = vmatpush2.bf16.xpose.msra.mxu0 0
      %310 = vmatprep.subr.bf16.mxu0 0
      %311 = vmatpush2.bf16.xpose.msra.mxu0 0
      %312 = vmatprep.subr.bf16.mxu0 0
      %313 = vmatpush2.bf16.xpose.msra.mxu0 0
      %314 = vmatprep.subr.bf16.mxu0 0
      %315 = vmatpush2.bf16.xpose.msra.mxu0 0
      %316 = vmatprep.subr.bf16.mxu0 0
      %317 = vmatpush2.bf16.xpose.msra.mxu0 0
      %318 = vmatprep.subr.bf16.mxu0 0
      %319 = vmatpush2.bf16.xpose.msra.mxu0 0
      %320 = vmatprep.mubr.bf16.mxu0 0
      %321 = vmatmul.mubr.bf16.gmra.mxu0 %v286
      %v322 = vpop.f32.mrf.mxu0
      %v323 = vadd.f32 %v278, %v322
      %v324 = vpop.f32.mrf.mxu0
      %v325 = vpop.f32.mrf.mxu0
      %v326 = vpop.f32.mrf.mxu0
      %327 = vdwg.mxu0
      %s328 = scalar_lea.vmem %s157, 16
      %329 = vst.msk [vmem:[%s328] sm:$0xff] %vm214, %v323
      %v330 = vld [vmem:[%s148] sm:$0xf]
      %v331 = vunpack.c.l.bf16 %v330
      %333 = vset.pattern.permute.xlu0 67
      %334 = vperm.xlu0 %333, %v331
      %v335 = vpop.permute.xlu0 %334
      %v338 = vunpack.c.l.b16 %v330
      %v339 = vpack.c.b16 %v338, %v338
      %340 = vrot.lane.b32.xlu0 %v339, 80
      %v341 = vpop.permute.xlu0 %340
      %v343 = vsel %vm167, %v341, 0
      %345 = vmatprep.subr.bf16.mxu0 0
      %346 = vmatpush1.bf16.xpose.msra.mxu0 0
      %347 = vmatprep.subr.bf16.mxu0 0
      %348 = vmatpush1.bf16.xpose.msra.mxu0 0
      %349 = vmatprep.subr.bf16.mxu0 0
      %350 = vmatpush1.bf16.xpose.msra.mxu0 0
      %351 = vmatprep.subr.bf16.mxu0 0
      %352 = vmatpush1.bf16.xpose.msra.mxu0 0
      %353 = vmatprep.subr.bf16.mxu0 0
      %354 = vmatpush1.bf16.xpose.msra.mxu0 0
      %355 = vmatprep.subr.bf16.mxu0 0
      %356 = vmatpush1.bf16.xpose.msra.mxu0 0
      %357 = vmatprep.subr.bf16.mxu0 0
      %358 = vmatpush1.bf16.xpose.msra.mxu0 0
      %359 = vmatprep.subr.bf16.mxu0 0
      %360 = vmatpush1.bf16.xpose.msra.mxu0 %v172
      %361 = vmatprep.subr.bf16.mxu0 0
      %362 = vmatpush2.bf16.xpose.msra.mxu0 0
      %363 = vmatprep.subr.bf16.mxu0 0
      %364 = vmatpush2.bf16.xpose.msra.mxu0 0
      %365 = vmatprep.subr.bf16.mxu0 0
      %366 = vmatpush2.bf16.xpose.msra.mxu0 0
      %367 = vmatprep.subr.bf16.mxu0 0
      %368 = vmatpush2.bf16.xpose.msra.mxu0 0
      %369 = vmatprep.subr.bf16.mxu0 0
      %370 = vmatpush2.bf16.xpose.msra.mxu0 0
      %371 = vmatprep.subr.bf16.mxu0 0
      %372 = vmatpush2.bf16.xpose.msra.mxu0 0
      %373 = vmatprep.subr.bf16.mxu0 0
      %374 = vmatpush2.bf16.xpose.msra.mxu0 0
      %375 = vmatprep.subr.bf16.mxu0 0
      %376 = vmatpush2.bf16.xpose.msra.mxu0 0
      %377 = vmatprep.mubr.bf16.mxu0 0
      %378 = vmatmul.mubr.bf16.gmra.mxu0 %v343
      %v379 = vpop.f32.mrf.mxu0
      %v380 = vadd.f32 %v335, %v379
      %v381 = vpop.f32.mrf.mxu0
      %v382 = vpop.f32.mrf.mxu0
      %v383 = vpop.f32.mrf.mxu0
      %384 = vdwg.mxu0
      %s385 = scalar_lea.vmem %s157, 24
      %386 = vst.msk [vmem:[%s385] sm:$0xff] %vm214, %v380
      %p387 = scmp.lt.s32.totalorder %s13, 1
      %s388 = scalar_select %p387, %s13, 1
      %s389 = smul.addr %s388, 4
      %s390 = smul.addr %s389, 8
      %s391 = scalar_lea.vmem %s2, %s390
      // Predicated region
      $region29: #{forward.21} parent=27 // pred_check
        %p392 = pneg %p83
      $region30: #{forward.21} parent=27 // pred_check_branch
        %394 = sbr.rel (%p392) target = $region32
      $region31: #{forward.21} parent=27 // pred_region
        _
      $region32: #{forward.21} parent=27 // pred_fallthru
        _
    $region28: #{forward.21} parent=5 // pred_fallthru
      _
    %p395 = scmp.le.s32.totalorder 2, %s8
    // Predicated region
    $region33: #{forward.21} parent=5 // pred_check
      %p396 = pneg %p395
    $region34: #{forward.21} parent=5 // pred_check_branch
      %398 = sbr.rel (%p396) target = $region36
    $region35: #{forward.21} parent=5 // pred_region
      %s399 = ssub.s32 %s8, 2
      // Predicated region
      $region37: #{forward.21} parent=35 // pred_check
        %p400 = pneg %p89
      $region38: #{forward.21} parent=35 // pred_check_branch
        %402 = sbr.rel (%p400) target = $region40
      $region39: #{forward.21} parent=35 // pred_region
        %p403 = scmp.lt.s32.totalorder %s14, 1
        %s404 = scalar_select %p403, %s14, 1
        %s405 = smul.addr %s404, 4
        %s406 = smul.addr %s405, 8
        %s407 = scalar_lea.vmem %s2, %s406
      $region40: #{forward.21} parent=35 // pred_fallthru
        _
    $region36: #{forward.21} parent=5 // pred_fallthru
      _
  $region6: #{forward.21} parent=0 // loop_footer
    %s12 = sadd.s32 1, %s8
  $region7: #{forward.21} parent=0 // loop_footer_branch
    %7 = sbr.rel target = $region3
  $region8: #{forward.21} parent=0 // loop_exit
    _

// kernel: forward.20
$region0: #{forward.20}
  #allocation0 [shape = 'u32[]', space=smem, size = 0x4, offset = 0x4, fixed_abs, tag = 'smem constant byte address 0x4 - core index']
  #allocation1 [shape = 'u32[144,128]{1,0:T(1,128)}', space=vmem, size = 0x12000, scoped, tag = 'internal scratch']
  %s0 = inlined_call_operand.vmem [shape: bf16[2,8,32], index: 0, kind: input, shape index: {}]
  %s1 = inlined_call_operand.vmem [shape: bf16[2,8,32], index: 1, kind: input, shape index: {}]
  %s2 = inlined_call_operand.vmem [shape: f32[2,1,8], index: 2, kind: input, shape index: {}]
  %s3 = inlined_call_operand.hbm [shape: f32[2,8,8], index: 3, kind: output, shape index: {}]
  %s4 = sld [smem:[#allocation0]]
  $region45: #{forward.20} parent=0
    _
  %s6 = ssub.s32 1, %s4
  %s7 = scalar_select 0, %s6, %s4
  $region1: #{forward.20} parent=0
    #allocation2 [shape = 'u8[8192]{0}', space=vmem, size = 0x2000, scoped, tag = 'output window, operand 0']
    #allocation3 [shape = 's32[2]{0}', space=sflag, size = 0x8, scoped, tag = 'scoped memory for forward.20']
    %8 = vsyncpa [#allocation3], 0
    %s9 = scalar_lea.sflag [#allocation3], 1
    %10 = vsyncpa %s9, 0
    loop: start=0, step=1, limit=4
    $region2: #{forward.20} parent=1 // loop_pre_header
      _
    $region3: #{forward.20} parent=1 // loop_header
      %s12 = sphi 0, %s16
      %p13 = scmp.ge.s32.totalorder %s12, 4
      %s22 = sphi 0, %s24
      %s25 = sphi 0, %s22
      %s26 = sphi 0, %s25
      %s42 = sphi 0, %s26
      %s48 = sphi 0, %s50
      %s51 = sphi 0, %s48
      %s52 = sphi 0, %s51
      %s68 = sphi 0, %s52
      %s74 = sphi 0, %s76
      %s77 = sphi 0, %s74
      %s78 = sphi 0, %s77
      %s94 = sphi 0, %s78
      %s100 = sphi 0, %s102
      %s103 = sphi 0, %s100
      %s104 = sphi 0, %s103
      %s120 = sphi 0, %s104
    $region4: #{forward.20} parent=1 // loop_header_branch
      %15 = sbr.rel (%p13) target = $region8
    $region5: #{forward.20} parent=1 // loop_body
      %s17 = ssub.s32 %s12, 1
      %s18 = ssub.s32 %s12, 2
      %s19 = sadd.s32 %s12, 1
      %s20 = ssub.s32 %s12, %s19
      %p21 = scmp.eq.s32.totalorder %s20, 0
      %s23 = sadd.s32 %s22, 1
      %s24 = scalar_select %p21, %s22, %s23
      %p27 = pneg %p21
      %p28 = scmp.eq.s32.totalorder %s12, 1
      %p29 = por %p27, %p28
      %p30 = scmp.ne.s32.totalorder %s22, %s25
      %p31 = scmp.eq.s32.totalorder %s12, 0
      %p32 = por %p30, %p31
      %p33 = scmp.ne.s32.totalorder %s22, %s25
      %p34 = scmp.eq.s32.totalorder %s17, 1
      %p35 = por %p33, %p34
      %p36 = scmp.ne.s32.totalorder %s25, %s26
      %p37 = scmp.eq.s32.totalorder %s17, 0
      %p38 = por %p36, %p37
      %p39 = scmp.ne.s32.totalorder %s25, %s26
      %p40 = scmp.eq.s32.totalorder %s18, 1
      %p41 = por %p39, %p40
      %p43 = scmp.ne.s32.totalorder %s26, %s42
      %p44 = scmp.eq.s32.totalorder %s18, 0
      %p45 = por %p43, %p44
      %s46 = ssub.s32 %s12, %s19
      %p47 = scmp.eq.s32.totalorder %s46, 0
      %s49 = sadd.s32 %s48, 1
      %s50 = scalar_select %p47, %s48, %s49
      %p53 = pneg %p47
      %p54 = scmp.eq.s32.totalorder %s12, 1
      %p55 = por %p53, %p54
      %p56 = scmp.ne.s32.totalorder %s48, %s51
      %p57 = scmp.eq.s32.totalorder %s12, 0
      %p58 = por %p56, %p57
      %p59 = scmp.ne.s32.totalorder %s48, %s51
      %p60 = scmp.eq.s32.totalorder %s17, 1
      %p61 = por %p59, %p60
      %p62 = scmp.ne.s32.totalorder %s51, %s52
      %p63 = scmp.eq.s32.totalorder %s17, 0
      %p64 = por %p62, %p63
      %p65 = scmp.ne.s32.totalorder %s51, %s52
      %p66 = scmp.eq.s32.totalorder %s18, 1
      %p67 = por %p65, %p66
      %p69 = scmp.ne.s32.totalorder %s52, %s68
      %p70 = scmp.eq.s32.totalorder %s18, 0
      %p71 = por %p69, %p70
      %s72 = ssub.s32 %s12, %s19
      %p73 = scmp.eq.s32.totalorder %s72, 0
      %s75 = sadd.s32 %s74, 1
      %s76 = scalar_select %p73, %s74, %s75
      %p79 = pneg %p73
      %p80 = scmp.eq.s32.totalorder %s12, 1
      %p81 = por %p79, %p80
      %p82 = scmp.ne.s32.totalorder %s74, %s77
      %p83 = scmp.eq.s32.totalorder %s12, 0
      %p84 = por %p82, %p83
      %p85 = scmp.ne.s32.totalorder %s74, %s77
      %p86 = scmp.eq.s32.totalorder %s17, 1
      %p87 = por %p85, %p86
      %p88 = scmp.ne.s32.totalorder %s77, %s78
      %p89 = scmp.eq.s32.totalorder %s17, 0
      %p90 = por %p88, %p89
      %p91 = scmp.ne.s32.totalorder %s77, %s78
      %p92 = scmp.eq.s32.totalorder %s18, 1
      %p93 = por %p91, %p92
      %p95 = scmp.ne.s32.totalorder %s78, %s94
      %p96 = scmp.eq.s32.totalorder %s18, 0
      %p97 = por %p95, %p96
      %s98 = ssub.s32 %s12, %s19
      %p99 = scmp.eq.s32.totalorder %s98, 0
      %s101 = sadd.s32 %s100, 1
      %s102 = scalar_select %p99, %s100, %s101
      %p105 = pneg %p99
      %p106 = scmp.eq.s32.totalorder %s12, 1
      %p107 = por %p105, %p106
      %p108 = scmp.ne.s32.totalorder %s100, %s103
      %p109 = scmp.eq.s32.totalorder %s12, 0
      %p110 = por %p108, %p109
      %p111 = scmp.ne.s32.totalorder %s100, %s103
      %p112 = scmp.eq.s32.totalorder %s17, 1
      %p113 = por %p111, %p112
      %p114 = scmp.ne.s32.totalorder %s103, %s104
      %p115 = scmp.eq.s32.totalorder %s17, 0
      %p116 = por %p114, %p115
      %p117 = scmp.ne.s32.totalorder %s103, %s104
      %p118 = scmp.eq.s32.totalorder %s18, 1
      %p119 = por %p117, %p118
      %p121 = scmp.ne.s32.totalorder %s104, %s120
      %p122 = scmp.eq.s32.totalorder %s18, 0
      %p123 = por %p121, %p122
      %p124 = scmp.le.s32.totalorder 1, %s12
      %p125 = scmp.lt.s32.totalorder %s12, 3
      %p126 = pnand %p124, %p125
      %p127 = pneg %p126
      // Predicated region
      $region9: #{forward.20} parent=5 // pred_check
        _
      $region10: #{forward.20} parent=5 // pred_check_branch
        %129 = sbr.rel (%p126) target = $region12
      $region11: #{forward.20} parent=5 // pred_region
        %s130 = ssub.s32 %s12, 1
      $region12: #{forward.20} parent=5 // pred_fallthru
        _
      %p131 = scmp.lt.s32.totalorder %s12, 2
      // Predicated region
      $region13: #{forward.20} parent=5 // pred_check
        %p132 = pneg %p131
      $region14: #{forward.20} parent=5 // pred_check_branch
        %134 = sbr.rel (%p132) target = $region16
      $region15: #{forward.20} parent=5 // pred_region
        // Predicated region
        $region17: #{forward.20} parent=15 // pred_check
          %p135 = pneg %p32
        $region18: #{forward.20} parent=15 // pred_check_branch
          %137 = sbr.rel (%p135) target = $region20
        $region19: #{forward.20} parent=15 // pred_region
          %p138 = scmp.lt.s32.totalorder %s12, 1
          %s139 = scalar_select %p138, %s12, 1
          %s140 = smul.addr %s139, 4
          %s141 = scalar_lea.vmem %s0, %s140
        $region20: #{forward.20} parent=15 // pred_fallthru
          _
        // Predicated region
        $region21: #{forward.20} parent=15 // pred_check
          %p142 = pneg %p58
        $region22: #{forward.20} parent=15 // pred_check_branch
          %144 = sbr.rel (%p142) target = $region24
        $region23: #{forward.20} parent=15 // pred_region
          %p145 = scmp.lt.s32.totalorder %s12, 1
          %s146 = scalar_select %p145, %s12, 1
          %s147 = smul.addr %s146, 4
          %s148 = scalar_lea.vmem %s1, %s147
        $region24: #{forward.20} parent=15 // pred_fallthru
          _
        // Predicated region
        $region25: #{forward.20} parent=15 // pred_check
          %p149 = pneg %p84
        $region26: #{forward.20} parent=15 // pred_check_branch
          %151 = sbr.rel (%p149) target = $region28
        $region27: #{forward.20} parent=15 // pred_region
          %p152 = scmp.lt.s32.totalorder %s12, 1
          %s153 = scalar_select %p152, %s12, 1
          %s154 = scalar_lea.vmem %s2, %s153
        $region28: #{forward.20} parent=15 // pred_fallthru
          _
      $region16: #{forward.20} parent=5 // pred_fallthru
        _
      %p155 = scmp.le.s32.totalorder 1, %s12
      %p156 = scmp.lt.s32.totalorder %s12, 3
      %p157 = pnand %p155, %p156
      %p158 = pneg %p157
      // Predicated region
      $region29: #{forward.20} parent=5 // pred_check
        _
      $region30: #{forward.20} parent=5 // pred_check_branch
        %160 = sbr.rel (%p157) target = $region32
      $region31: #{forward.20} parent=5 // pred_region
        %s161 = ssub.s32 %s12, 1
        %p162 = scmp.lt.s32.totalorder %s17, 1
        %s163 = scalar_select %p162, %s17, 1
        %s164 = smul.addr %s163, 4
        %s165 = scalar_lea.vmem %s0, %s164
        %p166 = pneg %p38
        %p167 = pneg %p35
        %p168 = scmp.lt.s32.totalorder %s17, 1
        %s169 = scalar_select %p168, %s17, 1
        %s170 = smul.addr %s169, 4
        %s171 = scalar_lea.vmem %s1, %s170
        %p172 = pneg %p64
        %p173 = pneg %p61
        %p174 = scmp.lt.s32.totalorder %s17, 1
        %s175 = scalar_select %p174, %s17, 1
        %s176 = scalar_lea.vmem %s2, %s175
        %p177 = pneg %p90
        %p178 = pneg %p87
        %p179 = pneg %p116
        %p180 = pneg %p113
        %s181 = sand.u32 %s103, 1
        %s182 = scalar_lea.sflag [#allocation3], %s181
        %s183 = sand.u32 %s103, 1
        %s184 = smul.addr %s183, 8
        %s185 = scalar_lea.vmem [#allocation2], %s184
        %p186 = scmp.lt.s32.totalorder %s17, 1
        %s187 = scalar_select %p186, %s17, 1
        %s188 = smul.addr %s187, 4
        %s189 = scalar_lea.vmem %s0, %s188
        %p190 = scmp.lt.s32.totalorder %s17, 1
        %s191 = scalar_select %p190, %s17, 1
        %s192 = smul.addr %s191, 4
        %s193 = scalar_lea.vmem %s1, %s192
        %p194 = scmp.lt.s32.totalorder %s17, 1
        %s195 = scalar_select %p194, %s17, 1
        %s196 = scalar_lea.vmem %s2, %s195
        %v198 = vld [vmem:[%s189] sm:$0xf]
        %v199 = vld [vmem:[%s193] sm:$0xf]
        %vm200 = vcmask 261120
        %v202 = vsel %vm200, %v198, 0
        %v205 = vsel %vm200, %v199, 0
        %207 = vmatprep.subr.bf16.mxu0 0
        %208 = vmatpush1.bf16.xpose.msra.mxu0 0
        %209 = vmatprep.subr.bf16.mxu0 0
        %210 = vmatpush1.bf16.xpose.msra.mxu0 0
        %211 = vmatprep.subr.bf16.mxu0 0
        %212 = vmatpush1.bf16.xpose.msra.mxu0 0
        %213 = vmatprep.subr.bf16.mxu0 0
        %214 = vmatpush1.bf16.xpose.msra.mxu0 0
        %215 = vmatprep.subr.bf16.mxu0 0
        %216 = vmatpush1.bf16.xpose.msra.mxu0 0
        %217 = vmatprep.subr.bf16.mxu0 0
        %218 = vmatpush1.bf16.xpose.msra.mxu0 0
        %219 = vmatprep.subr.bf16.mxu0 0
        %220 = vmatpush1.bf16.xpose.msra.mxu0 0
        %221 = vmatprep.subr.bf16.mxu0 0
        %222 = vmatpush1.bf16.xpose.msra.mxu0 %v205
        %223 = vmatprep.subr.bf16.mxu0 0
        %224 = vmatpush2.bf16.xpose.msra.mxu0 0
        %225 = vmatprep.subr.bf16.mxu0 0
        %226 = vmatpush2.bf16.xpose.msra.mxu0 0
        %227 = vmatprep.subr.bf16.mxu0 0
        %228 = vmatpush2.bf16.xpose.msra.mxu0 0
        %229 = vmatprep.subr.bf16.mxu0 0
        %230 = vmatpush2.bf16.xpose.msra.mxu0 0
        %231 = vmatprep.subr.bf16.mxu0 0
        %232 = vmatpush2.bf16.xpose.msra.mxu0 0
        %233 = vmatprep.subr.bf16.mxu0 0
        %234 = vmatpush2.bf16.xpose.msra.mxu0 0
        %235 = vmatprep.subr.bf16.mxu0 0
        %236 = vmatpush2.bf16.xpose.msra.mxu0 0
        %237 = vmatprep.subr.bf16.mxu0 0
        %238 = vmatpush2.bf16.xpose.msra.mxu0 0
        %239 = vmatprep.mubr.bf16.mxu0 0
        %240 = vmatmul.mubr.bf16.gmra.mxu0 %v202
        %v241 = vpop.f32.mrf.mxu0
        %v242 = vadd.f32 0.0, %v241
        %v243 = vpop.f32.mrf.mxu0
        %v244 = vpop.f32.mrf.mxu0
        %v245 = vpop.f32.mrf.mxu0
        %246 = vdwg.mxu0
        %v247 = vld [vmem:[%s196] sm:$0x1]
        %vm248 = vcmp.gt.f32.partialorder %v247, 0.0
        %v249 = vsel %vm248, 1, 0
        %v250 = vlaneseq
        %v251 = vshrl.u32 %v250, 7
        %v252 = vsub.s32 0, %v251
        %v253 = vrot.slane %v249, %v252
        %vm254 = vcmp.eq.s32.totalorder %v253, 1
        %v255 = vsel %vm254, %v242, -inf
        %vm256 = vcmask 64512
        %257 = vst.msk [vmem:[%s185] sm:$0xff] %vm256, %v255
        %s258 = sand.u32 %s103, 1
        %s259 = scalar_lea.sflag [#allocation3], %s258
        %s260 = sand.u32 %s103, 1
        %s261 = smul.addr %s260, 8
        %s262 = scalar_lea.vmem [#allocation2], %s261
        // Predicated region
        $region33: #{forward.20} parent=31 // pred_check
          %p263 = pneg %p113
        $region34: #{forward.20} parent=31 // pred_check_branch
          %265 = sbr.rel (%p263) target = $region36
        $region35: #{forward.20} parent=31 // pred_region
          %s267 = ssub.s32 128, 128
          %268 = vsyncadd %s259, %s267
          %s269 = smul.addr %s17, 128
          %s270 = scalar_lea.hbm %s3, %s269
          %s272 = sshll.u32 %s262, 4
          %s273 = int_to_ptr.vmem [resolvable:$true] %s272
          %275 = dma.vmem_to_hbm [thread:$0]  %s273, 128, %s270, %s259
        $region36: #{forward.20} parent=31 // pred_fallthru
          _
      $region32: #{forward.20} parent=5 // pred_fallthru
        _
      %p276 = scmp.le.s32.totalorder 2, %s12
      // Predicated region
      $region37: #{forward.20} parent=5 // pred_check
        %p277 = pneg %p276
      $region38: #{forward.20} parent=5 // pred_check_branch
        %279 = sbr.rel (%p277) target = $region40
      $region39: #{forward.20} parent=5 // pred_region
        %s280 = ssub.s32 %s12, 2
        // Predicated region
        $region41: #{forward.20} parent=39 // pred_check
          %p281 = pneg %p119
        $region42: #{forward.20} parent=39 // pred_check_branch
          %283 = sbr.rel (%p281) target = $region44
        $region43: #{forward.20} parent=39 // pred_region
          %s284 = sand.u32 %s104, 1
          %s285 = scalar_lea.sflag [#allocation3], %s284
          %s286 = sand.u32 %s104, 1
          %s287 = smul.addr %s286, 8
          %s288 = scalar_lea.vmem [#allocation2], %s287
          %289 = dma.done %s285, 128
        $region44: #{forward.20} parent=39 // pred_fallthru
          _
      $region40: #{forward.20} parent=5 // pred_fallthru
        _
    $region6: #{forward.20} parent=1 // loop_footer
      %s16 = sadd.s32 1, %s12
    $region7: #{forward.20} parent=1 // loop_footer_branch
      %11 = sbr.rel target = $region3
    $region8: #{forward.20} parent=1 // loop_exit
      _
    %290 = vsyncpa [#allocation3], 1
    %s291 = scalar_lea.sflag [#allocation3], 1
    %292 = vsyncpa %s291, 1

// kernel: forward.18
$region0: #{forward.18}
  #allocation0 [shape = 'u32[]', space=smem, size = 0x4, offset = 0x4, fixed_abs, tag = 'smem constant byte address 0x4 - core index']
  #allocation1 [shape = 'u32[144,128]{1,0:T(1,128)}', space=vmem, size = 0x12000, scoped, tag = 'internal scratch']
  %s0 = inlined_call_operand.vmem [shape: bf16[16,32], index: 0, kind: input, shape index: {}]
  %s1 = inlined_call_operand.vmem [shape: bf16[32,32], index: 1, kind: input, shape index: {}]
  %s2 = inlined_call_operand.vmem [shape: f32[1,32], index: 2, kind: input, shape index: {}]
  %s3 = inlined_call_operand.vmem [shape: bf16[16,32], index: 3, kind: output, shape index: {}]
  %s4 = sld [smem:[#allocation0]]
  $region22: #{forward.18} parent=0
    _
  %s6 = ssub.s32 1, %s4
  %s7 = scalar_select 0, %s6, %s4
  // Predicated region
  $region2: #{forward.18} parent=0 // pred_check
    _
  $region3: #{forward.18} parent=0 // pred_check_branch
    %9 = sbr.rel (0) target = $region5
  $region4: #{forward.18} parent=0 // pred_region
    _
  $region5: #{forward.18} parent=0 // pred_fallthru
    _
  // Predicated region
  $region6: #{forward.18} parent=0 // pred_check
    _
  $region7: #{forward.18} parent=0 // pred_check_branch
    %11 = sbr.rel (0) target = $region9
  $region8: #{forward.18} parent=0 // pred_region
    _
  $region9: #{forward.18} parent=0 // pred_fallthru
    _
  // Predicated region
  $region10: #{forward.18} parent=0 // pred_check
    _
  $region11: #{forward.18} parent=0 // pred_check_branch
    %13 = sbr.rel (0) target = $region13
  $region12: #{forward.18} parent=0 // pred_region
    _
  $region13: #{forward.18} parent=0 // pred_fallthru
    _
  %v15 = vld [vmem:[%s0] sm:$0xf]
  %v16 = vld [vmem:[%s0 + $0x4] sm:$0xf]
  %v17 = vld [vmem:[%s1] sm:$0xf]
  %v18 = vld [vmem:[%s1 + $0x4] sm:$0xf]
  %v19 = vld [vmem:[%s1 + $0x8] sm:$0xf]
  %v20 = vld [vmem:[%s1 + $0xc] sm:$0xf]
  %v21 = vld [vmem:[%s2] sm:$0x1]
  %v23 = vlaneseq
  %v24 = vshrl.u32 %v23, 7
  %v25 = vsub.s32 0, %v24
  %v26 = vrot.slane %v21, %v25
  %v30 = vunpack.c.l.b16 %v15
  %v31 = vunpack.c.l.b16 %v16
  %v32 = vpack.c.b16 %v31, %v30
  %v37 = vunpack.c.l.b16 %v17
  %v38 = vunpack.c.l.b16 %v18
  %v39 = vunpack.c.l.b16 %v19
  %v40 = vunpack.c.l.b16 %v20
  %v41 = vpack.c.b16 %v38, %v37
  %v42 = vpack.c.b16 %v40, %v39
  %vm45 = vcmask 261120
  %v47 = vsel %vm45, %v32, 0
  %49 = vmatprep.subr.bf16.mxu0 0
  %50 = vmatpush1.bf16.msra.mxu0 0
  %51 = vmatprep.subr.bf16.mxu0 0
  %52 = vmatpush1.bf16.msra.mxu0 0
  %53 = vmatprep.subr.bf16.mxu0 0
  %54 = vmatpush1.bf16.msra.mxu0 0
  %55 = vmatprep.subr.bf16.mxu0 0
  %56 = vmatpush1.bf16.msra.mxu0 0
  %57 = vmatprep.subr.bf16.mxu0 0
  %58 = vmatpush1.bf16.msra.mxu0 0
  %59 = vmatprep.subr.bf16.mxu0 0
  %60 = vmatpush1.bf16.msra.mxu0 0
  %61 = vmatprep.subr.bf16.mxu0 0
  %62 = vmatpush1.bf16.msra.mxu0 %v42
  %63 = vmatprep.subr.bf16.mxu0 0
  %64 = vmatpush1.bf16.msra.mxu0 %v41
  %65 = vmatprep.subr.bf16.mxu0 0
  %66 = vmatpush2.bf16.msra.mxu0 0
  %67 = vmatprep.subr.bf16.mxu0 0
  %68 = vmatpush2.bf16.msra.mxu0 0
  %69 = vmatprep.subr.bf16.mxu0 0
  %70 = vmatpush2.bf16.msra.mxu0 0
  %71 = vmatprep.subr.bf16.mxu0 0
  %72 = vmatpush2.bf16.msra.mxu0 0
  %73 = vmatprep.subr.bf16.mxu0 0
  %74 = vmatpush2.bf16.msra.mxu0 0
  %75 = vmatprep.subr.bf16.mxu0 0
  %76 = vmatpush2.bf16.msra.mxu0 0
  %77 = vmatprep.subr.bf16.mxu0 0
  %78 = vmatpush2.bf16.msra.mxu0 0
  %79 = vmatprep.subr.bf16.mxu0 0
  %80 = vmatpush2.bf16.msra.mxu0 0
  %81 = vmatprep.mubr.bf16.mxu0 0
  %82 = vmatmul.mubr.bf16.gmra.mxu0 %v47
  %v83 = vpop.f32.mrf.mxu0
  %v84 = vadd.f32 %v26, %v83
  %v85 = vpop.f32.mrf.mxu0
  %v86 = vpop.f32.mrf.mxu0
  %v87 = vadd.f32 %v26, %v86
  %v88 = vpop.f32.mrf.mxu0
  %89 = vdwg.mxu0
  %v90 = vpack.c.bf16 %v87, %v84
  %v92 = vunpack.c.l.b16 %v90
  %v93 = vunpack.c.h.b16 %v90
  %v94 = vpack.c.b16 %v92, %v92
  %v95 = vpack.c.b16 %v93, %v93
  %vm98 = vcmask 257024
  %99 = vst.msk [vmem:[%s3] sm:$0xf] %vm98, %v94
  %100 = vst.msk [vmem:[%s3 + $0x4] sm:$0xf] %vm98, %v95
  // Predicated region
  $region14: #{forward.18} parent=0 // pred_check
    _
  $region15: #{forward.18} parent=0 // pred_check_branch
    %102 = sbr.rel (0) target = $region17
  $region16: #{forward.18} parent=0 // pred_region
    _
  $region17: #{forward.18} parent=0 // pred_fallthru
    _
  // Predicated region
  $region18: #{forward.18} parent=0 // pred_check
    _
  $region19: #{forward.18} parent=0 // pred_check_branch
    %104 = sbr.rel (0) target = $region21
  $region20: #{forward.18} parent=0 // pred_region
    _
  $region21: #{forward.18} parent=0 // pred_fallthru
    _

</llo_original>
